<compile_context>
chip_gen: v5e
topology: v5e:2x2
jax: 0.10.0
libtpu: 0.0.40
codegen_flags: <defaults>
</compile_context>

<pallas_src>
import functools

import jax
import jax.numpy as jnp
from jax.experimental import pallas as pl
from jax.experimental.pallas import tpu as pltpu


# ----------------------------------------------------------------------------- kernel


def _ccbam_fused_kernel(C, H, W, x_ref, w1_ref, b1_ref, w2_ref, b2_ref, wk_ref,
                        out_ref, pad_ref, sflat_ref):
    """x_ref/out_ref: (1, C, HW) lane-dense block (one batch element, one part).
       w1/b1/w2/b2: per-part ChannelGate MLP weights (C,Cr),(1,Cr),(Cr,C),(1,C).
       wk_ref: SMEM (2, 99) = per-part BN-folded 7x7x2 conv weights + bias.
       pad_ref: VMEM (2, H+6, W+6) zero-padded pooled map scratch.
       sflat_ref: VMEM (1, HW) flattened spatial-scale scratch."""
    part = pl.program_id(1)
    HW = H * W
    x = x_ref[...].astype(jnp.float32)                               # (1, C, HW)

    # ---- ChannelGate: avg/max pool over HW + fused 2-layer MLP + sigmoid ----
    avg_pool = jnp.sum(x, axis=-1) * (1.0 / HW)                      # (1, C)
    max_pool = jnp.max(x, axis=-1)                                   # (1, C)
    pooled = jnp.concatenate([avg_pool, max_pool], axis=0)           # (2, C)
    h = jnp.dot(pooled, w1_ref[...], preferred_element_type=jnp.float32) + b1_ref[...]
    h = jnp.maximum(h, 0.0)
    att = jnp.dot(h, w2_ref[...], preferred_element_type=jnp.float32) + b2_ref[...]
    cscale = jax.nn.sigmoid(jnp.sum(att, axis=0, keepdims=True))     # (1, C)

    # ---- ChannelPool of the f32 gated activations (never written to HBM) ----
    y = x * cscale[:, :, None]                                       # (1, C, HW)
    cmax = jnp.max(y, axis=1)                                        # (1, HW)  max over C
    cmean = jnp.sum(y, axis=1) * (1.0 / C)                           # (1, HW)  mean over C

    # ---- fill the zero-padded pooled map for the 7x7 'same' conv ----
    pad_ref[...] = jnp.zeros_like(pad_ref)
    for r in range(H):
        pad_ref[0, 3 + r:4 + r, 3:3 + W] = cmax[:, r * W:(r + 1) * W]
        pad_ref[1, 3 + r:4 + r, 3:3 + W] = cmean[:, r * W:(r + 1) * W]

    # ---- 7x7 conv (eval-mode BN folded into weights) + sigmoid, dx-major ----
    # One lane-shifted slab per dx (7 shifts total); dy/channel taps are sublane slices.
    acc = jnp.zeros((H, W), jnp.float32)
    for dx in range(7):
        slab = pad_ref[:, :, dx:dx + W]                              # (2, H+6, W)
        for c in range(2):
            for dy in range(7):
                acc = acc + slab[c, dy:dy + H, :] * wk_ref[part, c * 49 + dy * 7 + dx]
    sscale = jax.nn.sigmoid(acc + wk_ref[part, 98])                  # (H, W)

    # ---- re-emit the spatial scale in the flat lane-dense layout ----
    for r in range(H):
        sflat_ref[0:1, r * W:(r + 1) * W] = sscale[r:r + 1, :]

    # ---- out = x * channel_scale * spatial_scale : one dense store ----
    out_ref[...] = (x_ref[...].astype(jnp.float32) * cscale[:, :, None]
                    * sflat_ref[...][None, :, :]).astype(out_ref.dtype)


# ----------------------------------------------------------------------------- wrapper


def ccbam_forward(x, params):
    """x: (B, C, H, W, 2) with real part at [..., 0] and imaginary part at [..., 1]."""
    B, C, H, W, _ = x.shape
    HW = H * W

    # One up-front layout change (part axis to front) instead of two strided slices.
    x_parts = jnp.moveaxis(x, -1, 0).reshape(2, B, C, HW)            # (2, B, C, HW)

    # Stack per-part ChannelGate weights so the grid's part axis selects them.
    w1 = jnp.stack([params["cg_real"][0], params["cg_imag"][0]])     # (2, C, Cr)
    b1 = jnp.stack([params["cg_real"][1], params["cg_imag"][1]])     # (2, 1, Cr)
    w2 = jnp.stack([params["cg_real"][2], params["cg_imag"][2]])     # (2, Cr, C)
    b2 = jnp.stack([params["cg_real"][3], params["cg_imag"][3]])     # (2, 1, C)
    Cr = w1.shape[-1]

    # Fold eval-mode BatchNorm (single output channel) into the conv weights + bias.
    # TODO(synk): training-mode BN (batch statistics) is not computed in-kernel.
    def fold_bn(sg, eps=1e-5):
        conv_w, gamma, beta, mean, var = sg
        s = gamma[0] / jnp.sqrt(var[0] + eps)
        return jnp.concatenate([(conv_w[0].astype(jnp.float32) * s).reshape(-1),
                                jnp.reshape(beta[0] - mean[0] * s, (1,))])
    wk = jnp.stack([fold_bn(params["sg_real"]),
                    fold_bn(params["sg_imag"])]).astype(jnp.float32)  # (2, 99)

    itemsize = x.dtype.itemsize
    block_bytes = C * HW * itemsize
    try:
        vmem_cap = int(pltpu.get_tpu_info().vmem_capacity_bytes)      # 64 MiB/TC on v7x
    except Exception:
        vmem_cap = 64 << 20
    # in + out blocks double-buffered, plus weights/scratch headroom.
    vmem_need = 4 * block_bytes + (4 << 20)
    vmem_limit = int(min(max(vmem_need, 16 << 20), (vmem_cap * 3) // 4))
    # TODO(synk): if a single (C, HW) block exceeds this budget (huge feature maps),
    # fall back to a two-pass ChannelGate (pool pass + apply pass) with a tiled HW axis.

    cost = pl.CostEstimate(
        flops=int(2 * B * (7 * C * HW + 8 * C * Cr + 2 * 98 * HW)),
        transcendentals=int(2 * B * (C + HW)),
        bytes_accessed=int(2 * B * C * HW * 2 * itemsize),
    )

    out_parts = pl.pallas_call(
        functools.partial(_ccbam_fused_kernel, C, H, W),
        grid=(B, 2),
        in_specs=[
            pl.BlockSpec((1, None, C, HW), lambda b, p: (p, b, 0, 0)),
            pl.BlockSpec((None, C, Cr), lambda b, p: (p, 0, 0)),
            pl.BlockSpec((None, 1, Cr), lambda b, p: (p, 0, 0)),
            pl.BlockSpec((None, Cr, C), lambda b, p: (p, 0, 0)),
            pl.BlockSpec((None, 1, C), lambda b, p: (p, 0, 0)),
            pl.BlockSpec(memory_space=pltpu.MemorySpace.SMEM),
        ],
        out_specs=pl.BlockSpec((1, None, C, HW), lambda b, p: (p, b, 0, 0)),
        out_shape=jax.ShapeDtypeStruct((2, B, C, HW), x.dtype),
        scratch_shapes=[pltpu.VMEM((2, H + 6, W + 6), jnp.float32),
                        pltpu.VMEM((1, HW), jnp.float32)],
        compiler_params=pltpu.CompilerParams(
            dimension_semantics=("parallel", "parallel"),
            vmem_limit_bytes=vmem_limit),
        cost_estimate=cost,
    )(x_parts, w1, b1, w2, b2, wk)

    return jnp.moveaxis(out_parts.reshape(2, B, C, H, W), 0, -1)     # (B, C, H, W, 2)


# ----------------------------------------------------------------------------- params / reference


def make_params(key, gate_channels, reduction_ratio=16):
    c = gate_channels
    cr = max(1, c // reduction_ratio)
    keys = jax.random.split(key, 16)

    def channel_gate_params(k1, k2, k3, k4):
        bound1 = 1.0 / (c ** 0.5)
        bound2 = 1.0 / (cr ** 0.5)
        w1 = jax.random.uniform(k1, (c, cr), jnp.float32, -bound1, bound1)
        b1 = jax.random.uniform(k2, (1, cr), jnp.float32, -bound1, bound1)
        w2 = jax.random.uniform(k3, (cr, c), jnp.float32, -bound2, bound2)
        b2 = jax.random.uniform(k4, (1, c), jnp.float32, -bound2, bound2)
        return (w1, b1, w2, b2)

    def spatial_gate_params(k1, k2, k3, k4):
        bound = 1.0 / ((2 * 7 * 7) ** 0.5)
        conv_w = jax.random.uniform(k1, (1, 2, 7, 7), jnp.float32, -bound, bound)
        gamma = 1.0 + 0.1 * jax.random.normal(k2, (1,), jnp.float32)
        beta = 0.1 * jax.random.normal(k3, (1,), jnp.float32)
        mean = 0.1 * jax.random.normal(k4, (1,), jnp.float32)
        var = jnp.ones((1,), jnp.float32)
        return (conv_w, gamma, beta, mean, var)

    return {
        "cg_real": channel_gate_params(*keys[0:4]),
        "cg_imag": channel_gate_params(*keys[4:8]),
        "sg_real": spatial_gate_params(*keys[8:12]),
        "sg_imag": spatial_gate_params(*keys[12:16]),
    }


def reference_ccbam(x, params):
    """Pure-JAX reference mirroring the PyTorch forward (BN in eval mode)."""
    hi = jax.lax.Precision.HIGHEST

    def channel_gate_ref(xr, w1, b1, w2, b2):
        B, C, H, W = xr.shape
        xf = xr.reshape(B, C, H * W)
        avg = jnp.mean(xf, axis=-1)
        mx = jnp.max(xf, axis=-1)

        def mlp(p):
            h = jnp.maximum(jnp.dot(p, w1, precision=hi) + b1, 0.0)
            return jnp.dot(h, w2, precision=hi) + b2

        s = jax.nn.sigmoid(mlp(avg) + mlp(mx))[:, :, None, None]
        return xr * s

    def spatial_gate_ref(xr, conv_w, gamma, beta, mean, var, eps=1e-5):
        cmax = jnp.max(xr, axis=1, keepdims=True)
        cmean = jnp.mean(xr, axis=1, keepdims=True)
        comp = jnp.concatenate([cmax, cmean], axis=1)        # (B, 2, H, W)
        conv = jax.lax.conv_general_dilated(
            comp, conv_w, window_strides=(1, 1), padding=((3, 3), (3, 3)),
            dimension_numbers=("NCHW", "OIHW", "NCHW"), precision=hi)
        bn = (conv - mean[0]) / jnp.sqrt(var[0] + eps) * gamma[0] + beta[0]
        return xr * jax.nn.sigmoid(bn)

    real, imag = x[..., 0], x[..., 1]
    r = spatial_gate_ref(channel_gate_ref(real, *params["cg_real"]), *params["sg_real"])
    i = spatial_gate_ref(channel_gate_ref(imag, *params["cg_imag"]), *params["sg_imag"])
    return jnp.stack([r, i], axis=-1)


# ----------------------------------------------------------------------------- demo


if __name__ == "__main__":
    # gate_channels must be divisible by reduction_ratio (=16) -> C = 32.
    B, C, H, W = 2, 32, 16, 16

    key = jax.random.PRNGKey(0)
    kx, kp = jax.random.split(key)
    x = jax.random.normal(kx, (B, C, H, W, 2), jnp.float32)
    params = make_params(kp, C, reduction_ratio=16)

    out = jax.jit(ccbam_forward)(x, params)
    out = jax.block_until_ready(out)

    ref = reference_ccbam(x, params)
    assert out.shape == (B, C, H, W, 2)
    max_err = float(jnp.max(jnp.abs(out - ref)))
    assert jnp.allclose(out, ref, atol=1e-4, rtol=1e-4), f"mismatch vs reference: {max_err}"

    print("KERNEL_OK")
</pallas_src>

<mosaic_0001>
module attributes {stable_mosaic.version = 11 : i64} {
  func.func @_ccbam_fused_kernel(%arg0: i32, %arg1: i32, %arg2: memref<1x1x32x256xf32, #tpu.memory_space<vmem>>, %arg3: memref<1x32x2xf32, #tpu.memory_space<vmem>>, %arg4: memref<1x1x2xf32, #tpu.memory_space<vmem>>, %arg5: memref<1x2x32xf32, #tpu.memory_space<vmem>>, %arg6: memref<1x1x32xf32, #tpu.memory_space<vmem>>, %arg7: memref<2x99xf32, #tpu.memory_space<smem>>, %arg8: memref<1x1x32x256xf32, #tpu.memory_space<vmem>>, %arg9: memref<2x22x22xf32, #tpu.memory_space<vmem>>, %arg10: memref<1x256xf32, #tpu.memory_space<vmem>>) attributes {dimension_semantics = [#tpu.dimension_semantics<parallel>, #tpu.dimension_semantics<parallel>], iteration_bounds = array<i64: 2, 2>, scalar_prefetch = 0 : i64, scratch_operands = 2 : i64, tpu.core_type = #tpu.core_type<tc>, window_params = [{transform_indices = @transform_0, window_bounds = array<i64: 1, 1, 32, 256>}, {transform_indices = @transform_1, window_bounds = array<i64: 1, 32, 2>}, {transform_indices = @transform_2, window_bounds = array<i64: 1, 1, 2>}, {transform_indices = @transform_3, window_bounds = array<i64: 1, 2, 32>}, {transform_indices = @transform_4, window_bounds = array<i64: 1, 1, 32>}, {transform_indices = @transform_5, window_bounds = array<i64: 2, 99>}, {transform_indices = @transform_6, window_bounds = array<i64: 1, 1, 32, 256>}]} {
    %c0 = arith.constant 0 : index
    %c0_0 = arith.constant 0 : index
    %c0_1 = arith.constant 0 : index
    %c0_2 = arith.constant 0 : index
    %0 = vector.load %arg2[%c0, %c0_0, %c0_1, %c0_2] : memref<1x1x32x256xf32, #tpu.memory_space<vmem>>, vector<1x1x32x256xf32>
    %1 = vector.shape_cast %0 : vector<1x1x32x256xf32> to vector<1x32x256xf32>
    %cst = arith.constant dense<0.000000e+00> : vector<1x32xf32>
    %2 = vector.multi_reduction <add>, %1, %cst [2] : vector<1x32x256xf32> to vector<1x32xf32>
    %cst_3 = arith.constant 3.906250e-03 : f32
    %3 = vector.broadcast %cst_3 : f32 to vector<1x32xf32>
    %4 = arith.mulf %2, %3 : vector<1x32xf32>
    %cst_4 = arith.constant dense<0xFF800000> : vector<1x32xf32>
    %5 = vector.multi_reduction <maximumf>, %1, %cst_4 [2] : vector<1x32x256xf32> to vector<1x32xf32>
    %6 = tpu.concatenate %4, %5 in 0 : vector<1x32xf32>, vector<1x32xf32> -> vector<2x32xf32>
    %c0_5 = arith.constant 0 : index
    %c0_6 = arith.constant 0 : index
    %c0_7 = arith.constant 0 : index
    %7 = vector.load %arg3[%c0_5, %c0_6, %c0_7] : memref<1x32x2xf32, #tpu.memory_space<vmem>>, vector<1x32x2xf32>
    %8 = vector.shape_cast %7 : vector<1x32x2xf32> to vector<32x2xf32>
    %cst_8 = arith.constant dense<0.000000e+00> : vector<2x2xf32>
    %9 = tpu.matmul %6, %8, %cst_8 {dimension_numbers = #tpu.dot_dimension_numbers<[1], [0], [0], [1], [0, 0, 1, 1], [], []>} : vector<2x32xf32>, vector<32x2xf32>, vector<2x2xf32> -> vector<2x2xf32>
    %c0_9 = arith.constant 0 : index
    %c0_10 = arith.constant 0 : index
    %c0_11 = arith.constant 0 : index
    %10 = vector.load %arg4[%c0_9, %c0_10, %c0_11] : memref<1x1x2xf32, #tpu.memory_space<vmem>>, vector<1x1x2xf32>
    %11 = vector.shape_cast %10 : vector<1x1x2xf32> to vector<1x2xf32>
    %12 = vector.broadcast %11 : vector<1x2xf32> to vector<2x2xf32>
    %13 = arith.addf %9, %12 : vector<2x2xf32>
    %cst_12 = arith.constant 0.000000e+00 : f32
    %14 = vector.broadcast %cst_12 : f32 to vector<2x2xf32>
    %15 = arith.maximumf %13, %14 : vector<2x2xf32>
    %c0_13 = arith.constant 0 : index
    %c0_14 = arith.constant 0 : index
    %c0_15 = arith.constant 0 : index
    %16 = vector.load %arg5[%c0_13, %c0_14, %c0_15] : memref<1x2x32xf32, #tpu.memory_space<vmem>>, vector<1x2x32xf32>
    %17 = vector.shape_cast %16 : vector<1x2x32xf32> to vector<2x32xf32>
    %cst_16 = arith.constant dense<0.000000e+00> : vector<2x32xf32>
    %18 = tpu.matmul %15, %17, %cst_16 {dimension_numbers = #tpu.dot_dimension_numbers<[1], [0], [0], [1], [0, 0, 1, 1], [], []>} : vector<2x2xf32>, vector<2x32xf32>, vector<2x32xf32> -> vector<2x32xf32>
    %c0_17 = arith.constant 0 : index
    %c0_18 = arith.constant 0 : index
    %c0_19 = arith.constant 0 : index
    %19 = vector.load %arg6[%c0_17, %c0_18, %c0_19] : memref<1x1x32xf32, #tpu.memory_space<vmem>>, vector<1x1x32xf32>
    %20 = vector.shape_cast %19 : vector<1x1x32xf32> to vector<1x32xf32>
    %21 = vector.broadcast %20 : vector<1x32xf32> to vector<2x32xf32>
    %22 = arith.addf %18, %21 : vector<2x32xf32>
    %cst_20 = arith.constant dense<0.000000e+00> : vector<32xf32>
    %23 = vector.multi_reduction <add>, %22, %cst_20 [0] : vector<2x32xf32> to vector<32xf32>
    %24 = vector.shape_cast %23 : vector<32xf32> to vector<1x32xf32>
    %25 = arith.negf %24 : vector<1x32xf32>
    %26 = math.exp %25 : vector<1x32xf32>
    %cst_21 = arith.constant 1.000000e+00 : f32
    %27 = vector.broadcast %cst_21 : f32 to vector<1x32xf32>
    %28 = arith.addf %27, %26 : vector<1x32xf32>
    %29 = arith.divf %27, %28 : vector<1x32xf32>
    %30 = vector.shape_cast %29 : vector<1x32xf32> to vector<1x32x1xf32>
    %31 = vector.broadcast %30 : vector<1x32x1xf32> to vector<1x32x256xf32>
    %32 = arith.mulf %1, %31 : vector<1x32x256xf32>
    %cst_22 = arith.constant dense<0xFF800000> : vector<1x256xf32>
    %33 = vector.multi_reduction <maximumf>, %32, %cst_22 [1] : vector<1x32x256xf32> to vector<1x256xf32>
    %cst_23 = arith.constant dense<0.000000e+00> : vector<1x256xf32>
    %34 = vector.multi_reduction <add>, %32, %cst_23 [1] : vector<1x32x256xf32> to vector<1x256xf32>
    %cst_24 = arith.constant 3.125000e-02 : f32
    %35 = vector.broadcast %cst_24 : f32 to vector<1x256xf32>
    %36 = arith.mulf %34, %35 : vector<1x256xf32>
    %cst_25 = arith.constant 0.000000e+00 : f32
    %37 = vector.broadcast %cst_25 : f32 to vector<2x22x22xf32>
    %c0_26 = arith.constant 0 : index
    %c0_27 = arith.constant 0 : index
    %c0_28 = arith.constant 0 : index
    %38 = vector.load %arg9[%c0_26, %c0_27, %c0_28] : memref<2x22x22xf32, #tpu.memory_space<vmem>>, vector<2x22x22xf32>
    tpu.vector_store %arg9[%c0_26, %c0_27, %c0_28], %37 {strides = array<i32>} : memref<2x22x22xf32, #tpu.memory_space<vmem>>, vector<2x22x22xf32>,
    %39 = vector.extract_strided_slice %33 {offsets = [0, 0], sizes = [1, 16], strides = [1, 1]} : vector<1x256xf32> to vector<1x16xf32>
    %c0_29 = arith.constant 0 : index
    %c3 = arith.constant 3 : index
    %c3_30 = arith.constant 3 : index
    %40 = vector.load %arg9[%c0_29, %c3, %c3_30] : memref<2x22x22xf32, #tpu.memory_space<vmem>>, vector<1x1x16xf32>
    %41 = vector.shape_cast %40 : vector<1x1x16xf32> to vector<1x16xf32>
    %42 = vector.shape_cast %39 : vector<1x16xf32> to vector<1x1x16xf32>
    tpu.vector_store %arg9[%c0_29, %c3, %c3_30], %42 {strides = array<i32>} : memref<2x22x22xf32, #tpu.memory_space<vmem>>, vector<1x1x16xf32>,
    %43 = vector.extract_strided_slice %36 {offsets = [0, 0], sizes = [1, 16], strides = [1, 1]} : vector<1x256xf32> to vector<1x16xf32>
    %c1 = arith.constant 1 : index
    %c3_31 = arith.constant 3 : index
    %c3_32 = arith.constant 3 : index
    %44 = vector.load %arg9[%c1, %c3_31, %c3_32] : memref<2x22x22xf32, #tpu.memory_space<vmem>>, vector<1x1x16xf32>
    %45 = vector.shape_cast %44 : vector<1x1x16xf32> to vector<1x16xf32>
    %46 = vector.shape_cast %43 : vector<1x16xf32> to vector<1x1x16xf32>
    tpu.vector_store %arg9[%c1, %c3_31, %c3_32], %46 {strides = array<i32>} : memref<2x22x22xf32, #tpu.memory_space<vmem>>, vector<1x1x16xf32>,
    %47 = vector.extract_strided_slice %33 {offsets = [0, 16], sizes = [1, 16], strides = [1, 1]} : vector<1x256xf32> to vector<1x16xf32>
    %c0_33 = arith.constant 0 : index
    %c4 = arith.constant 4 : index
    %c3_34 = arith.constant 3 : index
    %48 = vector.load %arg9[%c0_33, %c4, %c3_34] : memref<2x22x22xf32, #tpu.memory_space<vmem>>, vector<1x1x16xf32>
    %49 = vector.shape_cast %48 : vector<1x1x16xf32> to vector<1x16xf32>
    %50 = vector.shape_cast %47 : vector<1x16xf32> to vector<1x1x16xf32>
    tpu.vector_store %arg9[%c0_33, %c4, %c3_34], %50 {strides = array<i32>} : memref<2x22x22xf32, #tpu.memory_space<vmem>>, vector<1x1x16xf32>,
    %51 = vector.extract_strided_slice %36 {offsets = [0, 16], sizes = [1, 16], strides = [1, 1]} : vector<1x256xf32> to vector<1x16xf32>
    %c1_35 = arith.constant 1 : index
    %c4_36 = arith.constant 4 : index
    %c3_37 = arith.constant 3 : index
    %52 = vector.load %arg9[%c1_35, %c4_36, %c3_37] : memref<2x22x22xf32, #tpu.memory_space<vmem>>, vector<1x1x16xf32>
    %53 = vector.shape_cast %52 : vector<1x1x16xf32> to vector<1x16xf32>
    %54 = vector.shape_cast %51 : vector<1x16xf32> to vector<1x1x16xf32>
    tpu.vector_store %arg9[%c1_35, %c4_36, %c3_37], %54 {strides = array<i32>} : memref<2x22x22xf32, #tpu.memory_space<vmem>>, vector<1x1x16xf32>,
    %55 = vector.extract_strided_slice %33 {offsets = [0, 32], sizes = [1, 16], strides = [1, 1]} : vector<1x256xf32> to vector<1x16xf32>
    %c0_38 = arith.constant 0 : index
    %c5 = arith.constant 5 : index
    %c3_39 = arith.constant 3 : index
    %56 = vector.load %arg9[%c0_38, %c5, %c3_39] : memref<2x22x22xf32, #tpu.memory_space<vmem>>, vector<1x1x16xf32>
    %57 = vector.shape_cast %56 : vector<1x1x16xf32> to vector<1x16xf32>
    %58 = vector.shape_cast %55 : vector<1x16xf32> to vector<1x1x16xf32>
    tpu.vector_store %arg9[%c0_38, %c5, %c3_39], %58 {strides = array<i32>} : memref<2x22x22xf32, #tpu.memory_space<vmem>>, vector<1x1x16xf32>,
    %59 = vector.extract_strided_slice %36 {offsets = [0, 32], sizes = [1, 16], strides = [1, 1]} : vector<1x256xf32> to vector<1x16xf32>
    %c1_40 = arith.constant 1 : index
    %c5_41 = arith.constant 5 : index
    %c3_42 = arith.constant 3 : index
    %60 = vector.load %arg9[%c1_40, %c5_41, %c3_42] : memref<2x22x22xf32, #tpu.memory_space<vmem>>, vector<1x1x16xf32>
    %61 = vector.shape_cast %60 : vector<1x1x16xf32> to vector<1x16xf32>
    %62 = vector.shape_cast %59 : vector<1x16xf32> to vector<1x1x16xf32>
    tpu.vector_store %arg9[%c1_40, %c5_41, %c3_42], %62 {strides = array<i32>} : memref<2x22x22xf32, #tpu.memory_space<vmem>>, vector<1x1x16xf32>,
    %63 = vector.extract_strided_slice %33 {offsets = [0, 48], sizes = [1, 16], strides = [1, 1]} : vector<1x256xf32> to vector<1x16xf32>
    %c0_43 = arith.constant 0 : index
    %c6 = arith.constant 6 : index
    %c3_44 = arith.constant 3 : index
    %64 = vector.load %arg9[%c0_43, %c6, %c3_44] : memref<2x22x22xf32, #tpu.memory_space<vmem>>, vector<1x1x16xf32>
    %65 = vector.shape_cast %64 : vector<1x1x16xf32> to vector<1x16xf32>
    %66 = vector.shape_cast %63 : vector<1x16xf32> to vector<1x1x16xf32>
    tpu.vector_store %arg9[%c0_43, %c6, %c3_44], %66 {strides = array<i32>} : memref<2x22x22xf32, #tpu.memory_space<vmem>>, vector<1x1x16xf32>,
    %67 = vector.extract_strided_slice %36 {offsets = [0, 48], sizes = [1, 16], strides = [1, 1]} : vector<1x256xf32> to vector<1x16xf32>
    %c1_45 = arith.constant 1 : index
    %c6_46 = arith.constant 6 : index
    %c3_47 = arith.constant 3 : index
    %68 = vector.load %arg9[%c1_45, %c6_46, %c3_47] : memref<2x22x22xf32, #tpu.memory_space<vmem>>, vector<1x1x16xf32>
    %69 = vector.shape_cast %68 : vector<1x1x16xf32> to vector<1x16xf32>
    %70 = vector.shape_cast %67 : vector<1x16xf32> to vector<1x1x16xf32>
    tpu.vector_store %arg9[%c1_45, %c6_46, %c3_47], %70 {strides = array<i32>} : memref<2x22x22xf32, #tpu.memory_space<vmem>>, vector<1x1x16xf32>,
    %71 = vector.extract_strided_slice %33 {offsets = [0, 64], sizes = [1, 16], strides = [1, 1]} : vector<1x256xf32> to vector<1x16xf32>
    %c0_48 = arith.constant 0 : index
    %c7 = arith.constant 7 : index
    %c3_49 = arith.constant 3 : index
    %72 = vector.load %arg9[%c0_48, %c7, %c3_49] : memref<2x22x22xf32, #tpu.memory_space<vmem>>, vector<1x1x16xf32>
    %73 = vector.shape_cast %72 : vector<1x1x16xf32> to vector<1x16xf32>
    %74 = vector.shape_cast %71 : vector<1x16xf32> to vector<1x1x16xf32>
    tpu.vector_store %arg9[%c0_48, %c7, %c3_49], %74 {strides = array<i32>} : memref<2x22x22xf32, #tpu.memory_space<vmem>>, vector<1x1x16xf32>,
    %75 = vector.extract_strided_slice %36 {offsets = [0, 64], sizes = [1, 16], strides = [1, 1]} : vector<1x256xf32> to vector<1x16xf32>
    %c1_50 = arith.constant 1 : index
    %c7_51 = arith.constant 7 : index
    %c3_52 = arith.constant 3 : index
    %76 = vector.load %arg9[%c1_50, %c7_51, %c3_52] : memref<2x22x22xf32, #tpu.memory_space<vmem>>, vector<1x1x16xf32>
    %77 = vector.shape_cast %76 : vector<1x1x16xf32> to vector<1x16xf32>
    %78 = vector.shape_cast %75 : vector<1x16xf32> to vector<1x1x16xf32>
    tpu.vector_store %arg9[%c1_50, %c7_51, %c3_52], %78 {strides = array<i32>} : memref<2x22x22xf32, #tpu.memory_space<vmem>>, vector<1x1x16xf32>,
    %79 = vector.extract_strided_slice %33 {offsets = [0, 80], sizes = [1, 16], strides = [1, 1]} : vector<1x256xf32> to vector<1x16xf32>
    %c0_53 = arith.constant 0 : index
    %c8 = arith.constant 8 : index
    %c3_54 = arith.constant 3 : index
    %80 = vector.load %arg9[%c0_53, %c8, %c3_54] : memref<2x22x22xf32, #tpu.memory_space<vmem>>, vector<1x1x16xf32>
    %81 = vector.shape_cast %80 : vector<1x1x16xf32> to vector<1x16xf32>
    %82 = vector.shape_cast %79 : vector<1x16xf32> to vector<1x1x16xf32>
    tpu.vector_store %arg9[%c0_53, %c8, %c3_54], %82 {strides = array<i32>} : memref<2x22x22xf32, #tpu.memory_space<vmem>>, vector<1x1x16xf32>,
    %83 = vector.extract_strided_slice %36 {offsets = [0, 80], sizes = [1, 16], strides = [1, 1]} : vector<1x256xf32> to vector<1x16xf32>
    %c1_55 = arith.constant 1 : index
    %c8_56 = arith.constant 8 : index
    %c3_57 = arith.constant 3 : index
    %84 = vector.load %arg9[%c1_55, %c8_56, %c3_57] : memref<2x22x22xf32, #tpu.memory_space<vmem>>, vector<1x1x16xf32>
    %85 = vector.shape_cast %84 : vector<1x1x16xf32> to vector<1x16xf32>
    %86 = vector.shape_cast %83 : vector<1x16xf32> to vector<1x1x16xf32>
    tpu.vector_store %arg9[%c1_55, %c8_56, %c3_57], %86 {strides = array<i32>} : memref<2x22x22xf32, #tpu.memory_space<vmem>>, vector<1x1x16xf32>,
    %87 = vector.extract_strided_slice %33 {offsets = [0, 96], sizes = [1, 16], strides = [1, 1]} : vector<1x256xf32> to vector<1x16xf32>
    %c0_58 = arith.constant 0 : index
    %c9 = arith.constant 9 : index
    %c3_59 = arith.constant 3 : index
    %88 = vector.load %arg9[%c0_58, %c9, %c3_59] : memref<2x22x22xf32, #tpu.memory_space<vmem>>, vector<1x1x16xf32>
    %89 = vector.shape_cast %88 : vector<1x1x16xf32> to vector<1x16xf32>
    %90 = vector.shape_cast %87 : vector<1x16xf32> to vector<1x1x16xf32>
    tpu.vector_store %arg9[%c0_58, %c9, %c3_59], %90 {strides = array<i32>} : memref<2x22x22xf32, #tpu.memory_space<vmem>>, vector<1x1x16xf32>,
    %91 = vector.extract_strided_slice %36 {offsets = [0, 96], sizes = [1, 16], strides = [1, 1]} : vector<1x256xf32> to vector<1x16xf32>
    %c1_60 = arith.constant 1 : index
    %c9_61 = arith.constant 9 : index
    %c3_62 = arith.constant 3 : index
    %92 = vector.load %arg9[%c1_60, %c9_61, %c3_62] : memref<2x22x22xf32, #tpu.memory_space<vmem>>, vector<1x1x16xf32>
    %93 = vector.shape_cast %92 : vector<1x1x16xf32> to vector<1x16xf32>
    %94 = vector.shape_cast %91 : vector<1x16xf32> to vector<1x1x16xf32>
    tpu.vector_store %arg9[%c1_60, %c9_61, %c3_62], %94 {strides = array<i32>} : memref<2x22x22xf32, #tpu.memory_space<vmem>>, vector<1x1x16xf32>,
    %95 = vector.extract_strided_slice %33 {offsets = [0, 112], sizes = [1, 16], strides = [1, 1]} : vector<1x256xf32> to vector<1x16xf32>
    %c0_63 = arith.constant 0 : index
    %c10 = arith.constant 10 : index
    %c3_64 = arith.constant 3 : index
    %96 = vector.load %arg9[%c0_63, %c10, %c3_64] : memref<2x22x22xf32, #tpu.memory_space<vmem>>, vector<1x1x16xf32>
    %97 = vector.shape_cast %96 : vector<1x1x16xf32> to vector<1x16xf32>
    %98 = vector.shape_cast %95 : vector<1x16xf32> to vector<1x1x16xf32>
    tpu.vector_store %arg9[%c0_63, %c10, %c3_64], %98 {strides = array<i32>} : memref<2x22x22xf32, #tpu.memory_space<vmem>>, vector<1x1x16xf32>,
    %99 = vector.extract_strided_slice %36 {offsets = [0, 112], sizes = [1, 16], strides = [1, 1]} : vector<1x256xf32> to vector<1x16xf32>
    %c1_65 = arith.constant 1 : index
    %c10_66 = arith.constant 10 : index
    %c3_67 = arith.constant 3 : index
    %100 = vector.load %arg9[%c1_65, %c10_66, %c3_67] : memref<2x22x22xf32, #tpu.memory_space<vmem>>, vector<1x1x16xf32>
    %101 = vector.shape_cast %100 : vector<1x1x16xf32> to vector<1x16xf32>
    %102 = vector.shape_cast %99 : vector<1x16xf32> to vector<1x1x16xf32>
    tpu.vector_store %arg9[%c1_65, %c10_66, %c3_67], %102 {strides = array<i32>} : memref<2x22x22xf32, #tpu.memory_space<vmem>>, vector<1x1x16xf32>,
    %103 = vector.extract_strided_slice %33 {offsets = [0, 128], sizes = [1, 16], strides = [1, 1]} : vector<1x256xf32> to vector<1x16xf32>
    %c0_68 = arith.constant 0 : index
    %c11 = arith.constant 11 : index
    %c3_69 = arith.constant 3 : index
    %104 = vector.load %arg9[%c0_68, %c11, %c3_69] : memref<2x22x22xf32, #tpu.memory_space<vmem>>, vector<1x1x16xf32>
    %105 = vector.shape_cast %104 : vector<1x1x16xf32> to vector<1x16xf32>
    %106 = vector.shape_cast %103 : vector<1x16xf32> to vector<1x1x16xf32>
    tpu.vector_store %arg9[%c0_68, %c11, %c3_69], %106 {strides = array<i32>} : memref<2x22x22xf32, #tpu.memory_space<vmem>>, vector<1x1x16xf32>,
    %107 = vector.extract_strided_slice %36 {offsets = [0, 128], sizes = [1, 16], strides = [1, 1]} : vector<1x256xf32> to vector<1x16xf32>
    %c1_70 = arith.constant 1 : index
    %c11_71 = arith.constant 11 : index
    %c3_72 = arith.constant 3 : index
    %108 = vector.load %arg9[%c1_70, %c11_71, %c3_72] : memref<2x22x22xf32, #tpu.memory_space<vmem>>, vector<1x1x16xf32>
    %109 = vector.shape_cast %108 : vector<1x1x16xf32> to vector<1x16xf32>
    %110 = vector.shape_cast %107 : vector<1x16xf32> to vector<1x1x16xf32>
    tpu.vector_store %arg9[%c1_70, %c11_71, %c3_72], %110 {strides = array<i32>} : memref<2x22x22xf32, #tpu.memory_space<vmem>>, vector<1x1x16xf32>,
    %111 = vector.extract_strided_slice %33 {offsets = [0, 144], sizes = [1, 16], strides = [1, 1]} : vector<1x256xf32> to vector<1x16xf32>
    %c0_73 = arith.constant 0 : index
    %c12 = arith.constant 12 : index
    %c3_74 = arith.constant 3 : index
    %112 = vector.load %arg9[%c0_73, %c12, %c3_74] : memref<2x22x22xf32, #tpu.memory_space<vmem>>, vector<1x1x16xf32>
    %113 = vector.shape_cast %112 : vector<1x1x16xf32> to vector<1x16xf32>
    %114 = vector.shape_cast %111 : vector<1x16xf32> to vector<1x1x16xf32>
    tpu.vector_store %arg9[%c0_73, %c12, %c3_74], %114 {strides = array<i32>} : memref<2x22x22xf32, #tpu.memory_space<vmem>>, vector<1x1x16xf32>,
    %115 = vector.extract_strided_slice %36 {offsets = [0, 144], sizes = [1, 16], strides = [1, 1]} : vector<1x256xf32> to vector<1x16xf32>
    %c1_75 = arith.constant 1 : index
    %c12_76 = arith.constant 12 : index
    %c3_77 = arith.constant 3 : index
    %116 = vector.load %arg9[%c1_75, %c12_76, %c3_77] : memref<2x22x22xf32, #tpu.memory_space<vmem>>, vector<1x1x16xf32>
    %117 = vector.shape_cast %116 : vector<1x1x16xf32> to vector<1x16xf32>
    %118 = vector.shape_cast %115 : vector<1x16xf32> to vector<1x1x16xf32>
    tpu.vector_store %arg9[%c1_75, %c12_76, %c3_77], %118 {strides = array<i32>} : memref<2x22x22xf32, #tpu.memory_space<vmem>>, vector<1x1x16xf32>,
    %119 = vector.extract_strided_slice %33 {offsets = [0, 160], sizes = [1, 16], strides = [1, 1]} : vector<1x256xf32> to vector<1x16xf32>
    %c0_78 = arith.constant 0 : index
    %c13 = arith.constant 13 : index
    %c3_79 = arith.constant 3 : index
    %120 = vector.load %arg9[%c0_78, %c13, %c3_79] : memref<2x22x22xf32, #tpu.memory_space<vmem>>, vector<1x1x16xf32>
    %121 = vector.shape_cast %120 : vector<1x1x16xf32> to vector<1x16xf32>
    %122 = vector.shape_cast %119 : vector<1x16xf32> to vector<1x1x16xf32>
    tpu.vector_store %arg9[%c0_78, %c13, %c3_79], %122 {strides = array<i32>} : memref<2x22x22xf32, #tpu.memory_space<vmem>>, vector<1x1x16xf32>,
    %123 = vector.extract_strided_slice %36 {offsets = [0, 160], sizes = [1, 16], strides = [1, 1]} : vector<1x256xf32> to vector<1x16xf32>
    %c1_80 = arith.constant 1 : index
    %c13_81 = arith.constant 13 : index
    %c3_82 = arith.constant 3 : index
    %124 = vector.load %arg9[%c1_80, %c13_81, %c3_82] : memref<2x22x22xf32, #tpu.memory_space<vmem>>, vector<1x1x16xf32>
    %125 = vector.shape_cast %124 : vector<1x1x16xf32> to vector<1x16xf32>
    %126 = vector.shape_cast %123 : vector<1x16xf32> to vector<1x1x16xf32>
    tpu.vector_store %arg9[%c1_80, %c13_81, %c3_82], %126 {strides = array<i32>} : memref<2x22x22xf32, #tpu.memory_space<vmem>>, vector<1x1x16xf32>,
    %127 = vector.extract_strided_slice %33 {offsets = [0, 176], sizes = [1, 16], strides = [1, 1]} : vector<1x256xf32> to vector<1x16xf32>
    %c0_83 = arith.constant 0 : index
    %c14 = arith.constant 14 : index
    %c3_84 = arith.constant 3 : index
    %128 = vector.load %arg9[%c0_83, %c14, %c3_84] : memref<2x22x22xf32, #tpu.memory_space<vmem>>, vector<1x1x16xf32>
    %129 = vector.shape_cast %128 : vector<1x1x16xf32> to vector<1x16xf32>
    %130 = vector.shape_cast %127 : vector<1x16xf32> to vector<1x1x16xf32>
    tpu.vector_store %arg9[%c0_83, %c14, %c3_84], %130 {strides = array<i32>} : memref<2x22x22xf32, #tpu.memory_space<vmem>>, vector<1x1x16xf32>,
    %131 = vector.extract_strided_slice %36 {offsets = [0, 176], sizes = [1, 16], strides = [1, 1]} : vector<1x256xf32> to vector<1x16xf32>
    %c1_85 = arith.constant 1 : index
    %c14_86 = arith.constant 14 : index
    %c3_87 = arith.constant 3 : index
    %132 = vector.load %arg9[%c1_85, %c14_86, %c3_87] : memref<2x22x22xf32, #tpu.memory_space<vmem>>, vector<1x1x16xf32>
    %133 = vector.shape_cast %132 : vector<1x1x16xf32> to vector<1x16xf32>
    %134 = vector.shape_cast %131 : vector<1x16xf32> to vector<1x1x16xf32>
    tpu.vector_store %arg9[%c1_85, %c14_86, %c3_87], %134 {strides = array<i32>} : memref<2x22x22xf32, #tpu.memory_space<vmem>>, vector<1x1x16xf32>,
    %135 = vector.extract_strided_slice %33 {offsets = [0, 192], sizes = [1, 16], strides = [1, 1]} : vector<1x256xf32> to vector<1x16xf32>
    %c0_88 = arith.constant 0 : index
    %c15 = arith.constant 15 : index
    %c3_89 = arith.constant 3 : index
    %136 = vector.load %arg9[%c0_88, %c15, %c3_89] : memref<2x22x22xf32, #tpu.memory_space<vmem>>, vector<1x1x16xf32>
    %137 = vector.shape_cast %136 : vector<1x1x16xf32> to vector<1x16xf32>
    %138 = vector.shape_cast %135 : vector<1x16xf32> to vector<1x1x16xf32>
    tpu.vector_store %arg9[%c0_88, %c15, %c3_89], %138 {strides = array<i32>} : memref<2x22x22xf32, #tpu.memory_space<vmem>>, vector<1x1x16xf32>,
    %139 = vector.extract_strided_slice %36 {offsets = [0, 192], sizes = [1, 16], strides = [1, 1]} : vector<1x256xf32> to vector<1x16xf32>
    %c1_90 = arith.constant 1 : index
    %c15_91 = arith.constant 15 : index
    %c3_92 = arith.constant 3 : index
    %140 = vector.load %arg9[%c1_90, %c15_91, %c3_92] : memref<2x22x22xf32, #tpu.memory_space<vmem>>, vector<1x1x16xf32>
    %141 = vector.shape_cast %140 : vector<1x1x16xf32> to vector<1x16xf32>
    %142 = vector.shape_cast %139 : vector<1x16xf32> to vector<1x1x16xf32>
    tpu.vector_store %arg9[%c1_90, %c15_91, %c3_92], %142 {strides = array<i32>} : memref<2x22x22xf32, #tpu.memory_space<vmem>>, vector<1x1x16xf32>,
    %143 = vector.extract_strided_slice %33 {offsets = [0, 208], sizes = [1, 16], strides = [1, 1]} : vector<1x256xf32> to vector<1x16xf32>
    %c0_93 = arith.constant 0 : index
    %c16 = arith.constant 16 : index
    %c3_94 = arith.constant 3 : index
    %144 = vector.load %arg9[%c0_93, %c16, %c3_94] : memref<2x22x22xf32, #tpu.memory_space<vmem>>, vector<1x1x16xf32>
    %145 = vector.shape_cast %144 : vector<1x1x16xf32> to vector<1x16xf32>
    %146 = vector.shape_cast %143 : vector<1x16xf32> to vector<1x1x16xf32>
    tpu.vector_store %arg9[%c0_93, %c16, %c3_94], %146 {strides = array<i32>} : memref<2x22x22xf32, #tpu.memory_space<vmem>>, vector<1x1x16xf32>,
    %147 = vector.extract_strided_slice %36 {offsets = [0, 208], sizes = [1, 16], strides = [1, 1]} : vector<1x256xf32> to vector<1x16xf32>
    %c1_95 = arith.constant 1 : index
    %c16_96 = arith.constant 16 : index
    %c3_97 = arith.constant 3 : index
    %148 = vector.load %arg9[%c1_95, %c16_96, %c3_97] : memref<2x22x22xf32, #tpu.memory_space<vmem>>, vector<1x1x16xf32>
    %149 = vector.shape_cast %148 : vector<1x1x16xf32> to vector<1x16xf32>
    %150 = vector.shape_cast %147 : vector<1x16xf32> to vector<1x1x16xf32>
    tpu.vector_store %arg9[%c1_95, %c16_96, %c3_97], %150 {strides = array<i32>} : memref<2x22x22xf32, #tpu.memory_space<vmem>>, vector<1x1x16xf32>,
    %151 = vector.extract_strided_slice %33 {offsets = [0, 224], sizes = [1, 16], strides = [1, 1]} : vector<1x256xf32> to vector<1x16xf32>
    %c0_98 = arith.constant 0 : index
    %c17 = arith.constant 17 : index
    %c3_99 = arith.constant 3 : index
    %152 = vector.load %arg9[%c0_98, %c17, %c3_99] : memref<2x22x22xf32, #tpu.memory_space<vmem>>, vector<1x1x16xf32>
    %153 = vector.shape_cast %152 : vector<1x1x16xf32> to vector<1x16xf32>
    %154 = vector.shape_cast %151 : vector<1x16xf32> to vector<1x1x16xf32>
    tpu.vector_store %arg9[%c0_98, %c17, %c3_99], %154 {strides = array<i32>} : memref<2x22x22xf32, #tpu.memory_space<vmem>>, vector<1x1x16xf32>,
    %155 = vector.extract_strided_slice %36 {offsets = [0, 224], sizes = [1, 16], strides = [1, 1]} : vector<1x256xf32> to vector<1x16xf32>
    %c1_100 = arith.constant 1 : index
    %c17_101 = arith.constant 17 : index
    %c3_102 = arith.constant 3 : index
    %156 = vector.load %arg9[%c1_100, %c17_101, %c3_102] : memref<2x22x22xf32, #tpu.memory_space<vmem>>, vector<1x1x16xf32>
    %157 = vector.shape_cast %156 : vector<1x1x16xf32> to vector<1x16xf32>
    %158 = vector.shape_cast %155 : vector<1x16xf32> to vector<1x1x16xf32>
    tpu.vector_store %arg9[%c1_100, %c17_101, %c3_102], %158 {strides = array<i32>} : memref<2x22x22xf32, #tpu.memory_space<vmem>>, vector<1x1x16xf32>,
    %159 = vector.extract_strided_slice %33 {offsets = [0, 240], sizes = [1, 16], strides = [1, 1]} : vector<1x256xf32> to vector<1x16xf32>
    %c0_103 = arith.constant 0 : index
    %c18 = arith.constant 18 : index
    %c3_104 = arith.constant 3 : index
    %160 = vector.load %arg9[%c0_103, %c18, %c3_104] : memref<2x22x22xf32, #tpu.memory_space<vmem>>, vector<1x1x16xf32>
    %161 = vector.shape_cast %160 : vector<1x1x16xf32> to vector<1x16xf32>
    %162 = vector.shape_cast %159 : vector<1x16xf32> to vector<1x1x16xf32>
    tpu.vector_store %arg9[%c0_103, %c18, %c3_104], %162 {strides = array<i32>} : memref<2x22x22xf32, #tpu.memory_space<vmem>>, vector<1x1x16xf32>,
    %163 = vector.extract_strided_slice %36 {offsets = [0, 240], sizes = [1, 16], strides = [1, 1]} : vector<1x256xf32> to vector<1x16xf32>
    %c1_105 = arith.constant 1 : index
    %c18_106 = arith.constant 18 : index
    %c3_107 = arith.constant 3 : index
    %164 = vector.load %arg9[%c1_105, %c18_106, %c3_107] : memref<2x22x22xf32, #tpu.memory_space<vmem>>, vector<1x1x16xf32>
    %165 = vector.shape_cast %164 : vector<1x1x16xf32> to vector<1x16xf32>
    %166 = vector.shape_cast %163 : vector<1x16xf32> to vector<1x1x16xf32>
    tpu.vector_store %arg9[%c1_105, %c18_106, %c3_107], %166 {strides = array<i32>} : memref<2x22x22xf32, #tpu.memory_space<vmem>>, vector<1x1x16xf32>,
    %cst_108 = arith.constant 0.000000e+00 : f32
    %167 = vector.broadcast %cst_108 : f32 to vector<16x16xf32>
    %c0_109 = arith.constant 0 : index
    %c0_110 = arith.constant 0 : index
    %c0_111 = arith.constant 0 : index
    %168 = vector.load %arg9[%c0_109, %c0_110, %c0_111] : memref<2x22x22xf32, #tpu.memory_space<vmem>>, vector<2x22x16xf32>
    %169 = vector.extract_strided_slice %168 {offsets = [0, 0, 0], sizes = [1, 16, 16], strides = [1, 1, 1]} : vector<2x22x16xf32> to vector<1x16x16xf32>
    %170 = vector.shape_cast %169 : vector<1x16x16xf32> to vector<16x16xf32>
    %171 = arith.index_cast %arg1 : i32 to index
    %c0_112 = arith.constant 0 : index
    %172 = memref.load %arg7[%171, %c0_112] : memref<2x99xf32, #tpu.memory_space<smem>>
    %173 = vector.broadcast %172 : f32 to vector<16x16xf32>
    %174 = arith.mulf %170, %173 : vector<16x16xf32>
    %175 = arith.addf %167, %174 : vector<16x16xf32>
    %176 = vector.extract_strided_slice %168 {offsets = [0, 1, 0], sizes = [1, 16, 16], strides = [1, 1, 1]} : vector<2x22x16xf32> to vector<1x16x16xf32>
    %177 = vector.shape_cast %176 : vector<1x16x16xf32> to vector<16x16xf32>
    %178 = arith.index_cast %arg1 : i32 to index
    %c7_113 = arith.constant 7 : index
    %179 = memref.load %arg7[%178, %c7_113] : memref<2x99xf32, #tpu.memory_space<smem>>
    %180 = vector.broadcast %179 : f32 to vector<16x16xf32>
    %181 = arith.mulf %177, %180 : vector<16x16xf32>
    %182 = arith.addf %175, %181 : vector<16x16xf32>
    %183 = vector.extract_strided_slice %168 {offsets = [0, 2, 0], sizes = [1, 16, 16], strides = [1, 1, 1]} : vector<2x22x16xf32> to vector<1x16x16xf32>
    %184 = vector.shape_cast %183 : vector<1x16x16xf32> to vector<16x16xf32>
    %185 = arith.index_cast %arg1 : i32 to index
    %c14_114 = arith.constant 14 : index
    %186 = memref.load %arg7[%185, %c14_114] : memref<2x99xf32, #tpu.memory_space<smem>>
    %187 = vector.broadcast %186 : f32 to vector<16x16xf32>
    %188 = arith.mulf %184, %187 : vector<16x16xf32>
    %189 = arith.addf %182, %188 : vector<16x16xf32>
    %190 = vector.extract_strided_slice %168 {offsets = [0, 3, 0], sizes = [1, 16, 16], strides = [1, 1, 1]} : vector<2x22x16xf32> to vector<1x16x16xf32>
    %191 = vector.shape_cast %190 : vector<1x16x16xf32> to vector<16x16xf32>
    %192 = arith.index_cast %arg1 : i32 to index
    %c21 = arith.constant 21 : index
    %193 = memref.load %arg7[%192, %c21] : memref<2x99xf32, #tpu.memory_space<smem>>
    %194 = vector.broadcast %193 : f32 to vector<16x16xf32>
    %195 = arith.mulf %191, %194 : vector<16x16xf32>
    %196 = arith.addf %189, %195 : vector<16x16xf32>
    %197 = vector.extract_strided_slice %168 {offsets = [0, 4, 0], sizes = [1, 16, 16], strides = [1, 1, 1]} : vector<2x22x16xf32> to vector<1x16x16xf32>
    %198 = vector.shape_cast %197 : vector<1x16x16xf32> to vector<16x16xf32>
    %199 = arith.index_cast %arg1 : i32 to index
    %c28 = arith.constant 28 : index
    %200 = memref.load %arg7[%199, %c28] : memref<2x99xf32, #tpu.memory_space<smem>>
    %201 = vector.broadcast %200 : f32 to vector<16x16xf32>
    %202 = arith.mulf %198, %201 : vector<16x16xf32>
    %203 = arith.addf %196, %202 : vector<16x16xf32>
    %204 = vector.extract_strided_slice %168 {offsets = [0, 5, 0], sizes = [1, 16, 16], strides = [1, 1, 1]} : vector<2x22x16xf32> to vector<1x16x16xf32>
    %205 = vector.shape_cast %204 : vector<1x16x16xf32> to vector<16x16xf32>
    %206 = arith.index_cast %arg1 : i32 to index
    %c35 = arith.constant 35 : index
    %207 = memref.load %arg7[%206, %c35] : memref<2x99xf32, #tpu.memory_space<smem>>
    %208 = vector.broadcast %207 : f32 to vector<16x16xf32>
    %209 = arith.mulf %205, %208 : vector<16x16xf32>
    %210 = arith.addf %203, %209 : vector<16x16xf32>
    %211 = vector.extract_strided_slice %168 {offsets = [0, 6, 0], sizes = [1, 16, 16], strides = [1, 1, 1]} : vector<2x22x16xf32> to vector<1x16x16xf32>
    %212 = vector.shape_cast %211 : vector<1x16x16xf32> to vector<16x16xf32>
    %213 = arith.index_cast %arg1 : i32 to index
    %c42 = arith.constant 42 : index
    %214 = memref.load %arg7[%213, %c42] : memref<2x99xf32, #tpu.memory_space<smem>>
    %215 = vector.broadcast %214 : f32 to vector<16x16xf32>
    %216 = arith.mulf %212, %215 : vector<16x16xf32>
    %217 = arith.addf %210, %216 : vector<16x16xf32>
    %218 = vector.extract_strided_slice %168 {offsets = [1, 0, 0], sizes = [1, 16, 16], strides = [1, 1, 1]} : vector<2x22x16xf32> to vector<1x16x16xf32>
    %219 = vector.shape_cast %218 : vector<1x16x16xf32> to vector<16x16xf32>
    %220 = arith.index_cast %arg1 : i32 to index
    %c49 = arith.constant 49 : index
    %221 = memref.load %arg7[%220, %c49] : memref<2x99xf32, #tpu.memory_space<smem>>
    %222 = vector.broadcast %221 : f32 to vector<16x16xf32>
    %223 = arith.mulf %219, %222 : vector<16x16xf32>
    %224 = arith.addf %217, %223 : vector<16x16xf32>
    %225 = vector.extract_strided_slice %168 {offsets = [1, 1, 0], sizes = [1, 16, 16], strides = [1, 1, 1]} : vector<2x22x16xf32> to vector<1x16x16xf32>
    %226 = vector.shape_cast %225 : vector<1x16x16xf32> to vector<16x16xf32>
    %227 = arith.index_cast %arg1 : i32 to index
    %c56 = arith.constant 56 : index
    %228 = memref.load %arg7[%227, %c56] : memref<2x99xf32, #tpu.memory_space<smem>>
    %229 = vector.broadcast %228 : f32 to vector<16x16xf32>
    %230 = arith.mulf %226, %229 : vector<16x16xf32>
    %231 = arith.addf %224, %230 : vector<16x16xf32>
    %232 = vector.extract_strided_slice %168 {offsets = [1, 2, 0], sizes = [1, 16, 16], strides = [1, 1, 1]} : vector<2x22x16xf32> to vector<1x16x16xf32>
    %233 = vector.shape_cast %232 : vector<1x16x16xf32> to vector<16x16xf32>
    %234 = arith.index_cast %arg1 : i32 to index
    %c63 = arith.constant 63 : index
    %235 = memref.load %arg7[%234, %c63] : memref<2x99xf32, #tpu.memory_space<smem>>
    %236 = vector.broadcast %235 : f32 to vector<16x16xf32>
    %237 = arith.mulf %233, %236 : vector<16x16xf32>
    %238 = arith.addf %231, %237 : vector<16x16xf32>
    %239 = vector.extract_strided_slice %168 {offsets = [1, 3, 0], sizes = [1, 16, 16], strides = [1, 1, 1]} : vector<2x22x16xf32> to vector<1x16x16xf32>
    %240 = vector.shape_cast %239 : vector<1x16x16xf32> to vector<16x16xf32>
    %241 = arith.index_cast %arg1 : i32 to index
    %c70 = arith.constant 70 : index
    %242 = memref.load %arg7[%241, %c70] : memref<2x99xf32, #tpu.memory_space<smem>>
    %243 = vector.broadcast %242 : f32 to vector<16x16xf32>
    %244 = arith.mulf %240, %243 : vector<16x16xf32>
    %245 = arith.addf %238, %244 : vector<16x16xf32>
    %246 = vector.extract_strided_slice %168 {offsets = [1, 4, 0], sizes = [1, 16, 16], strides = [1, 1, 1]} : vector<2x22x16xf32> to vector<1x16x16xf32>
    %247 = vector.shape_cast %246 : vector<1x16x16xf32> to vector<16x16xf32>
    %248 = arith.index_cast %arg1 : i32 to index
    %c77 = arith.constant 77 : index
    %249 = memref.load %arg7[%248, %c77] : memref<2x99xf32, #tpu.memory_space<smem>>
    %250 = vector.broadcast %249 : f32 to vector<16x16xf32>
    %251 = arith.mulf %247, %250 : vector<16x16xf32>
    %252 = arith.addf %245, %251 : vector<16x16xf32>
    %253 = vector.extract_strided_slice %168 {offsets = [1, 5, 0], sizes = [1, 16, 16], strides = [1, 1, 1]} : vector<2x22x16xf32> to vector<1x16x16xf32>
    %254 = vector.shape_cast %253 : vector<1x16x16xf32> to vector<16x16xf32>
    %255 = arith.index_cast %arg1 : i32 to index
    %c84 = arith.constant 84 : index
    %256 = memref.load %arg7[%255, %c84] : memref<2x99xf32, #tpu.memory_space<smem>>
    %257 = vector.broadcast %256 : f32 to vector<16x16xf32>
    %258 = arith.mulf %254, %257 : vector<16x16xf32>
    %259 = arith.addf %252, %258 : vector<16x16xf32>
    %260 = vector.extract_strided_slice %168 {offsets = [1, 6, 0], sizes = [1, 16, 16], strides = [1, 1, 1]} : vector<2x22x16xf32> to vector<1x16x16xf32>
    %261 = vector.shape_cast %260 : vector<1x16x16xf32> to vector<16x16xf32>
    %262 = arith.index_cast %arg1 : i32 to index
    %c91 = arith.constant 91 : index
    %263 = memref.load %arg7[%262, %c91] : memref<2x99xf32, #tpu.memory_space<smem>>
    %264 = vector.broadcast %263 : f32 to vector<16x16xf32>
    %265 = arith.mulf %261, %264 : vector<16x16xf32>
    %266 = arith.addf %259, %265 : vector<16x16xf32>
    %c0_115 = arith.constant 0 : index
    %c0_116 = arith.constant 0 : index
    %c1_117 = arith.constant 1 : index
    %267 = vector.load %arg9[%c0_115, %c0_116, %c1_117] : memref<2x22x22xf32, #tpu.memory_space<vmem>>, vector<2x22x16xf32>
    %268 = vector.extract_strided_slice %267 {offsets = [0, 0, 0], sizes = [1, 16, 16], strides = [1, 1, 1]} : vector<2x22x16xf32> to vector<1x16x16xf32>
    %269 = vector.shape_cast %268 : vector<1x16x16xf32> to vector<16x16xf32>
    %270 = arith.index_cast %arg1 : i32 to index
    %c1_118 = arith.constant 1 : index
    %271 = memref.load %arg7[%270, %c1_118] : memref<2x99xf32, #tpu.memory_space<smem>>
    %272 = vector.broadcast %271 : f32 to vector<16x16xf32>
    %273 = arith.mulf %269, %272 : vector<16x16xf32>
    %274 = arith.addf %266, %273 : vector<16x16xf32>
    %275 = vector.extract_strided_slice %267 {offsets = [0, 1, 0], sizes = [1, 16, 16], strides = [1, 1, 1]} : vector<2x22x16xf32> to vector<1x16x16xf32>
    %276 = vector.shape_cast %275 : vector<1x16x16xf32> to vector<16x16xf32>
    %277 = arith.index_cast %arg1 : i32 to index
    %c8_119 = arith.constant 8 : index
    %278 = memref.load %arg7[%277, %c8_119] : memref<2x99xf32, #tpu.memory_space<smem>>
    %279 = vector.broadcast %278 : f32 to vector<16x16xf32>
    %280 = arith.mulf %276, %279 : vector<16x16xf32>
    %281 = arith.addf %274, %280 : vector<16x16xf32>
    %282 = vector.extract_strided_slice %267 {offsets = [0, 2, 0], sizes = [1, 16, 16], strides = [1, 1, 1]} : vector<2x22x16xf32> to vector<1x16x16xf32>
    %283 = vector.shape_cast %282 : vector<1x16x16xf32> to vector<16x16xf32>
    %284 = arith.index_cast %arg1 : i32 to index
    %c15_120 = arith.constant 15 : index
    %285 = memref.load %arg7[%284, %c15_120] : memref<2x99xf32, #tpu.memory_space<smem>>
    %286 = vector.broadcast %285 : f32 to vector<16x16xf32>
    %287 = arith.mulf %283, %286 : vector<16x16xf32>
    %288 = arith.addf %281, %287 : vector<16x16xf32>
    %289 = vector.extract_strided_slice %267 {offsets = [0, 3, 0], sizes = [1, 16, 16], strides = [1, 1, 1]} : vector<2x22x16xf32> to vector<1x16x16xf32>
    %290 = vector.shape_cast %289 : vector<1x16x16xf32> to vector<16x16xf32>
    %291 = arith.index_cast %arg1 : i32 to index
    %c22 = arith.constant 22 : index
    %292 = memref.load %arg7[%291, %c22] : memref<2x99xf32, #tpu.memory_space<smem>>
    %293 = vector.broadcast %292 : f32 to vector<16x16xf32>
    %294 = arith.mulf %290, %293 : vector<16x16xf32>
    %295 = arith.addf %288, %294 : vector<16x16xf32>
    %296 = vector.extract_strided_slice %267 {offsets = [0, 4, 0], sizes = [1, 16, 16], strides = [1, 1, 1]} : vector<2x22x16xf32> to vector<1x16x16xf32>
    %297 = vector.shape_cast %296 : vector<1x16x16xf32> to vector<16x16xf32>
    %298 = arith.index_cast %arg1 : i32 to index
    %c29 = arith.constant 29 : index
    %299 = memref.load %arg7[%298, %c29] : memref<2x99xf32, #tpu.memory_space<smem>>
    %300 = vector.broadcast %299 : f32 to vector<16x16xf32>
    %301 = arith.mulf %297, %300 : vector<16x16xf32>
    %302 = arith.addf %295, %301 : vector<16x16xf32>
    %303 = vector.extract_strided_slice %267 {offsets = [0, 5, 0], sizes = [1, 16, 16], strides = [1, 1, 1]} : vector<2x22x16xf32> to vector<1x16x16xf32>
    %304 = vector.shape_cast %303 : vector<1x16x16xf32> to vector<16x16xf32>
    %305 = arith.index_cast %arg1 : i32 to index
    %c36 = arith.constant 36 : index
    %306 = memref.load %arg7[%305, %c36] : memref<2x99xf32, #tpu.memory_space<smem>>
    %307 = vector.broadcast %306 : f32 to vector<16x16xf32>
    %308 = arith.mulf %304, %307 : vector<16x16xf32>
    %309 = arith.addf %302, %308 : vector<16x16xf32>
    %310 = vector.extract_strided_slice %267 {offsets = [0, 6, 0], sizes = [1, 16, 16], strides = [1, 1, 1]} : vector<2x22x16xf32> to vector<1x16x16xf32>
    %311 = vector.shape_cast %310 : vector<1x16x16xf32> to vector<16x16xf32>
    %312 = arith.index_cast %arg1 : i32 to index
    %c43 = arith.constant 43 : index
    %313 = memref.load %arg7[%312, %c43] : memref<2x99xf32, #tpu.memory_space<smem>>
    %314 = vector.broadcast %313 : f32 to vector<16x16xf32>
    %315 = arith.mulf %311, %314 : vector<16x16xf32>
    %316 = arith.addf %309, %315 : vector<16x16xf32>
    %317 = vector.extract_strided_slice %267 {offsets = [1, 0, 0], sizes = [1, 16, 16], strides = [1, 1, 1]} : vector<2x22x16xf32> to vector<1x16x16xf32>
    %318 = vector.shape_cast %317 : vector<1x16x16xf32> to vector<16x16xf32>
    %319 = arith.index_cast %arg1 : i32 to index
    %c50 = arith.constant 50 : index
    %320 = memref.load %arg7[%319, %c50] : memref<2x99xf32, #tpu.memory_space<smem>>
    %321 = vector.broadcast %320 : f32 to vector<16x16xf32>
    %322 = arith.mulf %318, %321 : vector<16x16xf32>
    %323 = arith.addf %316, %322 : vector<16x16xf32>
    %324 = vector.extract_strided_slice %267 {offsets = [1, 1, 0], sizes = [1, 16, 16], strides = [1, 1, 1]} : vector<2x22x16xf32> to vector<1x16x16xf32>
    %325 = vector.shape_cast %324 : vector<1x16x16xf32> to vector<16x16xf32>
    %326 = arith.index_cast %arg1 : i32 to index
    %c57 = arith.constant 57 : index
    %327 = memref.load %arg7[%326, %c57] : memref<2x99xf32, #tpu.memory_space<smem>>
    %328 = vector.broadcast %327 : f32 to vector<16x16xf32>
    %329 = arith.mulf %325, %328 : vector<16x16xf32>
    %330 = arith.addf %323, %329 : vector<16x16xf32>
    %331 = vector.extract_strided_slice %267 {offsets = [1, 2, 0], sizes = [1, 16, 16], strides = [1, 1, 1]} : vector<2x22x16xf32> to vector<1x16x16xf32>
    %332 = vector.shape_cast %331 : vector<1x16x16xf32> to vector<16x16xf32>
    %333 = arith.index_cast %arg1 : i32 to index
    %c64 = arith.constant 64 : index
    %334 = memref.load %arg7[%333, %c64] : memref<2x99xf32, #tpu.memory_space<smem>>
    %335 = vector.broadcast %334 : f32 to vector<16x16xf32>
    %336 = arith.mulf %332, %335 : vector<16x16xf32>
    %337 = arith.addf %330, %336 : vector<16x16xf32>
    %338 = vector.extract_strided_slice %267 {offsets = [1, 3, 0], sizes = [1, 16, 16], strides = [1, 1, 1]} : vector<2x22x16xf32> to vector<1x16x16xf32>
    %339 = vector.shape_cast %338 : vector<1x16x16xf32> to vector<16x16xf32>
    %340 = arith.index_cast %arg1 : i32 to index
    %c71 = arith.constant 71 : index
    %341 = memref.load %arg7[%340, %c71] : memref<2x99xf32, #tpu.memory_space<smem>>
    %342 = vector.broadcast %341 : f32 to vector<16x16xf32>
    %343 = arith.mulf %339, %342 : vector<16x16xf32>
    %344 = arith.addf %337, %343 : vector<16x16xf32>
    %345 = vector.extract_strided_slice %267 {offsets = [1, 4, 0], sizes = [1, 16, 16], strides = [1, 1, 1]} : vector<2x22x16xf32> to vector<1x16x16xf32>
    %346 = vector.shape_cast %345 : vector<1x16x16xf32> to vector<16x16xf32>
    %347 = arith.index_cast %arg1 : i32 to index
    %c78 = arith.constant 78 : index
    %348 = memref.load %arg7[%347, %c78] : memref<2x99xf32, #tpu.memory_space<smem>>
    %349 = vector.broadcast %348 : f32 to vector<16x16xf32>
    %350 = arith.mulf %346, %349 : vector<16x16xf32>
    %351 = arith.addf %344, %350 : vector<16x16xf32>
    %352 = vector.extract_strided_slice %267 {offsets = [1, 5, 0], sizes = [1, 16, 16], strides = [1, 1, 1]} : vector<2x22x16xf32> to vector<1x16x16xf32>
    %353 = vector.shape_cast %352 : vector<1x16x16xf32> to vector<16x16xf32>
    %354 = arith.index_cast %arg1 : i32 to index
    %c85 = arith.constant 85 : index
    %355 = memref.load %arg7[%354, %c85] : memref<2x99xf32, #tpu.memory_space<smem>>
    %356 = vector.broadcast %355 : f32 to vector<16x16xf32>
    %357 = arith.mulf %353, %356 : vector<16x16xf32>
    %358 = arith.addf %351, %357 : vector<16x16xf32>
    %359 = vector.extract_strided_slice %267 {offsets = [1, 6, 0], sizes = [1, 16, 16], strides = [1, 1, 1]} : vector<2x22x16xf32> to vector<1x16x16xf32>
    %360 = vector.shape_cast %359 : vector<1x16x16xf32> to vector<16x16xf32>
    %361 = arith.index_cast %arg1 : i32 to index
    %c92 = arith.constant 92 : index
    %362 = memref.load %arg7[%361, %c92] : memref<2x99xf32, #tpu.memory_space<smem>>
    %363 = vector.broadcast %362 : f32 to vector<16x16xf32>
    %364 = arith.mulf %360, %363 : vector<16x16xf32>
    %365 = arith.addf %358, %364 : vector<16x16xf32>
    %c0_121 = arith.constant 0 : index
    %c0_122 = arith.constant 0 : index
    %c2 = arith.constant 2 : index
    %366 = vector.load %arg9[%c0_121, %c0_122, %c2] : memref<2x22x22xf32, #tpu.memory_space<vmem>>, vector<2x22x16xf32>
    %367 = vector.extract_strided_slice %366 {offsets = [0, 0, 0], sizes = [1, 16, 16], strides = [1, 1, 1]} : vector<2x22x16xf32> to vector<1x16x16xf32>
    %368 = vector.shape_cast %367 : vector<1x16x16xf32> to vector<16x16xf32>
    %369 = arith.index_cast %arg1 : i32 to index
    %c2_123 = arith.constant 2 : index
    %370 = memref.load %arg7[%369, %c2_123] : memref<2x99xf32, #tpu.memory_space<smem>>
    %371 = vector.broadcast %370 : f32 to vector<16x16xf32>
    %372 = arith.mulf %368, %371 : vector<16x16xf32>
    %373 = arith.addf %365, %372 : vector<16x16xf32>
    %374 = vector.extract_strided_slice %366 {offsets = [0, 1, 0], sizes = [1, 16, 16], strides = [1, 1, 1]} : vector<2x22x16xf32> to vector<1x16x16xf32>
    %375 = vector.shape_cast %374 : vector<1x16x16xf32> to vector<16x16xf32>
    %376 = arith.index_cast %arg1 : i32 to index
    %c9_124 = arith.constant 9 : index
    %377 = memref.load %arg7[%376, %c9_124] : memref<2x99xf32, #tpu.memory_space<smem>>
    %378 = vector.broadcast %377 : f32 to vector<16x16xf32>
    %379 = arith.mulf %375, %378 : vector<16x16xf32>
    %380 = arith.addf %373, %379 : vector<16x16xf32>
    %381 = vector.extract_strided_slice %366 {offsets = [0, 2, 0], sizes = [1, 16, 16], strides = [1, 1, 1]} : vector<2x22x16xf32> to vector<1x16x16xf32>
    %382 = vector.shape_cast %381 : vector<1x16x16xf32> to vector<16x16xf32>
    %383 = arith.index_cast %arg1 : i32 to index
    %c16_125 = arith.constant 16 : index
    %384 = memref.load %arg7[%383, %c16_125] : memref<2x99xf32, #tpu.memory_space<smem>>
    %385 = vector.broadcast %384 : f32 to vector<16x16xf32>
    %386 = arith.mulf %382, %385 : vector<16x16xf32>
    %387 = arith.addf %380, %386 : vector<16x16xf32>
    %388 = vector.extract_strided_slice %366 {offsets = [0, 3, 0], sizes = [1, 16, 16], strides = [1, 1, 1]} : vector<2x22x16xf32> to vector<1x16x16xf32>
    %389 = vector.shape_cast %388 : vector<1x16x16xf32> to vector<16x16xf32>
    %390 = arith.index_cast %arg1 : i32 to index
    %c23 = arith.constant 23 : index
    %391 = memref.load %arg7[%390, %c23] : memref<2x99xf32, #tpu.memory_space<smem>>
    %392 = vector.broadcast %391 : f32 to vector<16x16xf32>
    %393 = arith.mulf %389, %392 : vector<16x16xf32>
    %394 = arith.addf %387, %393 : vector<16x16xf32>
    %395 = vector.extract_strided_slice %366 {offsets = [0, 4, 0], sizes = [1, 16, 16], strides = [1, 1, 1]} : vector<2x22x16xf32> to vector<1x16x16xf32>
    %396 = vector.shape_cast %395 : vector<1x16x16xf32> to vector<16x16xf32>
    %397 = arith.index_cast %arg1 : i32 to index
    %c30 = arith.constant 30 : index
    %398 = memref.load %arg7[%397, %c30] : memref<2x99xf32, #tpu.memory_space<smem>>
    %399 = vector.broadcast %398 : f32 to vector<16x16xf32>
    %400 = arith.mulf %396, %399 : vector<16x16xf32>
    %401 = arith.addf %394, %400 : vector<16x16xf32>
    %402 = vector.extract_strided_slice %366 {offsets = [0, 5, 0], sizes = [1, 16, 16], strides = [1, 1, 1]} : vector<2x22x16xf32> to vector<1x16x16xf32>
    %403 = vector.shape_cast %402 : vector<1x16x16xf32> to vector<16x16xf32>
    %404 = arith.index_cast %arg1 : i32 to index
    %c37 = arith.constant 37 : index
    %405 = memref.load %arg7[%404, %c37] : memref<2x99xf32, #tpu.memory_space<smem>>
    %406 = vector.broadcast %405 : f32 to vector<16x16xf32>
    %407 = arith.mulf %403, %406 : vector<16x16xf32>
    %408 = arith.addf %401, %407 : vector<16x16xf32>
    %409 = vector.extract_strided_slice %366 {offsets = [0, 6, 0], sizes = [1, 16, 16], strides = [1, 1, 1]} : vector<2x22x16xf32> to vector<1x16x16xf32>
    %410 = vector.shape_cast %409 : vector<1x16x16xf32> to vector<16x16xf32>
    %411 = arith.index_cast %arg1 : i32 to index
    %c44 = arith.constant 44 : index
    %412 = memref.load %arg7[%411, %c44] : memref<2x99xf32, #tpu.memory_space<smem>>
    %413 = vector.broadcast %412 : f32 to vector<16x16xf32>
    %414 = arith.mulf %410, %413 : vector<16x16xf32>
    %415 = arith.addf %408, %414 : vector<16x16xf32>
    %416 = vector.extract_strided_slice %366 {offsets = [1, 0, 0], sizes = [1, 16, 16], strides = [1, 1, 1]} : vector<2x22x16xf32> to vector<1x16x16xf32>
    %417 = vector.shape_cast %416 : vector<1x16x16xf32> to vector<16x16xf32>
    %418 = arith.index_cast %arg1 : i32 to index
    %c51 = arith.constant 51 : index
    %419 = memref.load %arg7[%418, %c51] : memref<2x99xf32, #tpu.memory_space<smem>>
    %420 = vector.broadcast %419 : f32 to vector<16x16xf32>
    %421 = arith.mulf %417, %420 : vector<16x16xf32>
    %422 = arith.addf %415, %421 : vector<16x16xf32>
    %423 = vector.extract_strided_slice %366 {offsets = [1, 1, 0], sizes = [1, 16, 16], strides = [1, 1, 1]} : vector<2x22x16xf32> to vector<1x16x16xf32>
    %424 = vector.shape_cast %423 : vector<1x16x16xf32> to vector<16x16xf32>
    %425 = arith.index_cast %arg1 : i32 to index
    %c58 = arith.constant 58 : index
    %426 = memref.load %arg7[%425, %c58] : memref<2x99xf32, #tpu.memory_space<smem>>
    %427 = vector.broadcast %426 : f32 to vector<16x16xf32>
    %428 = arith.mulf %424, %427 : vector<16x16xf32>
    %429 = arith.addf %422, %428 : vector<16x16xf32>
    %430 = vector.extract_strided_slice %366 {offsets = [1, 2, 0], sizes = [1, 16, 16], strides = [1, 1, 1]} : vector<2x22x16xf32> to vector<1x16x16xf32>
    %431 = vector.shape_cast %430 : vector<1x16x16xf32> to vector<16x16xf32>
    %432 = arith.index_cast %arg1 : i32 to index
    %c65 = arith.constant 65 : index
    %433 = memref.load %arg7[%432, %c65] : memref<2x99xf32, #tpu.memory_space<smem>>
    %434 = vector.broadcast %433 : f32 to vector<16x16xf32>
    %435 = arith.mulf %431, %434 : vector<16x16xf32>
    %436 = arith.addf %429, %435 : vector<16x16xf32>
    %437 = vector.extract_strided_slice %366 {offsets = [1, 3, 0], sizes = [1, 16, 16], strides = [1, 1, 1]} : vector<2x22x16xf32> to vector<1x16x16xf32>
    %438 = vector.shape_cast %437 : vector<1x16x16xf32> to vector<16x16xf32>
    %439 = arith.index_cast %arg1 : i32 to index
    %c72 = arith.constant 72 : index
    %440 = memref.load %arg7[%439, %c72] : memref<2x99xf32, #tpu.memory_space<smem>>
    %441 = vector.broadcast %440 : f32 to vector<16x16xf32>
    %442 = arith.mulf %438, %441 : vector<16x16xf32>
    %443 = arith.addf %436, %442 : vector<16x16xf32>
    %444 = vector.extract_strided_slice %366 {offsets = [1, 4, 0], sizes = [1, 16, 16], strides = [1, 1, 1]} : vector<2x22x16xf32> to vector<1x16x16xf32>
    %445 = vector.shape_cast %444 : vector<1x16x16xf32> to vector<16x16xf32>
    %446 = arith.index_cast %arg1 : i32 to index
    %c79 = arith.constant 79 : index
    %447 = memref.load %arg7[%446, %c79] : memref<2x99xf32, #tpu.memory_space<smem>>
    %448 = vector.broadcast %447 : f32 to vector<16x16xf32>
    %449 = arith.mulf %445, %448 : vector<16x16xf32>
    %450 = arith.addf %443, %449 : vector<16x16xf32>
    %451 = vector.extract_strided_slice %366 {offsets = [1, 5, 0], sizes = [1, 16, 16], strides = [1, 1, 1]} : vector<2x22x16xf32> to vector<1x16x16xf32>
    %452 = vector.shape_cast %451 : vector<1x16x16xf32> to vector<16x16xf32>
    %453 = arith.index_cast %arg1 : i32 to index
    %c86 = arith.constant 86 : index
    %454 = memref.load %arg7[%453, %c86] : memref<2x99xf32, #tpu.memory_space<smem>>
    %455 = vector.broadcast %454 : f32 to vector<16x16xf32>
    %456 = arith.mulf %452, %455 : vector<16x16xf32>
    %457 = arith.addf %450, %456 : vector<16x16xf32>
    %458 = vector.extract_strided_slice %366 {offsets = [1, 6, 0], sizes = [1, 16, 16], strides = [1, 1, 1]} : vector<2x22x16xf32> to vector<1x16x16xf32>
    %459 = vector.shape_cast %458 : vector<1x16x16xf32> to vector<16x16xf32>
    %460 = arith.index_cast %arg1 : i32 to index
    %c93 = arith.constant 93 : index
    %461 = memref.load %arg7[%460, %c93] : memref<2x99xf32, #tpu.memory_space<smem>>
    %462 = vector.broadcast %461 : f32 to vector<16x16xf32>
    %463 = arith.mulf %459, %462 : vector<16x16xf32>
    %464 = arith.addf %457, %463 : vector<16x16xf32>
    %c0_126 = arith.constant 0 : index
    %c0_127 = arith.constant 0 : index
    %c3_128 = arith.constant 3 : index
    %465 = vector.load %arg9[%c0_126, %c0_127, %c3_128] : memref<2x22x22xf32, #tpu.memory_space<vmem>>, vector<2x22x16xf32>
    %466 = vector.extract_strided_slice %465 {offsets = [0, 0, 0], sizes = [1, 16, 16], strides = [1, 1, 1]} : vector<2x22x16xf32> to vector<1x16x16xf32>
    %467 = vector.shape_cast %466 : vector<1x16x16xf32> to vector<16x16xf32>
    %468 = arith.index_cast %arg1 : i32 to index
    %c3_129 = arith.constant 3 : index
    %469 = memref.load %arg7[%468, %c3_129] : memref<2x99xf32, #tpu.memory_space<smem>>
    %470 = vector.broadcast %469 : f32 to vector<16x16xf32>
    %471 = arith.mulf %467, %470 : vector<16x16xf32>
    %472 = arith.addf %464, %471 : vector<16x16xf32>
    %473 = vector.extract_strided_slice %465 {offsets = [0, 1, 0], sizes = [1, 16, 16], strides = [1, 1, 1]} : vector<2x22x16xf32> to vector<1x16x16xf32>
    %474 = vector.shape_cast %473 : vector<1x16x16xf32> to vector<16x16xf32>
    %475 = arith.index_cast %arg1 : i32 to index
    %c10_130 = arith.constant 10 : index
    %476 = memref.load %arg7[%475, %c10_130] : memref<2x99xf32, #tpu.memory_space<smem>>
    %477 = vector.broadcast %476 : f32 to vector<16x16xf32>
    %478 = arith.mulf %474, %477 : vector<16x16xf32>
    %479 = arith.addf %472, %478 : vector<16x16xf32>
    %480 = vector.extract_strided_slice %465 {offsets = [0, 2, 0], sizes = [1, 16, 16], strides = [1, 1, 1]} : vector<2x22x16xf32> to vector<1x16x16xf32>
    %481 = vector.shape_cast %480 : vector<1x16x16xf32> to vector<16x16xf32>
    %482 = arith.index_cast %arg1 : i32 to index
    %c17_131 = arith.constant 17 : index
    %483 = memref.load %arg7[%482, %c17_131] : memref<2x99xf32, #tpu.memory_space<smem>>
    %484 = vector.broadcast %483 : f32 to vector<16x16xf32>
    %485 = arith.mulf %481, %484 : vector<16x16xf32>
    %486 = arith.addf %479, %485 : vector<16x16xf32>
    %487 = vector.extract_strided_slice %465 {offsets = [0, 3, 0], sizes = [1, 16, 16], strides = [1, 1, 1]} : vector<2x22x16xf32> to vector<1x16x16xf32>
    %488 = vector.shape_cast %487 : vector<1x16x16xf32> to vector<16x16xf32>
    %489 = arith.index_cast %arg1 : i32 to index
    %c24 = arith.constant 24 : index
    %490 = memref.load %arg7[%489, %c24] : memref<2x99xf32, #tpu.memory_space<smem>>
    %491 = vector.broadcast %490 : f32 to vector<16x16xf32>
    %492 = arith.mulf %488, %491 : vector<16x16xf32>
    %493 = arith.addf %486, %492 : vector<16x16xf32>
    %494 = vector.extract_strided_slice %465 {offsets = [0, 4, 0], sizes = [1, 16, 16], strides = [1, 1, 1]} : vector<2x22x16xf32> to vector<1x16x16xf32>
    %495 = vector.shape_cast %494 : vector<1x16x16xf32> to vector<16x16xf32>
    %496 = arith.index_cast %arg1 : i32 to index
    %c31 = arith.constant 31 : index
    %497 = memref.load %arg7[%496, %c31] : memref<2x99xf32, #tpu.memory_space<smem>>
    %498 = vector.broadcast %497 : f32 to vector<16x16xf32>
    %499 = arith.mulf %495, %498 : vector<16x16xf32>
    %500 = arith.addf %493, %499 : vector<16x16xf32>
    %501 = vector.extract_strided_slice %465 {offsets = [0, 5, 0], sizes = [1, 16, 16], strides = [1, 1, 1]} : vector<2x22x16xf32> to vector<1x16x16xf32>
    %502 = vector.shape_cast %501 : vector<1x16x16xf32> to vector<16x16xf32>
    %503 = arith.index_cast %arg1 : i32 to index
    %c38 = arith.constant 38 : index
    %504 = memref.load %arg7[%503, %c38] : memref<2x99xf32, #tpu.memory_space<smem>>
    %505 = vector.broadcast %504 : f32 to vector<16x16xf32>
    %506 = arith.mulf %502, %505 : vector<16x16xf32>
    %507 = arith.addf %500, %506 : vector<16x16xf32>
    %508 = vector.extract_strided_slice %465 {offsets = [0, 6, 0], sizes = [1, 16, 16], strides = [1, 1, 1]} : vector<2x22x16xf32> to vector<1x16x16xf32>
    %509 = vector.shape_cast %508 : vector<1x16x16xf32> to vector<16x16xf32>
    %510 = arith.index_cast %arg1 : i32 to index
    %c45 = arith.constant 45 : index
    %511 = memref.load %arg7[%510, %c45] : memref<2x99xf32, #tpu.memory_space<smem>>
    %512 = vector.broadcast %511 : f32 to vector<16x16xf32>
    %513 = arith.mulf %509, %512 : vector<16x16xf32>
    %514 = arith.addf %507, %513 : vector<16x16xf32>
    %515 = vector.extract_strided_slice %465 {offsets = [1, 0, 0], sizes = [1, 16, 16], strides = [1, 1, 1]} : vector<2x22x16xf32> to vector<1x16x16xf32>
    %516 = vector.shape_cast %515 : vector<1x16x16xf32> to vector<16x16xf32>
    %517 = arith.index_cast %arg1 : i32 to index
    %c52 = arith.constant 52 : index
    %518 = memref.load %arg7[%517, %c52] : memref<2x99xf32, #tpu.memory_space<smem>>
    %519 = vector.broadcast %518 : f32 to vector<16x16xf32>
    %520 = arith.mulf %516, %519 : vector<16x16xf32>
    %521 = arith.addf %514, %520 : vector<16x16xf32>
    %522 = vector.extract_strided_slice %465 {offsets = [1, 1, 0], sizes = [1, 16, 16], strides = [1, 1, 1]} : vector<2x22x16xf32> to vector<1x16x16xf32>
    %523 = vector.shape_cast %522 : vector<1x16x16xf32> to vector<16x16xf32>
    %524 = arith.index_cast %arg1 : i32 to index
    %c59 = arith.constant 59 : index
    %525 = memref.load %arg7[%524, %c59] : memref<2x99xf32, #tpu.memory_space<smem>>
    %526 = vector.broadcast %525 : f32 to vector<16x16xf32>
    %527 = arith.mulf %523, %526 : vector<16x16xf32>
    %528 = arith.addf %521, %527 : vector<16x16xf32>
    %529 = vector.extract_strided_slice %465 {offsets = [1, 2, 0], sizes = [1, 16, 16], strides = [1, 1, 1]} : vector<2x22x16xf32> to vector<1x16x16xf32>
    %530 = vector.shape_cast %529 : vector<1x16x16xf32> to vector<16x16xf32>
    %531 = arith.index_cast %arg1 : i32 to index
    %c66 = arith.constant 66 : index
    %532 = memref.load %arg7[%531, %c66] : memref<2x99xf32, #tpu.memory_space<smem>>
    %533 = vector.broadcast %532 : f32 to vector<16x16xf32>
    %534 = arith.mulf %530, %533 : vector<16x16xf32>
    %535 = arith.addf %528, %534 : vector<16x16xf32>
    %536 = vector.extract_strided_slice %465 {offsets = [1, 3, 0], sizes = [1, 16, 16], strides = [1, 1, 1]} : vector<2x22x16xf32> to vector<1x16x16xf32>
    %537 = vector.shape_cast %536 : vector<1x16x16xf32> to vector<16x16xf32>
    %538 = arith.index_cast %arg1 : i32 to index
    %c73 = arith.constant 73 : index
    %539 = memref.load %arg7[%538, %c73] : memref<2x99xf32, #tpu.memory_space<smem>>
    %540 = vector.broadcast %539 : f32 to vector<16x16xf32>
    %541 = arith.mulf %537, %540 : vector<16x16xf32>
    %542 = arith.addf %535, %541 : vector<16x16xf32>
    %543 = vector.extract_strided_slice %465 {offsets = [1, 4, 0], sizes = [1, 16, 16], strides = [1, 1, 1]} : vector<2x22x16xf32> to vector<1x16x16xf32>
    %544 = vector.shape_cast %543 : vector<1x16x16xf32> to vector<16x16xf32>
    %545 = arith.index_cast %arg1 : i32 to index
    %c80 = arith.constant 80 : index
    %546 = memref.load %arg7[%545, %c80] : memref<2x99xf32, #tpu.memory_space<smem>>
    %547 = vector.broadcast %546 : f32 to vector<16x16xf32>
    %548 = arith.mulf %544, %547 : vector<16x16xf32>
    %549 = arith.addf %542, %548 : vector<16x16xf32>
    %550 = vector.extract_strided_slice %465 {offsets = [1, 5, 0], sizes = [1, 16, 16], strides = [1, 1, 1]} : vector<2x22x16xf32> to vector<1x16x16xf32>
    %551 = vector.shape_cast %550 : vector<1x16x16xf32> to vector<16x16xf32>
    %552 = arith.index_cast %arg1 : i32 to index
    %c87 = arith.constant 87 : index
    %553 = memref.load %arg7[%552, %c87] : memref<2x99xf32, #tpu.memory_space<smem>>
    %554 = vector.broadcast %553 : f32 to vector<16x16xf32>
    %555 = arith.mulf %551, %554 : vector<16x16xf32>
    %556 = arith.addf %549, %555 : vector<16x16xf32>
    %557 = vector.extract_strided_slice %465 {offsets = [1, 6, 0], sizes = [1, 16, 16], strides = [1, 1, 1]} : vector<2x22x16xf32> to vector<1x16x16xf32>
    %558 = vector.shape_cast %557 : vector<1x16x16xf32> to vector<16x16xf32>
    %559 = arith.index_cast %arg1 : i32 to index
    %c94 = arith.constant 94 : index
    %560 = memref.load %arg7[%559, %c94] : memref<2x99xf32, #tpu.memory_space<smem>>
    %561 = vector.broadcast %560 : f32 to vector<16x16xf32>
    %562 = arith.mulf %558, %561 : vector<16x16xf32>
    %563 = arith.addf %556, %562 : vector<16x16xf32>
    %c0_132 = arith.constant 0 : index
    %c0_133 = arith.constant 0 : index
    %c4_134 = arith.constant 4 : index
    %564 = vector.load %arg9[%c0_132, %c0_133, %c4_134] : memref<2x22x22xf32, #tpu.memory_space<vmem>>, vector<2x22x16xf32>
    %565 = vector.extract_strided_slice %564 {offsets = [0, 0, 0], sizes = [1, 16, 16], strides = [1, 1, 1]} : vector<2x22x16xf32> to vector<1x16x16xf32>
    %566 = vector.shape_cast %565 : vector<1x16x16xf32> to vector<16x16xf32>
    %567 = arith.index_cast %arg1 : i32 to index
    %c4_135 = arith.constant 4 : index
    %568 = memref.load %arg7[%567, %c4_135] : memref<2x99xf32, #tpu.memory_space<smem>>
    %569 = vector.broadcast %568 : f32 to vector<16x16xf32>
    %570 = arith.mulf %566, %569 : vector<16x16xf32>
    %571 = arith.addf %563, %570 : vector<16x16xf32>
    %572 = vector.extract_strided_slice %564 {offsets = [0, 1, 0], sizes = [1, 16, 16], strides = [1, 1, 1]} : vector<2x22x16xf32> to vector<1x16x16xf32>
    %573 = vector.shape_cast %572 : vector<1x16x16xf32> to vector<16x16xf32>
    %574 = arith.index_cast %arg1 : i32 to index
    %c11_136 = arith.constant 11 : index
    %575 = memref.load %arg7[%574, %c11_136] : memref<2x99xf32, #tpu.memory_space<smem>>
    %576 = vector.broadcast %575 : f32 to vector<16x16xf32>
    %577 = arith.mulf %573, %576 : vector<16x16xf32>
    %578 = arith.addf %571, %577 : vector<16x16xf32>
    %579 = vector.extract_strided_slice %564 {offsets = [0, 2, 0], sizes = [1, 16, 16], strides = [1, 1, 1]} : vector<2x22x16xf32> to vector<1x16x16xf32>
    %580 = vector.shape_cast %579 : vector<1x16x16xf32> to vector<16x16xf32>
    %581 = arith.index_cast %arg1 : i32 to index
    %c18_137 = arith.constant 18 : index
    %582 = memref.load %arg7[%581, %c18_137] : memref<2x99xf32, #tpu.memory_space<smem>>
    %583 = vector.broadcast %582 : f32 to vector<16x16xf32>
    %584 = arith.mulf %580, %583 : vector<16x16xf32>
    %585 = arith.addf %578, %584 : vector<16x16xf32>
    %586 = vector.extract_strided_slice %564 {offsets = [0, 3, 0], sizes = [1, 16, 16], strides = [1, 1, 1]} : vector<2x22x16xf32> to vector<1x16x16xf32>
    %587 = vector.shape_cast %586 : vector<1x16x16xf32> to vector<16x16xf32>
    %588 = arith.index_cast %arg1 : i32 to index
    %c25 = arith.constant 25 : index
    %589 = memref.load %arg7[%588, %c25] : memref<2x99xf32, #tpu.memory_space<smem>>
    %590 = vector.broadcast %589 : f32 to vector<16x16xf32>
    %591 = arith.mulf %587, %590 : vector<16x16xf32>
    %592 = arith.addf %585, %591 : vector<16x16xf32>
    %593 = vector.extract_strided_slice %564 {offsets = [0, 4, 0], sizes = [1, 16, 16], strides = [1, 1, 1]} : vector<2x22x16xf32> to vector<1x16x16xf32>
    %594 = vector.shape_cast %593 : vector<1x16x16xf32> to vector<16x16xf32>
    %595 = arith.index_cast %arg1 : i32 to index
    %c32 = arith.constant 32 : index
    %596 = memref.load %arg7[%595, %c32] : memref<2x99xf32, #tpu.memory_space<smem>>
    %597 = vector.broadcast %596 : f32 to vector<16x16xf32>
    %598 = arith.mulf %594, %597 : vector<16x16xf32>
    %599 = arith.addf %592, %598 : vector<16x16xf32>
    %600 = vector.extract_strided_slice %564 {offsets = [0, 5, 0], sizes = [1, 16, 16], strides = [1, 1, 1]} : vector<2x22x16xf32> to vector<1x16x16xf32>
    %601 = vector.shape_cast %600 : vector<1x16x16xf32> to vector<16x16xf32>
    %602 = arith.index_cast %arg1 : i32 to index
    %c39 = arith.constant 39 : index
    %603 = memref.load %arg7[%602, %c39] : memref<2x99xf32, #tpu.memory_space<smem>>
    %604 = vector.broadcast %603 : f32 to vector<16x16xf32>
    %605 = arith.mulf %601, %604 : vector<16x16xf32>
    %606 = arith.addf %599, %605 : vector<16x16xf32>
    %607 = vector.extract_strided_slice %564 {offsets = [0, 6, 0], sizes = [1, 16, 16], strides = [1, 1, 1]} : vector<2x22x16xf32> to vector<1x16x16xf32>
    %608 = vector.shape_cast %607 : vector<1x16x16xf32> to vector<16x16xf32>
    %609 = arith.index_cast %arg1 : i32 to index
    %c46 = arith.constant 46 : index
    %610 = memref.load %arg7[%609, %c46] : memref<2x99xf32, #tpu.memory_space<smem>>
    %611 = vector.broadcast %610 : f32 to vector<16x16xf32>
    %612 = arith.mulf %608, %611 : vector<16x16xf32>
    %613 = arith.addf %606, %612 : vector<16x16xf32>
    %614 = vector.extract_strided_slice %564 {offsets = [1, 0, 0], sizes = [1, 16, 16], strides = [1, 1, 1]} : vector<2x22x16xf32> to vector<1x16x16xf32>
    %615 = vector.shape_cast %614 : vector<1x16x16xf32> to vector<16x16xf32>
    %616 = arith.index_cast %arg1 : i32 to index
    %c53 = arith.constant 53 : index
    %617 = memref.load %arg7[%616, %c53] : memref<2x99xf32, #tpu.memory_space<smem>>
    %618 = vector.broadcast %617 : f32 to vector<16x16xf32>
    %619 = arith.mulf %615, %618 : vector<16x16xf32>
    %620 = arith.addf %613, %619 : vector<16x16xf32>
    %621 = vector.extract_strided_slice %564 {offsets = [1, 1, 0], sizes = [1, 16, 16], strides = [1, 1, 1]} : vector<2x22x16xf32> to vector<1x16x16xf32>
    %622 = vector.shape_cast %621 : vector<1x16x16xf32> to vector<16x16xf32>
    %623 = arith.index_cast %arg1 : i32 to index
    %c60 = arith.constant 60 : index
    %624 = memref.load %arg7[%623, %c60] : memref<2x99xf32, #tpu.memory_space<smem>>
    %625 = vector.broadcast %624 : f32 to vector<16x16xf32>
    %626 = arith.mulf %622, %625 : vector<16x16xf32>
    %627 = arith.addf %620, %626 : vector<16x16xf32>
    %628 = vector.extract_strided_slice %564 {offsets = [1, 2, 0], sizes = [1, 16, 16], strides = [1, 1, 1]} : vector<2x22x16xf32> to vector<1x16x16xf32>
    %629 = vector.shape_cast %628 : vector<1x16x16xf32> to vector<16x16xf32>
    %630 = arith.index_cast %arg1 : i32 to index
    %c67 = arith.constant 67 : index
    %631 = memref.load %arg7[%630, %c67] : memref<2x99xf32, #tpu.memory_space<smem>>
    %632 = vector.broadcast %631 : f32 to vector<16x16xf32>
    %633 = arith.mulf %629, %632 : vector<16x16xf32>
    %634 = arith.addf %627, %633 : vector<16x16xf32>
    %635 = vector.extract_strided_slice %564 {offsets = [1, 3, 0], sizes = [1, 16, 16], strides = [1, 1, 1]} : vector<2x22x16xf32> to vector<1x16x16xf32>
    %636 = vector.shape_cast %635 : vector<1x16x16xf32> to vector<16x16xf32>
    %637 = arith.index_cast %arg1 : i32 to index
    %c74 = arith.constant 74 : index
    %638 = memref.load %arg7[%637, %c74] : memref<2x99xf32, #tpu.memory_space<smem>>
    %639 = vector.broadcast %638 : f32 to vector<16x16xf32>
    %640 = arith.mulf %636, %639 : vector<16x16xf32>
    %641 = arith.addf %634, %640 : vector<16x16xf32>
    %642 = vector.extract_strided_slice %564 {offsets = [1, 4, 0], sizes = [1, 16, 16], strides = [1, 1, 1]} : vector<2x22x16xf32> to vector<1x16x16xf32>
    %643 = vector.shape_cast %642 : vector<1x16x16xf32> to vector<16x16xf32>
    %644 = arith.index_cast %arg1 : i32 to index
    %c81 = arith.constant 81 : index
    %645 = memref.load %arg7[%644, %c81] : memref<2x99xf32, #tpu.memory_space<smem>>
    %646 = vector.broadcast %645 : f32 to vector<16x16xf32>
    %647 = arith.mulf %643, %646 : vector<16x16xf32>
    %648 = arith.addf %641, %647 : vector<16x16xf32>
    %649 = vector.extract_strided_slice %564 {offsets = [1, 5, 0], sizes = [1, 16, 16], strides = [1, 1, 1]} : vector<2x22x16xf32> to vector<1x16x16xf32>
    %650 = vector.shape_cast %649 : vector<1x16x16xf32> to vector<16x16xf32>
    %651 = arith.index_cast %arg1 : i32 to index
    %c88 = arith.constant 88 : index
    %652 = memref.load %arg7[%651, %c88] : memref<2x99xf32, #tpu.memory_space<smem>>
    %653 = vector.broadcast %652 : f32 to vector<16x16xf32>
    %654 = arith.mulf %650, %653 : vector<16x16xf32>
    %655 = arith.addf %648, %654 : vector<16x16xf32>
    %656 = vector.extract_strided_slice %564 {offsets = [1, 6, 0], sizes = [1, 16, 16], strides = [1, 1, 1]} : vector<2x22x16xf32> to vector<1x16x16xf32>
    %657 = vector.shape_cast %656 : vector<1x16x16xf32> to vector<16x16xf32>
    %658 = arith.index_cast %arg1 : i32 to index
    %c95 = arith.constant 95 : index
    %659 = memref.load %arg7[%658, %c95] : memref<2x99xf32, #tpu.memory_space<smem>>
    %660 = vector.broadcast %659 : f32 to vector<16x16xf32>
    %661 = arith.mulf %657, %660 : vector<16x16xf32>
    %662 = arith.addf %655, %661 : vector<16x16xf32>
    %c0_138 = arith.constant 0 : index
    %c0_139 = arith.constant 0 : index
    %c5_140 = arith.constant 5 : index
    %663 = vector.load %arg9[%c0_138, %c0_139, %c5_140] : memref<2x22x22xf32, #tpu.memory_space<vmem>>, vector<2x22x16xf32>
    %664 = vector.extract_strided_slice %663 {offsets = [0, 0, 0], sizes = [1, 16, 16], strides = [1, 1, 1]} : vector<2x22x16xf32> to vector<1x16x16xf32>
    %665 = vector.shape_cast %664 : vector<1x16x16xf32> to vector<16x16xf32>
    %666 = arith.index_cast %arg1 : i32 to index
    %c5_141 = arith.constant 5 : index
    %667 = memref.load %arg7[%666, %c5_141] : memref<2x99xf32, #tpu.memory_space<smem>>
    %668 = vector.broadcast %667 : f32 to vector<16x16xf32>
    %669 = arith.mulf %665, %668 : vector<16x16xf32>
    %670 = arith.addf %662, %669 : vector<16x16xf32>
    %671 = vector.extract_strided_slice %663 {offsets = [0, 1, 0], sizes = [1, 16, 16], strides = [1, 1, 1]} : vector<2x22x16xf32> to vector<1x16x16xf32>
    %672 = vector.shape_cast %671 : vector<1x16x16xf32> to vector<16x16xf32>
    %673 = arith.index_cast %arg1 : i32 to index
    %c12_142 = arith.constant 12 : index
    %674 = memref.load %arg7[%673, %c12_142] : memref<2x99xf32, #tpu.memory_space<smem>>
    %675 = vector.broadcast %674 : f32 to vector<16x16xf32>
    %676 = arith.mulf %672, %675 : vector<16x16xf32>
    %677 = arith.addf %670, %676 : vector<16x16xf32>
    %678 = vector.extract_strided_slice %663 {offsets = [0, 2, 0], sizes = [1, 16, 16], strides = [1, 1, 1]} : vector<2x22x16xf32> to vector<1x16x16xf32>
    %679 = vector.shape_cast %678 : vector<1x16x16xf32> to vector<16x16xf32>
    %680 = arith.index_cast %arg1 : i32 to index
    %c19 = arith.constant 19 : index
    %681 = memref.load %arg7[%680, %c19] : memref<2x99xf32, #tpu.memory_space<smem>>
    %682 = vector.broadcast %681 : f32 to vector<16x16xf32>
    %683 = arith.mulf %679, %682 : vector<16x16xf32>
    %684 = arith.addf %677, %683 : vector<16x16xf32>
    %685 = vector.extract_strided_slice %663 {offsets = [0, 3, 0], sizes = [1, 16, 16], strides = [1, 1, 1]} : vector<2x22x16xf32> to vector<1x16x16xf32>
    %686 = vector.shape_cast %685 : vector<1x16x16xf32> to vector<16x16xf32>
    %687 = arith.index_cast %arg1 : i32 to index
    %c26 = arith.constant 26 : index
    %688 = memref.load %arg7[%687, %c26] : memref<2x99xf32, #tpu.memory_space<smem>>
    %689 = vector.broadcast %688 : f32 to vector<16x16xf32>
    %690 = arith.mulf %686, %689 : vector<16x16xf32>
    %691 = arith.addf %684, %690 : vector<16x16xf32>
    %692 = vector.extract_strided_slice %663 {offsets = [0, 4, 0], sizes = [1, 16, 16], strides = [1, 1, 1]} : vector<2x22x16xf32> to vector<1x16x16xf32>
    %693 = vector.shape_cast %692 : vector<1x16x16xf32> to vector<16x16xf32>
    %694 = arith.index_cast %arg1 : i32 to index
    %c33 = arith.constant 33 : index
    %695 = memref.load %arg7[%694, %c33] : memref<2x99xf32, #tpu.memory_space<smem>>
    %696 = vector.broadcast %695 : f32 to vector<16x16xf32>
    %697 = arith.mulf %693, %696 : vector<16x16xf32>
    %698 = arith.addf %691, %697 : vector<16x16xf32>
    %699 = vector.extract_strided_slice %663 {offsets = [0, 5, 0], sizes = [1, 16, 16], strides = [1, 1, 1]} : vector<2x22x16xf32> to vector<1x16x16xf32>
    %700 = vector.shape_cast %699 : vector<1x16x16xf32> to vector<16x16xf32>
    %701 = arith.index_cast %arg1 : i32 to index
    %c40 = arith.constant 40 : index
    %702 = memref.load %arg7[%701, %c40] : memref<2x99xf32, #tpu.memory_space<smem>>
    %703 = vector.broadcast %702 : f32 to vector<16x16xf32>
    %704 = arith.mulf %700, %703 : vector<16x16xf32>
    %705 = arith.addf %698, %704 : vector<16x16xf32>
    %706 = vector.extract_strided_slice %663 {offsets = [0, 6, 0], sizes = [1, 16, 16], strides = [1, 1, 1]} : vector<2x22x16xf32> to vector<1x16x16xf32>
    %707 = vector.shape_cast %706 : vector<1x16x16xf32> to vector<16x16xf32>
    %708 = arith.index_cast %arg1 : i32 to index
    %c47 = arith.constant 47 : index
    %709 = memref.load %arg7[%708, %c47] : memref<2x99xf32, #tpu.memory_space<smem>>
    %710 = vector.broadcast %709 : f32 to vector<16x16xf32>
    %711 = arith.mulf %707, %710 : vector<16x16xf32>
    %712 = arith.addf %705, %711 : vector<16x16xf32>
    %713 = vector.extract_strided_slice %663 {offsets = [1, 0, 0], sizes = [1, 16, 16], strides = [1, 1, 1]} : vector<2x22x16xf32> to vector<1x16x16xf32>
    %714 = vector.shape_cast %713 : vector<1x16x16xf32> to vector<16x16xf32>
    %715 = arith.index_cast %arg1 : i32 to index
    %c54 = arith.constant 54 : index
    %716 = memref.load %arg7[%715, %c54] : memref<2x99xf32, #tpu.memory_space<smem>>
    %717 = vector.broadcast %716 : f32 to vector<16x16xf32>
    %718 = arith.mulf %714, %717 : vector<16x16xf32>
    %719 = arith.addf %712, %718 : vector<16x16xf32>
    %720 = vector.extract_strided_slice %663 {offsets = [1, 1, 0], sizes = [1, 16, 16], strides = [1, 1, 1]} : vector<2x22x16xf32> to vector<1x16x16xf32>
    %721 = vector.shape_cast %720 : vector<1x16x16xf32> to vector<16x16xf32>
    %722 = arith.index_cast %arg1 : i32 to index
    %c61 = arith.constant 61 : index
    %723 = memref.load %arg7[%722, %c61] : memref<2x99xf32, #tpu.memory_space<smem>>
    %724 = vector.broadcast %723 : f32 to vector<16x16xf32>
    %725 = arith.mulf %721, %724 : vector<16x16xf32>
    %726 = arith.addf %719, %725 : vector<16x16xf32>
    %727 = vector.extract_strided_slice %663 {offsets = [1, 2, 0], sizes = [1, 16, 16], strides = [1, 1, 1]} : vector<2x22x16xf32> to vector<1x16x16xf32>
    %728 = vector.shape_cast %727 : vector<1x16x16xf32> to vector<16x16xf32>
    %729 = arith.index_cast %arg1 : i32 to index
    %c68 = arith.constant 68 : index
    %730 = memref.load %arg7[%729, %c68] : memref<2x99xf32, #tpu.memory_space<smem>>
    %731 = vector.broadcast %730 : f32 to vector<16x16xf32>
    %732 = arith.mulf %728, %731 : vector<16x16xf32>
    %733 = arith.addf %726, %732 : vector<16x16xf32>
    %734 = vector.extract_strided_slice %663 {offsets = [1, 3, 0], sizes = [1, 16, 16], strides = [1, 1, 1]} : vector<2x22x16xf32> to vector<1x16x16xf32>
    %735 = vector.shape_cast %734 : vector<1x16x16xf32> to vector<16x16xf32>
    %736 = arith.index_cast %arg1 : i32 to index
    %c75 = arith.constant 75 : index
    %737 = memref.load %arg7[%736, %c75] : memref<2x99xf32, #tpu.memory_space<smem>>
    %738 = vector.broadcast %737 : f32 to vector<16x16xf32>
    %739 = arith.mulf %735, %738 : vector<16x16xf32>
    %740 = arith.addf %733, %739 : vector<16x16xf32>
    %741 = vector.extract_strided_slice %663 {offsets = [1, 4, 0], sizes = [1, 16, 16], strides = [1, 1, 1]} : vector<2x22x16xf32> to vector<1x16x16xf32>
    %742 = vector.shape_cast %741 : vector<1x16x16xf32> to vector<16x16xf32>
    %743 = arith.index_cast %arg1 : i32 to index
    %c82 = arith.constant 82 : index
    %744 = memref.load %arg7[%743, %c82] : memref<2x99xf32, #tpu.memory_space<smem>>
    %745 = vector.broadcast %744 : f32 to vector<16x16xf32>
    %746 = arith.mulf %742, %745 : vector<16x16xf32>
    %747 = arith.addf %740, %746 : vector<16x16xf32>
    %748 = vector.extract_strided_slice %663 {offsets = [1, 5, 0], sizes = [1, 16, 16], strides = [1, 1, 1]} : vector<2x22x16xf32> to vector<1x16x16xf32>
    %749 = vector.shape_cast %748 : vector<1x16x16xf32> to vector<16x16xf32>
    %750 = arith.index_cast %arg1 : i32 to index
    %c89 = arith.constant 89 : index
    %751 = memref.load %arg7[%750, %c89] : memref<2x99xf32, #tpu.memory_space<smem>>
    %752 = vector.broadcast %751 : f32 to vector<16x16xf32>
    %753 = arith.mulf %749, %752 : vector<16x16xf32>
    %754 = arith.addf %747, %753 : vector<16x16xf32>
    %755 = vector.extract_strided_slice %663 {offsets = [1, 6, 0], sizes = [1, 16, 16], strides = [1, 1, 1]} : vector<2x22x16xf32> to vector<1x16x16xf32>
    %756 = vector.shape_cast %755 : vector<1x16x16xf32> to vector<16x16xf32>
    %757 = arith.index_cast %arg1 : i32 to index
    %c96 = arith.constant 96 : index
    %758 = memref.load %arg7[%757, %c96] : memref<2x99xf32, #tpu.memory_space<smem>>
    %759 = vector.broadcast %758 : f32 to vector<16x16xf32>
    %760 = arith.mulf %756, %759 : vector<16x16xf32>
    %761 = arith.addf %754, %760 : vector<16x16xf32>
    %c0_143 = arith.constant 0 : index
    %c0_144 = arith.constant 0 : index
    %c6_145 = arith.constant 6 : index
    %762 = vector.load %arg9[%c0_143, %c0_144, %c6_145] : memref<2x22x22xf32, #tpu.memory_space<vmem>>, vector<2x22x16xf32>
    %763 = vector.extract_strided_slice %762 {offsets = [0, 0, 0], sizes = [1, 16, 16], strides = [1, 1, 1]} : vector<2x22x16xf32> to vector<1x16x16xf32>
    %764 = vector.shape_cast %763 : vector<1x16x16xf32> to vector<16x16xf32>
    %765 = arith.index_cast %arg1 : i32 to index
    %c6_146 = arith.constant 6 : index
    %766 = memref.load %arg7[%765, %c6_146] : memref<2x99xf32, #tpu.memory_space<smem>>
    %767 = vector.broadcast %766 : f32 to vector<16x16xf32>
    %768 = arith.mulf %764, %767 : vector<16x16xf32>
    %769 = arith.addf %761, %768 : vector<16x16xf32>
    %770 = vector.extract_strided_slice %762 {offsets = [0, 1, 0], sizes = [1, 16, 16], strides = [1, 1, 1]} : vector<2x22x16xf32> to vector<1x16x16xf32>
    %771 = vector.shape_cast %770 : vector<1x16x16xf32> to vector<16x16xf32>
    %772 = arith.index_cast %arg1 : i32 to index
    %c13_147 = arith.constant 13 : index
    %773 = memref.load %arg7[%772, %c13_147] : memref<2x99xf32, #tpu.memory_space<smem>>
    %774 = vector.broadcast %773 : f32 to vector<16x16xf32>
    %775 = arith.mulf %771, %774 : vector<16x16xf32>
    %776 = arith.addf %769, %775 : vector<16x16xf32>
    %777 = vector.extract_strided_slice %762 {offsets = [0, 2, 0], sizes = [1, 16, 16], strides = [1, 1, 1]} : vector<2x22x16xf32> to vector<1x16x16xf32>
    %778 = vector.shape_cast %777 : vector<1x16x16xf32> to vector<16x16xf32>
    %779 = arith.index_cast %arg1 : i32 to index
    %c20 = arith.constant 20 : index
    %780 = memref.load %arg7[%779, %c20] : memref<2x99xf32, #tpu.memory_space<smem>>
    %781 = vector.broadcast %780 : f32 to vector<16x16xf32>
    %782 = arith.mulf %778, %781 : vector<16x16xf32>
    %783 = arith.addf %776, %782 : vector<16x16xf32>
    %784 = vector.extract_strided_slice %762 {offsets = [0, 3, 0], sizes = [1, 16, 16], strides = [1, 1, 1]} : vector<2x22x16xf32> to vector<1x16x16xf32>
    %785 = vector.shape_cast %784 : vector<1x16x16xf32> to vector<16x16xf32>
    %786 = arith.index_cast %arg1 : i32 to index
    %c27 = arith.constant 27 : index
    %787 = memref.load %arg7[%786, %c27] : memref<2x99xf32, #tpu.memory_space<smem>>
    %788 = vector.broadcast %787 : f32 to vector<16x16xf32>
    %789 = arith.mulf %785, %788 : vector<16x16xf32>
    %790 = arith.addf %783, %789 : vector<16x16xf32>
    %791 = vector.extract_strided_slice %762 {offsets = [0, 4, 0], sizes = [1, 16, 16], strides = [1, 1, 1]} : vector<2x22x16xf32> to vector<1x16x16xf32>
    %792 = vector.shape_cast %791 : vector<1x16x16xf32> to vector<16x16xf32>
    %793 = arith.index_cast %arg1 : i32 to index
    %c34 = arith.constant 34 : index
    %794 = memref.load %arg7[%793, %c34] : memref<2x99xf32, #tpu.memory_space<smem>>
    %795 = vector.broadcast %794 : f32 to vector<16x16xf32>
    %796 = arith.mulf %792, %795 : vector<16x16xf32>
    %797 = arith.addf %790, %796 : vector<16x16xf32>
    %798 = vector.extract_strided_slice %762 {offsets = [0, 5, 0], sizes = [1, 16, 16], strides = [1, 1, 1]} : vector<2x22x16xf32> to vector<1x16x16xf32>
    %799 = vector.shape_cast %798 : vector<1x16x16xf32> to vector<16x16xf32>
    %800 = arith.index_cast %arg1 : i32 to index
    %c41 = arith.constant 41 : index
    %801 = memref.load %arg7[%800, %c41] : memref<2x99xf32, #tpu.memory_space<smem>>
    %802 = vector.broadcast %801 : f32 to vector<16x16xf32>
    %803 = arith.mulf %799, %802 : vector<16x16xf32>
    %804 = arith.addf %797, %803 : vector<16x16xf32>
    %805 = vector.extract_strided_slice %762 {offsets = [0, 6, 0], sizes = [1, 16, 16], strides = [1, 1, 1]} : vector<2x22x16xf32> to vector<1x16x16xf32>
    %806 = vector.shape_cast %805 : vector<1x16x16xf32> to vector<16x16xf32>
    %807 = arith.index_cast %arg1 : i32 to index
    %c48 = arith.constant 48 : index
    %808 = memref.load %arg7[%807, %c48] : memref<2x99xf32, #tpu.memory_space<smem>>
    %809 = vector.broadcast %808 : f32 to vector<16x16xf32>
    %810 = arith.mulf %806, %809 : vector<16x16xf32>
    %811 = arith.addf %804, %810 : vector<16x16xf32>
    %812 = vector.extract_strided_slice %762 {offsets = [1, 0, 0], sizes = [1, 16, 16], strides = [1, 1, 1]} : vector<2x22x16xf32> to vector<1x16x16xf32>
    %813 = vector.shape_cast %812 : vector<1x16x16xf32> to vector<16x16xf32>
    %814 = arith.index_cast %arg1 : i32 to index
    %c55 = arith.constant 55 : index
    %815 = memref.load %arg7[%814, %c55] : memref<2x99xf32, #tpu.memory_space<smem>>
    %816 = vector.broadcast %815 : f32 to vector<16x16xf32>
    %817 = arith.mulf %813, %816 : vector<16x16xf32>
    %818 = arith.addf %811, %817 : vector<16x16xf32>
    %819 = vector.extract_strided_slice %762 {offsets = [1, 1, 0], sizes = [1, 16, 16], strides = [1, 1, 1]} : vector<2x22x16xf32> to vector<1x16x16xf32>
    %820 = vector.shape_cast %819 : vector<1x16x16xf32> to vector<16x16xf32>
    %821 = arith.index_cast %arg1 : i32 to index
    %c62 = arith.constant 62 : index
    %822 = memref.load %arg7[%821, %c62] : memref<2x99xf32, #tpu.memory_space<smem>>
    %823 = vector.broadcast %822 : f32 to vector<16x16xf32>
    %824 = arith.mulf %820, %823 : vector<16x16xf32>
    %825 = arith.addf %818, %824 : vector<16x16xf32>
    %826 = vector.extract_strided_slice %762 {offsets = [1, 2, 0], sizes = [1, 16, 16], strides = [1, 1, 1]} : vector<2x22x16xf32> to vector<1x16x16xf32>
    %827 = vector.shape_cast %826 : vector<1x16x16xf32> to vector<16x16xf32>
    %828 = arith.index_cast %arg1 : i32 to index
    %c69 = arith.constant 69 : index
    %829 = memref.load %arg7[%828, %c69] : memref<2x99xf32, #tpu.memory_space<smem>>
    %830 = vector.broadcast %829 : f32 to vector<16x16xf32>
    %831 = arith.mulf %827, %830 : vector<16x16xf32>
    %832 = arith.addf %825, %831 : vector<16x16xf32>
    %833 = vector.extract_strided_slice %762 {offsets = [1, 3, 0], sizes = [1, 16, 16], strides = [1, 1, 1]} : vector<2x22x16xf32> to vector<1x16x16xf32>
    %834 = vector.shape_cast %833 : vector<1x16x16xf32> to vector<16x16xf32>
    %835 = arith.index_cast %arg1 : i32 to index
    %c76 = arith.constant 76 : index
    %836 = memref.load %arg7[%835, %c76] : memref<2x99xf32, #tpu.memory_space<smem>>
    %837 = vector.broadcast %836 : f32 to vector<16x16xf32>
    %838 = arith.mulf %834, %837 : vector<16x16xf32>
    %839 = arith.addf %832, %838 : vector<16x16xf32>
    %840 = vector.extract_strided_slice %762 {offsets = [1, 4, 0], sizes = [1, 16, 16], strides = [1, 1, 1]} : vector<2x22x16xf32> to vector<1x16x16xf32>
    %841 = vector.shape_cast %840 : vector<1x16x16xf32> to vector<16x16xf32>
    %842 = arith.index_cast %arg1 : i32 to index
    %c83 = arith.constant 83 : index
    %843 = memref.load %arg7[%842, %c83] : memref<2x99xf32, #tpu.memory_space<smem>>
    %844 = vector.broadcast %843 : f32 to vector<16x16xf32>
    %845 = arith.mulf %841, %844 : vector<16x16xf32>
    %846 = arith.addf %839, %845 : vector<16x16xf32>
    %847 = vector.extract_strided_slice %762 {offsets = [1, 5, 0], sizes = [1, 16, 16], strides = [1, 1, 1]} : vector<2x22x16xf32> to vector<1x16x16xf32>
    %848 = vector.shape_cast %847 : vector<1x16x16xf32> to vector<16x16xf32>
    %849 = arith.index_cast %arg1 : i32 to index
    %c90 = arith.constant 90 : index
    %850 = memref.load %arg7[%849, %c90] : memref<2x99xf32, #tpu.memory_space<smem>>
    %851 = vector.broadcast %850 : f32 to vector<16x16xf32>
    %852 = arith.mulf %848, %851 : vector<16x16xf32>
    %853 = arith.addf %846, %852 : vector<16x16xf32>
    %854 = vector.extract_strided_slice %762 {offsets = [1, 6, 0], sizes = [1, 16, 16], strides = [1, 1, 1]} : vector<2x22x16xf32> to vector<1x16x16xf32>
    %855 = vector.shape_cast %854 : vector<1x16x16xf32> to vector<16x16xf32>
    %856 = arith.index_cast %arg1 : i32 to index
    %c97 = arith.constant 97 : index
    %857 = memref.load %arg7[%856, %c97] : memref<2x99xf32, #tpu.memory_space<smem>>
    %858 = vector.broadcast %857 : f32 to vector<16x16xf32>
    %859 = arith.mulf %855, %858 : vector<16x16xf32>
    %860 = arith.addf %853, %859 : vector<16x16xf32>
    %861 = arith.index_cast %arg1 : i32 to index
    %c98 = arith.constant 98 : index
    %862 = memref.load %arg7[%861, %c98] : memref<2x99xf32, #tpu.memory_space<smem>>
    %863 = vector.broadcast %862 : f32 to vector<16x16xf32>
    %864 = arith.addf %860, %863 : vector<16x16xf32>
    %865 = arith.negf %864 : vector<16x16xf32>
    %866 = math.exp %865 : vector<16x16xf32>
    %cst_148 = arith.constant 1.000000e+00 : f32
    %867 = vector.broadcast %cst_148 : f32 to vector<16x16xf32>
    %868 = arith.addf %867, %866 : vector<16x16xf32>
    %869 = arith.divf %867, %868 : vector<16x16xf32>
    %870 = vector.extract_strided_slice %869 {offsets = [0, 0], sizes = [1, 16], strides = [1, 1]} : vector<16x16xf32> to vector<1x16xf32>
    %c0_149 = arith.constant 0 : index
    %c0_150 = arith.constant 0 : index
    %871 = vector.load %arg10[%c0_149, %c0_150] : memref<1x256xf32, #tpu.memory_space<vmem>>, vector<1x16xf32>
    tpu.vector_store %arg10[%c0_149, %c0_150], %870 {strides = array<i32>} : memref<1x256xf32, #tpu.memory_space<vmem>>, vector<1x16xf32>,
    %872 = vector.extract_strided_slice %869 {offsets = [1, 0], sizes = [1, 16], strides = [1, 1]} : vector<16x16xf32> to vector<1x16xf32>
    %c0_151 = arith.constant 0 : index
    %c16_152 = arith.constant 16 : index
    %873 = vector.load %arg10[%c0_151, %c16_152] : memref<1x256xf32, #tpu.memory_space<vmem>>, vector<1x16xf32>
    tpu.vector_store %arg10[%c0_151, %c16_152], %872 {strides = array<i32>} : memref<1x256xf32, #tpu.memory_space<vmem>>, vector<1x16xf32>,
    %874 = vector.extract_strided_slice %869 {offsets = [2, 0], sizes = [1, 16], strides = [1, 1]} : vector<16x16xf32> to vector<1x16xf32>
    %c0_153 = arith.constant 0 : index
    %c32_154 = arith.constant 32 : index
    %875 = vector.load %arg10[%c0_153, %c32_154] : memref<1x256xf32, #tpu.memory_space<vmem>>, vector<1x16xf32>
    tpu.vector_store %arg10[%c0_153, %c32_154], %874 {strides = array<i32>} : memref<1x256xf32, #tpu.memory_space<vmem>>, vector<1x16xf32>,
    %876 = vector.extract_strided_slice %869 {offsets = [3, 0], sizes = [1, 16], strides = [1, 1]} : vector<16x16xf32> to vector<1x16xf32>
    %c0_155 = arith.constant 0 : index
    %c48_156 = arith.constant 48 : index
    %877 = vector.load %arg10[%c0_155, %c48_156] : memref<1x256xf32, #tpu.memory_space<vmem>>, vector<1x16xf32>
    tpu.vector_store %arg10[%c0_155, %c48_156], %876 {strides = array<i32>} : memref<1x256xf32, #tpu.memory_space<vmem>>, vector<1x16xf32>,
    %878 = vector.extract_strided_slice %869 {offsets = [4, 0], sizes = [1, 16], strides = [1, 1]} : vector<16x16xf32> to vector<1x16xf32>
    %c0_157 = arith.constant 0 : index
    %c64_158 = arith.constant 64 : index
    %879 = vector.load %arg10[%c0_157, %c64_158] : memref<1x256xf32, #tpu.memory_space<vmem>>, vector<1x16xf32>
    tpu.vector_store %arg10[%c0_157, %c64_158], %878 {strides = array<i32>} : memref<1x256xf32, #tpu.memory_space<vmem>>, vector<1x16xf32>,
    %880 = vector.extract_strided_slice %869 {offsets = [5, 0], sizes = [1, 16], strides = [1, 1]} : vector<16x16xf32> to vector<1x16xf32>
    %c0_159 = arith.constant 0 : index
    %c80_160 = arith.constant 80 : index
    %881 = vector.load %arg10[%c0_159, %c80_160] : memref<1x256xf32, #tpu.memory_space<vmem>>, vector<1x16xf32>
    tpu.vector_store %arg10[%c0_159, %c80_160], %880 {strides = array<i32>} : memref<1x256xf32, #tpu.memory_space<vmem>>, vector<1x16xf32>,
    %882 = vector.extract_strided_slice %869 {offsets = [6, 0], sizes = [1, 16], strides = [1, 1]} : vector<16x16xf32> to vector<1x16xf32>
    %c0_161 = arith.constant 0 : index
    %c96_162 = arith.constant 96 : index
    %883 = vector.load %arg10[%c0_161, %c96_162] : memref<1x256xf32, #tpu.memory_space<vmem>>, vector<1x16xf32>
    tpu.vector_store %arg10[%c0_161, %c96_162], %882 {strides = array<i32>} : memref<1x256xf32, #tpu.memory_space<vmem>>, vector<1x16xf32>,
    %884 = vector.extract_strided_slice %869 {offsets = [7, 0], sizes = [1, 16], strides = [1, 1]} : vector<16x16xf32> to vector<1x16xf32>
    %c0_163 = arith.constant 0 : index
    %c112 = arith.constant 112 : index
    %885 = vector.load %arg10[%c0_163, %c112] : memref<1x256xf32, #tpu.memory_space<vmem>>, vector<1x16xf32>
    tpu.vector_store %arg10[%c0_163, %c112], %884 {strides = array<i32>} : memref<1x256xf32, #tpu.memory_space<vmem>>, vector<1x16xf32>,
    %886 = vector.extract_strided_slice %869 {offsets = [8, 0], sizes = [1, 16], strides = [1, 1]} : vector<16x16xf32> to vector<1x16xf32>
    %c0_164 = arith.constant 0 : index
    %c128 = arith.constant 128 : index
    %887 = vector.load %arg10[%c0_164, %c128] : memref<1x256xf32, #tpu.memory_space<vmem>>, vector<1x16xf32>
    tpu.vector_store %arg10[%c0_164, %c128], %886 {strides = array<i32>} : memref<1x256xf32, #tpu.memory_space<vmem>>, vector<1x16xf32>,
    %888 = vector.extract_strided_slice %869 {offsets = [9, 0], sizes = [1, 16], strides = [1, 1]} : vector<16x16xf32> to vector<1x16xf32>
    %c0_165 = arith.constant 0 : index
    %c144 = arith.constant 144 : index
    %889 = vector.load %arg10[%c0_165, %c144] : memref<1x256xf32, #tpu.memory_space<vmem>>, vector<1x16xf32>
    tpu.vector_store %arg10[%c0_165, %c144], %888 {strides = array<i32>} : memref<1x256xf32, #tpu.memory_space<vmem>>, vector<1x16xf32>,
    %890 = vector.extract_strided_slice %869 {offsets = [10, 0], sizes = [1, 16], strides = [1, 1]} : vector<16x16xf32> to vector<1x16xf32>
    %c0_166 = arith.constant 0 : index
    %c160 = arith.constant 160 : index
    %891 = vector.load %arg10[%c0_166, %c160] : memref<1x256xf32, #tpu.memory_space<vmem>>, vector<1x16xf32>
    tpu.vector_store %arg10[%c0_166, %c160], %890 {strides = array<i32>} : memref<1x256xf32, #tpu.memory_space<vmem>>, vector<1x16xf32>,
    %892 = vector.extract_strided_slice %869 {offsets = [11, 0], sizes = [1, 16], strides = [1, 1]} : vector<16x16xf32> to vector<1x16xf32>
    %c0_167 = arith.constant 0 : index
    %c176 = arith.constant 176 : index
    %893 = vector.load %arg10[%c0_167, %c176] : memref<1x256xf32, #tpu.memory_space<vmem>>, vector<1x16xf32>
    tpu.vector_store %arg10[%c0_167, %c176], %892 {strides = array<i32>} : memref<1x256xf32, #tpu.memory_space<vmem>>, vector<1x16xf32>,
    %894 = vector.extract_strided_slice %869 {offsets = [12, 0], sizes = [1, 16], strides = [1, 1]} : vector<16x16xf32> to vector<1x16xf32>
    %c0_168 = arith.constant 0 : index
    %c192 = arith.constant 192 : index
    %895 = vector.load %arg10[%c0_168, %c192] : memref<1x256xf32, #tpu.memory_space<vmem>>, vector<1x16xf32>
    tpu.vector_store %arg10[%c0_168, %c192], %894 {strides = array<i32>} : memref<1x256xf32, #tpu.memory_space<vmem>>, vector<1x16xf32>,
    %896 = vector.extract_strided_slice %869 {offsets = [13, 0], sizes = [1, 16], strides = [1, 1]} : vector<16x16xf32> to vector<1x16xf32>
    %c0_169 = arith.constant 0 : index
    %c208 = arith.constant 208 : index
    %897 = vector.load %arg10[%c0_169, %c208] : memref<1x256xf32, #tpu.memory_space<vmem>>, vector<1x16xf32>
    tpu.vector_store %arg10[%c0_169, %c208], %896 {strides = array<i32>} : memref<1x256xf32, #tpu.memory_space<vmem>>, vector<1x16xf32>,
    %898 = vector.extract_strided_slice %869 {offsets = [14, 0], sizes = [1, 16], strides = [1, 1]} : vector<16x16xf32> to vector<1x16xf32>
    %c0_170 = arith.constant 0 : index
    %c224 = arith.constant 224 : index
    %899 = vector.load %arg10[%c0_170, %c224] : memref<1x256xf32, #tpu.memory_space<vmem>>, vector<1x16xf32>
    tpu.vector_store %arg10[%c0_170, %c224], %898 {strides = array<i32>} : memref<1x256xf32, #tpu.memory_space<vmem>>, vector<1x16xf32>,
    %900 = vector.extract_strided_slice %869 {offsets = [15, 0], sizes = [1, 16], strides = [1, 1]} : vector<16x16xf32> to vector<1x16xf32>
    %c0_171 = arith.constant 0 : index
    %c240 = arith.constant 240 : index
    %901 = vector.load %arg10[%c0_171, %c240] : memref<1x256xf32, #tpu.memory_space<vmem>>, vector<1x16xf32>
    tpu.vector_store %arg10[%c0_171, %c240], %900 {strides = array<i32>} : memref<1x256xf32, #tpu.memory_space<vmem>>, vector<1x16xf32>,
    %c0_172 = arith.constant 0 : index
    %c0_173 = arith.constant 0 : index
    %c0_174 = arith.constant 0 : index
    %c0_175 = arith.constant 0 : index
    %902 = vector.load %arg2[%c0_172, %c0_173, %c0_174, %c0_175] : memref<1x1x32x256xf32, #tpu.memory_space<vmem>>, vector<1x1x32x256xf32>
    %903 = vector.shape_cast %902 : vector<1x1x32x256xf32> to vector<1x32x256xf32>
    %904 = vector.shape_cast %29 : vector<1x32xf32> to vector<1x32x1xf32>
    %905 = vector.broadcast %904 : vector<1x32x1xf32> to vector<1x32x256xf32>
    %906 = arith.mulf %903, %905 : vector<1x32x256xf32>
    %c0_176 = arith.constant 0 : index
    %c0_177 = arith.constant 0 : index
    %907 = vector.load %arg10[%c0_176, %c0_177] : memref<1x256xf32, #tpu.memory_space<vmem>>, vector<1x256xf32>
    %908 = vector.shape_cast %907 : vector<1x256xf32> to vector<1x1x256xf32>
    %909 = vector.broadcast %908 : vector<1x1x256xf32> to vector<1x32x256xf32>
    %910 = arith.mulf %906, %909 : vector<1x32x256xf32>
    %c0_178 = arith.constant 0 : index
    %c0_179 = arith.constant 0 : index
    %c0_180 = arith.constant 0 : index
    %c0_181 = arith.constant 0 : index
    %911 = vector.load %arg8[%c0_178, %c0_179, %c0_180, %c0_181] : memref<1x1x32x256xf32, #tpu.memory_space<vmem>>, vector<1x1x32x256xf32>
    %912 = vector.shape_cast %911 : vector<1x1x32x256xf32> to vector<1x32x256xf32>
    %913 = vector.shape_cast %910 : vector<1x32x256xf32> to vector<1x1x32x256xf32>
    tpu.vector_store %arg8[%c0_178, %c0_179, %c0_180, %c0_181], %913 {strides = array<i32>} : memref<1x1x32x256xf32, #tpu.memory_space<vmem>>, vector<1x1x32x256xf32>,
    return
  }
  func.func @transform_0(%arg0: i32, %arg1: i32) -> (i32, i32, i32, i32) {
    %c0_i32 = arith.constant 0 : i32
    %c0_i32_0 = arith.constant 0 : i32
    %c0_i32_1 = arith.constant 0 : i32
    return %arg1, %arg0, %c0_i32, %c0_i32_0 : i32, i32, i32, i32
  }
  func.func @transform_1(%arg0: i32, %arg1: i32) -> (i32, i32, i32) {
    %c0_i32 = arith.constant 0 : i32
    %c0_i32_0 = arith.constant 0 : i32
    %c0_i32_1 = arith.constant 0 : i32
    return %arg1, %c0_i32, %c0_i32_0 : i32, i32, i32
  }
  func.func @transform_2(%arg0: i32, %arg1: i32) -> (i32, i32, i32) {
    %c0_i32 = arith.constant 0 : i32
    %c0_i32_0 = arith.constant 0 : i32
    %c0_i32_1 = arith.constant 0 : i32
    return %arg1, %c0_i32, %c0_i32_0 : i32, i32, i32
  }
  func.func @transform_3(%arg0: i32, %arg1: i32) -> (i32, i32, i32) {
    %c0_i32 = arith.constant 0 : i32
    %c0_i32_0 = arith.constant 0 : i32
    %c0_i32_1 = arith.constant 0 : i32
    return %arg1, %c0_i32, %c0_i32_0 : i32, i32, i32
  }
  func.func @transform_4(%arg0: i32, %arg1: i32) -> (i32, i32, i32) {
    %c0_i32 = arith.constant 0 : i32
    %c0_i32_0 = arith.constant 0 : i32
    %c0_i32_1 = arith.constant 0 : i32
    return %arg1, %c0_i32, %c0_i32_0 : i32, i32, i32
  }
  func.func @transform_5(%arg0: i32, %arg1: i32) -> (i32, i32) {
    %c0_i32 = arith.constant 0 : i32
    %c0_i32_0 = arith.constant 0 : i32
    %c0_i32_1 = arith.constant 0 : i32
    return %c0_i32, %c0_i32_0 : i32, i32
  }
  func.func @transform_6(%arg0: i32, %arg1: i32) -> (i32, i32, i32, i32) {
    %c0_i32 = arith.constant 0 : i32
    %c0_i32_0 = arith.constant 0 : i32
    %c0_i32_1 = arith.constant 0 : i32
    return %arg1, %arg0, %c0_i32, %c0_i32_0 : i32, i32, i32, i32
  }
}

</mosaic_0001>

<llo_original>
// kernel: ccbam_forward.1
$region0: #{ccbam_forward.1}
  #allocation0 [shape = 'u32[]', space=smem, size = 0x4, offset = 0x4, fixed_abs, tag = 'smem constant byte address 0x4 - core index']
  #allocation1 [shape = 'u32[72,128]{1,0:T(1,128)}', space=vmem, size = 0x9000, scoped, tag = 'internal scratch']
  #allocation2 [shape = 'f32[2,22,22]{2,1,0:T(8,128)}', space=vmem, size = 0x6000, scoped, tag = 'scratch operand']
  #allocation3 [shape = 'f32[1,256]{1,0:T(1,128)}', space=vmem, size = 0x400, scoped, tag = 'scratch operand']
  %s0 = inlined_call_operand.vmem [shape: f32[2,2,32,256], index: 0, kind: input, shape index: {}]
  %s1 = inlined_call_operand.vmem [shape: f32[2,32,2], index: 1, kind: input, shape index: {}]
  %s2 = inlined_call_operand.vmem [shape: f32[2,1,2], index: 2, kind: input, shape index: {}]
  %s3 = inlined_call_operand.vmem [shape: f32[2,2,32], index: 3, kind: input, shape index: {}]
  %s4 = inlined_call_operand.vmem [shape: f32[2,1,32], index: 4, kind: input, shape index: {}]
  %s5 = inlined_call_operand.vmem [shape: f32[2,99], index: 5, kind: input, shape index: {}]
  %s6 = inlined_call_operand.vmem [shape: f32[2,2,32,256], index: 6, kind: output, shape index: {}]
  %s7 = sld [smem:[#allocation0]]
  $region61: #{ccbam_forward.1} parent=0
    _
  %s9 = ssub.s32 1, %s7
  %s10 = scalar_select 0, %s9, %s7
  $region1: #{ccbam_forward.1} parent=0
    #allocation4 [shape = 'u8[1024]{0}', space=smem, size = 0x400, scoped, tag = 'input window, operand 5, single buffered']
    #allocation5 [shape = 's32[2]{0}', space=sflag, size = 0x8, scoped, tag = 'scoped memory for ccbam_forward.1']
    %11 = vsyncpa [#allocation5], 0
    loop: start=0, step=1, limit=6
    $region2: #{ccbam_forward.1} parent=1 // loop_pre_header
      _
    $region3: #{ccbam_forward.1} parent=1 // loop_header
      %s13 = sphi 0, %s17
      %p14 = scmp.ge.s32.totalorder %s13, 6
      %s20 = sphi 0, %s32
      %s21 = sphi 0, %s28
      %s22 = sphi 0, %s20
      %s23 = sphi 0, %s21
      %s24 = sphi 0, %s22
      %s25 = sphi 0, %s23
      %s37 = sphi 0, %s39
      %s40 = sphi 0, %s37
      %s41 = sphi 0, %s40
      %s57 = sphi 0, %s41
      %s63 = sphi 0, %s65
      %s66 = sphi 0, %s63
      %s67 = sphi 0, %s66
      %s83 = sphi 0, %s67
      %s89 = sphi 0, %s91
      %s92 = sphi 0, %s89
      %s93 = sphi 0, %s92
      %s109 = sphi 0, %s93
      %s115 = sphi 0, %s117
      %s118 = sphi 0, %s115
      %s119 = sphi 0, %s118
      %s135 = sphi 0, %s119
      %s141 = sphi 0, %s143
      %s144 = sphi 0, %s141
      %s145 = sphi 0, %s144
      %s161 = sphi 0, %s145
      %s165 = sphi 0, %s165
      %s167 = sphi 0, %s165
      %s168 = sphi 0, %s167
      %s182 = sphi 0, %s168
      %s190 = sphi 0, %s192
      %s193 = sphi 0, %s190
      %s194 = sphi 0, %s193
      %s210 = sphi 0, %s194
    $region4: #{ccbam_forward.1} parent=1 // loop_header_branch
      %16 = sbr.rel (%p14) target = $region8
    $region5: #{ccbam_forward.1} parent=1 // loop_body
      %s18 = ssub.s32 %s13, 1
      %s19 = ssub.s32 %s13, 2
      %s26 = sadd.s32 1, %s21
      %p27 = scmp.ge.s32.totalorder %s26, 2
      %s28 = scalar_select %p27, 0, %s26
      %s29 = sadd.s32 1, %s20
      %s30 = scalar_select %p27, %s29, %s20
      %p31 = scmp.ge.s32.totalorder %s30, 2
      %s32 = scalar_select %p31, 0, %s30
      %s33 = ssub.s32 %s21, %s28
      %s34 = ssub.s32 %s20, %s32
      %s35 = sor.u32 %s33, %s34
      %p36 = scmp.eq.s32.totalorder %s35, 0
      %s38 = sadd.s32 %s37, 1
      %s39 = scalar_select %p36, %s37, %s38
      %p42 = pneg %p36
      %p43 = scmp.eq.s32.totalorder %s13, 3
      %p44 = por %p42, %p43
      %p45 = scmp.ne.s32.totalorder %s37, %s40
      %p46 = scmp.eq.s32.totalorder %s13, 0
      %p47 = por %p45, %p46
      %p48 = scmp.ne.s32.totalorder %s37, %s40
      %p49 = scmp.eq.s32.totalorder %s18, 3
      %p50 = por %p48, %p49
      %p51 = scmp.ne.s32.totalorder %s40, %s41
      %p52 = scmp.eq.s32.totalorder %s18, 0
      %p53 = por %p51, %p52
      %p54 = scmp.ne.s32.totalorder %s40, %s41
      %p55 = scmp.eq.s32.totalorder %s19, 3
      %p56 = por %p54, %p55
      %p58 = scmp.ne.s32.totalorder %s41, %s57
      %p59 = scmp.eq.s32.totalorder %s19, 0
      %p60 = por %p58, %p59
      %s61 = ssub.s32 %s21, %s28
      %p62 = scmp.eq.s32.totalorder %s61, 0
      %s64 = sadd.s32 %s63, 1
      %s65 = scalar_select %p62, %s63, %s64
      %p68 = pneg %p62
      %p69 = scmp.eq.s32.totalorder %s13, 3
      %p70 = por %p68, %p69
      %p71 = scmp.ne.s32.totalorder %s63, %s66
      %p72 = scmp.eq.s32.totalorder %s13, 0
      %p73 = por %p71, %p72
      %p74 = scmp.ne.s32.totalorder %s63, %s66
      %p75 = scmp.eq.s32.totalorder %s18, 3
      %p76 = por %p74, %p75
      %p77 = scmp.ne.s32.totalorder %s66, %s67
      %p78 = scmp.eq.s32.totalorder %s18, 0
      %p79 = por %p77, %p78
      %p80 = scmp.ne.s32.totalorder %s66, %s67
      %p81 = scmp.eq.s32.totalorder %s19, 3
      %p82 = por %p80, %p81
      %p84 = scmp.ne.s32.totalorder %s67, %s83
      %p85 = scmp.eq.s32.totalorder %s19, 0
      %p86 = por %p84, %p85
      %s87 = ssub.s32 %s21, %s28
      %p88 = scmp.eq.s32.totalorder %s87, 0
      %s90 = sadd.s32 %s89, 1
      %s91 = scalar_select %p88, %s89, %s90
      %p94 = pneg %p88
      %p95 = scmp.eq.s32.totalorder %s13, 3
      %p96 = por %p94, %p95
      %p97 = scmp.ne.s32.totalorder %s89, %s92
      %p98 = scmp.eq.s32.totalorder %s13, 0
      %p99 = por %p97, %p98
      %p100 = scmp.ne.s32.totalorder %s89, %s92
      %p101 = scmp.eq.s32.totalorder %s18, 3
      %p102 = por %p100, %p101
      %p103 = scmp.ne.s32.totalorder %s92, %s93
      %p104 = scmp.eq.s32.totalorder %s18, 0
      %p105 = por %p103, %p104
      %p106 = scmp.ne.s32.totalorder %s92, %s93
      %p107 = scmp.eq.s32.totalorder %s19, 3
      %p108 = por %p106, %p107
      %p110 = scmp.ne.s32.totalorder %s93, %s109
      %p111 = scmp.eq.s32.totalorder %s19, 0
      %p112 = por %p110, %p111
      %s113 = ssub.s32 %s21, %s28
      %p114 = scmp.eq.s32.totalorder %s113, 0
      %s116 = sadd.s32 %s115, 1
      %s117 = scalar_select %p114, %s115, %s116
      %p120 = pneg %p114
      %p121 = scmp.eq.s32.totalorder %s13, 3
      %p122 = por %p120, %p121
      %p123 = scmp.ne.s32.totalorder %s115, %s118
      %p124 = scmp.eq.s32.totalorder %s13, 0
      %p125 = por %p123, %p124
      %p126 = scmp.ne.s32.totalorder %s115, %s118
      %p127 = scmp.eq.s32.totalorder %s18, 3
      %p128 = por %p126, %p127
      %p129 = scmp.ne.s32.totalorder %s118, %s119
      %p130 = scmp.eq.s32.totalorder %s18, 0
      %p131 = por %p129, %p130
      %p132 = scmp.ne.s32.totalorder %s118, %s119
      %p133 = scmp.eq.s32.totalorder %s19, 3
      %p134 = por %p132, %p133
      %p136 = scmp.ne.s32.totalorder %s119, %s135
      %p137 = scmp.eq.s32.totalorder %s19, 0
      %p138 = por %p136, %p137
      %s139 = ssub.s32 %s21, %s28
      %p140 = scmp.eq.s32.totalorder %s139, 0
      %s142 = sadd.s32 %s141, 1
      %s143 = scalar_select %p140, %s141, %s142
      %p146 = pneg %p140
      %p147 = scmp.eq.s32.totalorder %s13, 3
      %p148 = por %p146, %p147
      %p149 = scmp.ne.s32.totalorder %s141, %s144
      %p150 = scmp.eq.s32.totalorder %s13, 0
      %p151 = por %p149, %p150
      %p152 = scmp.ne.s32.totalorder %s141, %s144
      %p153 = scmp.eq.s32.totalorder %s18, 3
      %p154 = por %p152, %p153
      %p155 = scmp.ne.s32.totalorder %s144, %s145
      %p156 = scmp.eq.s32.totalorder %s18, 0
      %p157 = por %p155, %p156
      %p158 = scmp.ne.s32.totalorder %s144, %s145
      %p159 = scmp.eq.s32.totalorder %s19, 3
      %p160 = por %p158, %p159
      %p162 = scmp.ne.s32.totalorder %s145, %s161
      %p163 = scmp.eq.s32.totalorder %s19, 0
      %p164 = por %p162, %p163
      %s166 = sadd.s32 %s165, 1
      %p169 = scmp.eq.s32.totalorder %s13, 3
      %p170 = scmp.ne.s32.totalorder %s165, %s167
      %p171 = scmp.eq.s32.totalorder %s13, 0
      %p172 = por %p170, %p171
      %p173 = scmp.ne.s32.totalorder %s165, %s167
      %p174 = scmp.eq.s32.totalorder %s18, 3
      %p175 = por %p173, %p174
      %p176 = scmp.ne.s32.totalorder %s167, %s168
      %p177 = scmp.eq.s32.totalorder %s18, 0
      %p178 = por %p176, %p177
      %p179 = scmp.ne.s32.totalorder %s167, %s168
      %p180 = scmp.eq.s32.totalorder %s19, 3
      %p181 = por %p179, %p180
      %p183 = scmp.ne.s32.totalorder %s168, %s182
      %p184 = scmp.eq.s32.totalorder %s19, 0
      %p185 = por %p183, %p184
      %s186 = ssub.s32 %s21, %s28
      %s187 = ssub.s32 %s20, %s32
      %s188 = sor.u32 %s186, %s187
      %p189 = scmp.eq.s32.totalorder %s188, 0
      %s191 = sadd.s32 %s190, 1
      %s192 = scalar_select %p189, %s190, %s191
      %p195 = pneg %p189
      %p196 = scmp.eq.s32.totalorder %s13, 3
      %p197 = por %p195, %p196
      %p198 = scmp.ne.s32.totalorder %s190, %s193
      %p199 = scmp.eq.s32.totalorder %s13, 0
      %p200 = por %p198, %p199
      %p201 = scmp.ne.s32.totalorder %s190, %s193
      %p202 = scmp.eq.s32.totalorder %s18, 3
      %p203 = por %p201, %p202
      %p204 = scmp.ne.s32.totalorder %s193, %s194
      %p205 = scmp.eq.s32.totalorder %s18, 0
      %p206 = por %p204, %p205
      %p207 = scmp.ne.s32.totalorder %s193, %s194
      %p208 = scmp.eq.s32.totalorder %s19, 3
      %p209 = por %p207, %p208
      %p211 = scmp.ne.s32.totalorder %s194, %s210
      %p212 = scmp.eq.s32.totalorder %s19, 0
      %p213 = por %p211, %p212
      %p214 = scmp.le.s32.totalorder 1, %s13
      %p215 = scmp.lt.s32.totalorder %s13, 5
      %p216 = pnand %p214, %p215
      %p217 = pneg %p216
      // Predicated region
      $region9: #{ccbam_forward.1} parent=5 // pred_check
        _
      $region10: #{ccbam_forward.1} parent=5 // pred_check_branch
        %219 = sbr.rel (%p216) target = $region12
      $region11: #{ccbam_forward.1} parent=5 // pred_region
        %s220 = ssub.s32 %s13, 1
        // Predicated region
        $region13: #{ccbam_forward.1} parent=11 // pred_check
          %p221 = pneg %p178
        $region14: #{ccbam_forward.1} parent=11 // pred_check_branch
          %223 = sbr.rel (%p221) target = $region16
        $region15: #{ccbam_forward.1} parent=11 // pred_region
          %225 = vsyncadd [#allocation5], 0
          %s227 = sshll.u32 %s5, 4
          %s228 = int_to_ptr.vmem [resolvable:$true] %s227
          %230 = dma.vmem_to_smem %s228, 32, [#allocation4], [#allocation5]
        $region16: #{ccbam_forward.1} parent=11 // pred_fallthru
          _
      $region12: #{ccbam_forward.1} parent=5 // pred_fallthru
        _
      %p231 = scmp.lt.s32.totalorder %s13, 4
      // Predicated region
      $region17: #{ccbam_forward.1} parent=5 // pred_check
        %p232 = pneg %p231
      $region18: #{ccbam_forward.1} parent=5 // pred_check_branch
        %234 = sbr.rel (%p232) target = $region20
      $region19: #{ccbam_forward.1} parent=5 // pred_region
        // Predicated region
        $region21: #{ccbam_forward.1} parent=19 // pred_check
          %p235 = pneg %p47
        $region22: #{ccbam_forward.1} parent=19 // pred_check_branch
          %237 = sbr.rel (%p235) target = $region24
        $region23: #{ccbam_forward.1} parent=19 // pred_region
          %p238 = scmp.lt.s32.totalorder %s21, 1
          %s239 = scalar_select %p238, %s21, 1
          %p240 = scmp.lt.s32.totalorder %s20, 1
          %s241 = scalar_select %p240, %s20, 1
          %s242 = smul.addr %s241, 8
          %s243 = smul.addr %s239, 16
          %s244 = sadd.s32 %s242, %s243
          %s245 = smul.addr %s244, 8
          %s246 = scalar_lea.vmem %s0, %s245
        $region24: #{ccbam_forward.1} parent=19 // pred_fallthru
          _
        // Predicated region
        $region25: #{ccbam_forward.1} parent=19 // pred_check
          %p247 = pneg %p73
        $region26: #{ccbam_forward.1} parent=19 // pred_check_branch
          %249 = sbr.rel (%p247) target = $region28
        $region27: #{ccbam_forward.1} parent=19 // pred_region
          %p250 = scmp.lt.s32.totalorder %s21, 1
          %s251 = scalar_select %p250, %s21, 1
          %s252 = smul.addr %s251, 4
          %s253 = smul.addr %s252, 8
          %s254 = scalar_lea.vmem %s1, %s253
        $region28: #{ccbam_forward.1} parent=19 // pred_fallthru
          _
        // Predicated region
        $region29: #{ccbam_forward.1} parent=19 // pred_check
          %p255 = pneg %p99
        $region30: #{ccbam_forward.1} parent=19 // pred_check_branch
          %257 = sbr.rel (%p255) target = $region32
        $region31: #{ccbam_forward.1} parent=19 // pred_region
          %p258 = scmp.lt.s32.totalorder %s21, 1
          %s259 = scalar_select %p258, %s21, 1
          %s260 = scalar_lea.vmem %s2, %s259
        $region32: #{ccbam_forward.1} parent=19 // pred_fallthru
          _
        // Predicated region
        $region33: #{ccbam_forward.1} parent=19 // pred_check
          %p261 = pneg %p125
        $region34: #{ccbam_forward.1} parent=19 // pred_check_branch
          %263 = sbr.rel (%p261) target = $region36
        $region35: #{ccbam_forward.1} parent=19 // pred_region
          %p264 = scmp.lt.s32.totalorder %s21, 1
          %s265 = scalar_select %p264, %s21, 1
          %s266 = smul.addr %s265, 2
          %s267 = scalar_lea.vmem %s3, %s266
        $region36: #{ccbam_forward.1} parent=19 // pred_fallthru
          _
        // Predicated region
        $region37: #{ccbam_forward.1} parent=19 // pred_check
          %p268 = pneg %p151
        $region38: #{ccbam_forward.1} parent=19 // pred_check_branch
          %270 = sbr.rel (%p268) target = $region40
        $region39: #{ccbam_forward.1} parent=19 // pred_region
          %p271 = scmp.lt.s32.totalorder %s21, 1
          %s272 = scalar_select %p271, %s21, 1
          %s273 = scalar_lea.vmem %s4, %s272
        $region40: #{ccbam_forward.1} parent=19 // pred_fallthru
          _
      $region20: #{ccbam_forward.1} parent=5 // pred_fallthru
        _
      %p274 = scmp.le.s32.totalorder 1, %s13
      %p275 = scmp.lt.s32.totalorder %s13, 5
      %p276 = pnand %p274, %p275
      %p277 = pneg %p276
      // Predicated region
      $region41: #{ccbam_forward.1} parent=5 // pred_check
        _
      $region42: #{ccbam_forward.1} parent=5 // pred_check_branch
        %279 = sbr.rel (%p276) target = $region44
      $region43: #{ccbam_forward.1} parent=5 // pred_region
        %s280 = ssub.s32 %s13, 1
        // Predicated region
        $region45: #{ccbam_forward.1} parent=43 // pred_check
          %p281 = pneg %p178
        $region46: #{ccbam_forward.1} parent=43 // pred_check_branch
          %283 = sbr.rel (%p281) target = $region48
        $region47: #{ccbam_forward.1} parent=43 // pred_region
          %285 = dma.done [#allocation5], 32
        $region48: #{ccbam_forward.1} parent=43 // pred_fallthru
          _
        %286 = sfence
        %p287 = scmp.lt.s32.totalorder %s23, 1
        %s288 = scalar_select %p287, %s23, 1
        %p289 = scmp.lt.s32.totalorder %s22, 1
        %s290 = scalar_select %p289, %s22, 1
        %s291 = smul.addr %s290, 8
        %s292 = smul.addr %s288, 16
        %s293 = sadd.s32 %s291, %s292
        %s294 = smul.addr %s293, 8
        %s295 = scalar_lea.vmem %s0, %s294
        %p296 = pneg %p53
        %p297 = pneg %p50
        %p298 = scmp.lt.s32.totalorder %s23, 1
        %s299 = scalar_select %p298, %s23, 1
        %s300 = smul.addr %s299, 4
        %s301 = smul.addr %s300, 8
        %s302 = scalar_lea.vmem %s1, %s301
        %p303 = pneg %p79
        %p304 = pneg %p76
        %p305 = scmp.lt.s32.totalorder %s23, 1
        %s306 = scalar_select %p305, %s23, 1
        %s307 = scalar_lea.vmem %s2, %s306
        %p308 = pneg %p105
        %p309 = pneg %p102
        %p310 = scmp.lt.s32.totalorder %s23, 1
        %s311 = scalar_select %p310, %s23, 1
        %s312 = smul.addr %s311, 2
        %s313 = scalar_lea.vmem %s3, %s312
        %p314 = pneg %p131
        %p315 = pneg %p128
        %p316 = scmp.lt.s32.totalorder %s23, 1
        %s317 = scalar_select %p316, %s23, 1
        %s318 = scalar_lea.vmem %s4, %s317
        %p319 = pneg %p157
        %p320 = pneg %p154
        %p321 = pneg %p178
        %p322 = pneg %p175
        %p323 = pneg %p206
        %p324 = pneg %p203
        %p325 = scmp.lt.s32.totalorder %s23, 1
        %s326 = scalar_select %p325, %s23, 1
        %p327 = scmp.lt.s32.totalorder %s22, 1
        %s328 = scalar_select %p327, %s22, 1
        %s329 = smul.addr %s328, 8
        %s330 = smul.addr %s326, 16
        %s331 = sadd.s32 %s329, %s330
        %s332 = smul.addr %s331, 8
        %s333 = scalar_lea.vmem %s6, %s332
        %p334 = scmp.lt.s32.totalorder %s23, 1
        %s335 = scalar_select %p334, %s23, 1
        %p336 = scmp.lt.s32.totalorder %s22, 1
        %s337 = scalar_select %p336, %s22, 1
        %s338 = smul.addr %s337, 8
        %s339 = smul.addr %s335, 16
        %s340 = sadd.s32 %s338, %s339
        %s341 = smul.addr %s340, 8
        %s342 = scalar_lea.vmem %s0, %s341
        %p343 = scmp.lt.s32.totalorder %s23, 1
        %s344 = scalar_select %p343, %s23, 1
        %s345 = smul.addr %s344, 4
        %s346 = smul.addr %s345, 8
        %s347 = scalar_lea.vmem %s1, %s346
        %p348 = scmp.lt.s32.totalorder %s23, 1
        %s349 = scalar_select %p348, %s23, 1
        %s350 = scalar_lea.vmem %s2, %s349
        %p351 = scmp.lt.s32.totalorder %s23, 1
        %s352 = scalar_select %p351, %s23, 1
        %s353 = smul.addr %s352, 2
        %s354 = scalar_lea.vmem %s3, %s353
        %p355 = scmp.lt.s32.totalorder %s23, 1
        %s356 = scalar_select %p355, %s23, 1
        %s357 = scalar_lea.vmem %s4, %s356
        %p358 = scmp.lt.s32.totalorder %s23, 1
        %s359 = scalar_select %p358, %s23, 1
        %p360 = scmp.lt.s32.totalorder %s22, 1
        %s361 = scalar_select %p360, %s22, 1
        %s362 = smul.addr %s361, 8
        %s363 = smul.addr %s359, 16
        %s364 = sadd.s32 %s362, %s363
        %s365 = smul.addr %s364, 8
        %s366 = scalar_lea.vmem %s6, %s365
        %v367 = vld [vmem:[%s342] sm:$0xff]
        %v368 = vld [vmem:[%s342 + $0x8] sm:$0xff]
        %v369 = vld [vmem:[%s342 + $0x10] sm:$0xff]
        %v370 = vld [vmem:[%s342 + $0x18] sm:$0xff]
        %v371 = vld [vmem:[%s342 + $0x20] sm:$0xff]
        %v372 = vld [vmem:[%s342 + $0x28] sm:$0xff]
        %v373 = vld [vmem:[%s342 + $0x30] sm:$0xff]
        %v374 = vld [vmem:[%s342 + $0x38] sm:$0xff]
        %v375 = vadd.f32 %v367, %v368
        %376 = vadd.xlane.f32.xlu0 %v375
        %v377 = vpop.xlane.xlu0 %376
        %v378 = vadd.f32 %v369, %v370
        %379 = vadd.xlane.f32.xlu0 %v378
        %v380 = vpop.xlane.xlu0 %379
        %v381 = vadd.f32 %v371, %v372
        %382 = vadd.xlane.f32.xlu0 %v381
        %v383 = vpop.xlane.xlu0 %382
        %v384 = vadd.f32 %v373, %v374
        %385 = vadd.xlane.f32.xlu0 %v384
        %v386 = vpop.xlane.xlu0 %385
        %v387 = vmul.f32 %v377, 0.00390625
        %v388 = vmul.f32 %v380, 0.00390625
        %v389 = vmul.f32 %v383, 0.00390625
        %v390 = vmul.f32 %v386, 0.00390625
        %v391 = vmax.f32 %v367, %v368
        %392 = vmax.xlane.f32.xlu0 %v391
        %v393 = vpop.xlane.xlu0 %392
        %v394 = vmax.f32 %v369, %v370
        %395 = vmax.xlane.f32.xlu0 %v394
        %v396 = vpop.xlane.xlu0 %395
        %v397 = vmax.f32 %v371, %v372
        %398 = vmax.xlane.f32.xlu0 %v397
        %v399 = vpop.xlane.xlu0 %398
        %v400 = vmax.f32 %v373, %v374
        %401 = vmax.xlane.f32.xlu0 %v400
        %v402 = vpop.xlane.xlu0 %401
        %v407 = vlaneseq
        %v408 = vand.u32 %v407, 127
        %v409 = vperm.slane %v387, %v408
        %v410 = vadd.s32 %v408, 4294967288
        %v411 = vperm.slane %v388, %v410
        %vm412 = vcmask 130112
        %v413 = vsel %vm412, %v411, %v409
        %v414 = vadd.s32 %v408, 4294967280
        %v415 = vperm.slane %v389, %v414
        %vm416 = vcmask 195712
        %v417 = vsel %vm416, %v415, %v413
        %v418 = vadd.s32 %v408, 4294967272
        %v419 = vperm.slane %v390, %v418
        %vm420 = vcmask 261312
        %v421 = vsel %vm420, %v419, %v417
        %v427 = vperm.slane %v393, %v408
        %v428 = vperm.slane %v396, %v410
        %v429 = vsel %vm412, %v428, %v427
        %v430 = vperm.slane %v399, %v414
        %v431 = vsel %vm416, %v430, %v429
        %v432 = vperm.slane %v402, %v418
        %v433 = vsel %vm420, %v432, %v431
        %vm435 = vcmask 1040384
        %v436 = vsel %vm435, %v421, %v433
        %v437 = vld [vmem:[%s347] sm:$0xff]
        %v438 = vld [vmem:[%s347 + $0x8] sm:$0xff]
        %v439 = vld [vmem:[%s347 + $0x10] sm:$0xff]
        %v440 = vld [vmem:[%s347 + $0x18] sm:$0xff]
        %v441 = vld [vmem:[%s350] sm:$0x1]
        %v443 = vperm.slane %v441, 0
        %vm445 = vcmask 261120
        %v447 = vsel %vm445, %v436, 0
        %449 = vmatpush.msra.mxu0 0.0
        %450 = vmatpush.msra.mxu0 0.0
        %451 = vmatpush.msra.mxu0 0.0
        %452 = vmatpush.msra.mxu0 0.0
        %453 = vmatpush.msra.mxu0 0.0
        %454 = vmatpush.msra.mxu0 0.0
        %455 = vmatpush.msra.mxu0 0.0
        %456 = vmatpush.msra.mxu0 0.0
        %457 = vmatpush.msra.mxu0 0.0
        %458 = vmatpush.msra.mxu0 0.0
        %459 = vmatpush.msra.mxu0 0.0
        %460 = vmatpush.msra.mxu0 0.0
        %461 = vmatpush.msra.mxu0 %v440
        %462 = vmatpush.msra.mxu0 %v439
        %463 = vmatpush.msra.mxu0 %v438
        %464 = vmatpush.msra.mxu0 %v437
        %465 = vmatmul.f32.gmra.mxu0 %v447
        %v466 = vpop.f32.mrf.mxu0
        %v467 = vadd.f32 %v443, %v466
        %468 = vdwg.mxu0
        %v469 = vmax.f32 %v467, 0.0
        %v470 = vld [vmem:[%s354] sm:$0x3]
        %v471 = vld [vmem:[%s357] sm:$0x1]
        %v473 = vperm.slane %v471, 0
        %vm475 = vcmask 15360
        %v477 = vsel %vm475, %v469, 0
        %vm479 = vcmask 1041408
        %v481 = vsel %vm479, %v470, 0
        %483 = vmatpush.msra.mxu0 0.0
        %484 = vmatpush.msra.mxu0 0.0
        %485 = vmatpush.msra.mxu0 0.0
        %486 = vmatpush.msra.mxu0 0.0
        %487 = vmatpush.msra.mxu0 0.0
        %488 = vmatpush.msra.mxu0 0.0
        %489 = vmatpush.msra.mxu0 0.0
        %490 = vmatpush.msra.mxu0 0.0
        %491 = vmatpush.msra.mxu0 0.0
        %492 = vmatpush.msra.mxu0 0.0
        %493 = vmatpush.msra.mxu0 0.0
        %494 = vmatpush.msra.mxu0 0.0
        %495 = vmatpush.msra.mxu0 0.0
        %496 = vmatpush.msra.mxu0 0.0
        %497 = vmatpush.msra.mxu0 0.0
        %498 = vmatpush.msra.mxu0 %v481
        %499 = vmatmul.f32.gmra.mxu0 %v477
        %v500 = vpop.f32.mrf.mxu0
        %v501 = vadd.f32 %v473, %v500
        %502 = vdwg.mxu0
        %vm503 = vcmask 254976
        %v504 = vsel %vm503, %v501, 0.0
        %v505 = vrot.slane %v504, 4
        %v506 = vadd.f32 %v504, %v505
        %v507 = vrot.slane %v506, 2
        %v508 = vadd.f32 %v506, %v507
        %v509 = vrot.slane %v508, 1
        %v510 = vadd.f32 %v508, %v509
        %v511 = vxor.u32 %v510, 2147483648
        %v512 = vmul.f32 %v511, 1.442695
        %v513 = vpow.pop %v512
        %v514 = vadd.f32 %v513, 1.0
        %v515 = vrcp.pop %v514
        %v516 = vmul.f32 %v514, %v515
        %v517 = vsub.f32 1.0, %v516
        %v518 = vmul.f32 %v515, %v517
        %v519 = vadd.f32 %v515, %v518
        %vm520 = vweird.f32 %v514
        %vm521 = vweird.f32 %v515
        %vm522 = vmor %vm520, %vm521
        %v523 = vsel %vm522, %v515, %v519
        %v524 = vand.u32 2147483647, %v514
        %vm525 = vcmp.eq.f32.partialorder %v524, 8.507059e+37
        %v526 = vand.u32 %v514, 2147483648
        %v527 = vor.u32 1.1754944e-38, %v526
        %v528 = vsel %vm525, %v527, %v523
        %v529 = vmul.f32 1.0, %v528
        %v530 = vlaneseq
        %v531 = vshrl.u32 %v530, 7
        %533 = vset.pattern.permute.xlu0 %v531
        %534 = vperm.xlu0 %533, %v529
        %v535 = vpop.permute.xlu0 %534
        %v536 = vlaneseq
        %v537 = vshrl.u32 %v536, 7
        %v538 = vadd.s32 %v537, 8
        %539 = vset.pattern.permute.xlu0 %v538
        %540 = vperm.xlu0 %539, %v529
        %v541 = vpop.permute.xlu0 %540
        %v542 = vlaneseq
        %v543 = vshrl.u32 %v542, 7
        %v544 = vadd.s32 %v543, 16
        %545 = vset.pattern.permute.xlu0 %v544
        %546 = vperm.xlu0 %545, %v529
        %v547 = vpop.permute.xlu0 %546
        %v548 = vlaneseq
        %v549 = vshrl.u32 %v548, 7
        %v550 = vadd.s32 %v549, 24
        %551 = vset.pattern.permute.xlu0 %v550
        %552 = vperm.xlu0 %551, %v529
        %v553 = vpop.permute.xlu0 %552
        %v554 = vmul.f32 %v367, %v535
        %v555 = vmul.f32 %v368, %v535
        %v556 = vmul.f32 %v369, %v541
        %v557 = vmul.f32 %v370, %v541
        %v558 = vmul.f32 %v371, %v547
        %v559 = vmul.f32 %v372, %v547
        %v560 = vmul.f32 %v373, %v553
        %v561 = vmul.f32 %v374, %v553
        %v562 = vmax.f32 %v554, %v558
        %v563 = vmax.f32 %v556, %v560
        %v564 = vmax.f32 %v562, %v563
        %v565 = vrot.slane %v564, 4
        %v566 = vmax.f32 %v564, %v565
        %v567 = vrot.slane %v566, 2
        %v568 = vmax.f32 %v566, %v567
        %v569 = vrot.slane %v568, 1
        %v570 = vmax.f32 %v568, %v569
        %v571 = vmax.f32 %v555, %v559
        %v572 = vmax.f32 %v557, %v561
        %v573 = vmax.f32 %v571, %v572
        %v574 = vrot.slane %v573, 4
        %v575 = vmax.f32 %v573, %v574
        %v576 = vrot.slane %v575, 2
        %v577 = vmax.f32 %v575, %v576
        %v578 = vrot.slane %v577, 1
        %v579 = vmax.f32 %v577, %v578
        %v580 = vadd.f32 %v554, %v556
        %v581 = vadd.f32 %v580, %v558
        %v582 = vadd.f32 %v581, %v560
        %v583 = vrot.slane %v582, 4
        %v584 = vadd.f32 %v582, %v583
        %v585 = vrot.slane %v584, 2
        %v586 = vadd.f32 %v584, %v585
        %v587 = vrot.slane %v586, 1
        %v588 = vadd.f32 %v586, %v587
        %v589 = vadd.f32 %v555, %v557
        %v590 = vadd.f32 %v589, %v559
        %v591 = vadd.f32 %v590, %v561
        %v592 = vrot.slane %v591, 4
        %v593 = vadd.f32 %v591, %v592
        %v594 = vrot.slane %v593, 2
        %v595 = vadd.f32 %v593, %v594
        %v596 = vrot.slane %v595, 1
        %v597 = vadd.f32 %v595, %v596
        %v598 = vmul.f32 %v588, 0.03125
        %v599 = vmul.f32 %v597, 0.03125
        %vm600 = vcmask 179200
        %601 = vst.msk [vmem:[#allocation2] sm:$0xff] %vm600, 0.0
        %602 = vst.msk [vmem:[#allocation2 + $0x8] sm:$0xff] %vm600, 0.0
        %vm603 = vcmask 177152
        %604 = vst.msk [vmem:[#allocation2 + $0x10] sm:$0x3f] %vm603, 0.0
        %605 = vst.msk [vmem:[#allocation2 + $0x18] sm:$0xff] %vm600, 0.0
        %606 = vst.msk [vmem:[#allocation2 + $0x20] sm:$0xff] %vm600, 0.0
        %607 = vst.msk [vmem:[#allocation2 + $0x28] sm:$0x3f] %vm603, 0.0
        %609 = vrot.lane.b32.xlu0 %v570, 3
        %v610 = vpop.permute.xlu0 %609
        %vm612 = vcmask 147480
        %613 = vst.msk [vmem:[#allocation2 + $0x3] sm:$0x1] %vm612, %v610
        %615 = vrot.lane.b32.xlu0 %v598, 3
        %v616 = vpop.permute.xlu0 %615
        %s618 = scalar_lea.vmem [#allocation2], 24
        %619 = vst.msk [vmem:[%s618 + $0x3] sm:$0x1] %vm612, %v616
        %620 = vrot.lane.b32.xlu0 %v570, 115
        %v621 = vpop.permute.xlu0 %620
        %623 = vst.msk [vmem:[#allocation2 + $0x4] sm:$0x1] %vm612, %v621
        %624 = vrot.lane.b32.xlu0 %v598, 115
        %v625 = vpop.permute.xlu0 %624
        %627 = vst.msk [vmem:[%s618 + $0x4] sm:$0x1] %vm612, %v625
        %628 = vrot.lane.b32.xlu0 %v570, 99
        %v629 = vpop.permute.xlu0 %628
        %631 = vst.msk [vmem:[#allocation2 + $0x5] sm:$0x1] %vm612, %v629
        %632 = vrot.lane.b32.xlu0 %v598, 99
        %v633 = vpop.permute.xlu0 %632
        %635 = vst.msk [vmem:[%s618 + $0x5] sm:$0x1] %vm612, %v633
        %636 = vrot.lane.b32.xlu0 %v570, 83
        %v637 = vpop.permute.xlu0 %636
        %639 = vst.msk [vmem:[#allocation2 + $0x6] sm:$0x1] %vm612, %v637
        %640 = vrot.lane.b32.xlu0 %v598, 83
        %v641 = vpop.permute.xlu0 %640
        %643 = vst.msk [vmem:[%s618 + $0x6] sm:$0x1] %vm612, %v641
        %644 = vrot.lane.b32.xlu0 %v570, 67
        %v645 = vpop.permute.xlu0 %644
        %647 = vst.msk [vmem:[#allocation2 + $0x7] sm:$0x1] %vm612, %v645
        %648 = vrot.lane.b32.xlu0 %v598, 67
        %v649 = vpop.permute.xlu0 %648
        %651 = vst.msk [vmem:[%s618 + $0x7] sm:$0x1] %vm612, %v649
        %652 = vrot.lane.b32.xlu0 %v570, 51
        %v653 = vpop.permute.xlu0 %652
        %655 = vst.msk [vmem:[#allocation2 + $0x8] sm:$0x1] %vm612, %v653
        %656 = vrot.lane.b32.xlu0 %v598, 51
        %v657 = vpop.permute.xlu0 %656
        %659 = vst.msk [vmem:[%s618 + $0x8] sm:$0x1] %vm612, %v657
        %660 = vrot.lane.b32.xlu0 %v570, 35
        %v661 = vpop.permute.xlu0 %660
        %663 = vst.msk [vmem:[#allocation2 + $0x9] sm:$0x1] %vm612, %v661
        %664 = vrot.lane.b32.xlu0 %v598, 35
        %v665 = vpop.permute.xlu0 %664
        %667 = vst.msk [vmem:[%s618 + $0x9] sm:$0x1] %vm612, %v665
        %668 = vrot.lane.b32.xlu0 %v570, 19
        %v669 = vpop.permute.xlu0 %668
        %671 = vst.msk [vmem:[#allocation2 + $0xa] sm:$0x1] %vm612, %v669
        %672 = vrot.lane.b32.xlu0 %v598, 19
        %v673 = vpop.permute.xlu0 %672
        %675 = vst.msk [vmem:[%s618 + $0xa] sm:$0x1] %vm612, %v673
        %677 = vrot.lane.b32.xlu0 %v579, 3
        %v678 = vpop.permute.xlu0 %677
        %680 = vst.msk [vmem:[#allocation2 + $0xb] sm:$0x1] %vm612, %v678
        %682 = vrot.lane.b32.xlu0 %v599, 3
        %v683 = vpop.permute.xlu0 %682
        %685 = vst.msk [vmem:[%s618 + $0xb] sm:$0x1] %vm612, %v683
        %686 = vrot.lane.b32.xlu0 %v579, 115
        %v687 = vpop.permute.xlu0 %686
        %689 = vst.msk [vmem:[#allocation2 + $0xc] sm:$0x1] %vm612, %v687
        %690 = vrot.lane.b32.xlu0 %v599, 115
        %v691 = vpop.permute.xlu0 %690
        %693 = vst.msk [vmem:[%s618 + $0xc] sm:$0x1] %vm612, %v691
        %694 = vrot.lane.b32.xlu0 %v579, 99
        %v695 = vpop.permute.xlu0 %694
        %697 = vst.msk [vmem:[#allocation2 + $0xd] sm:$0x1] %vm612, %v695
        %698 = vrot.lane.b32.xlu0 %v599, 99
        %v699 = vpop.permute.xlu0 %698
        %701 = vst.msk [vmem:[%s618 + $0xd] sm:$0x1] %vm612, %v699
        %702 = vrot.lane.b32.xlu0 %v579, 83
        %v703 = vpop.permute.xlu0 %702
        %705 = vst.msk [vmem:[#allocation2 + $0xe] sm:$0x1] %vm612, %v703
        %706 = vrot.lane.b32.xlu0 %v599, 83
        %v707 = vpop.permute.xlu0 %706
        %709 = vst.msk [vmem:[%s618 + $0xe] sm:$0x1] %vm612, %v707
        %710 = vrot.lane.b32.xlu0 %v579, 67
        %v711 = vpop.permute.xlu0 %710
        %713 = vst.msk [vmem:[#allocation2 + $0xf] sm:$0x1] %vm612, %v711
        %714 = vrot.lane.b32.xlu0 %v599, 67
        %v715 = vpop.permute.xlu0 %714
        %717 = vst.msk [vmem:[%s618 + $0xf] sm:$0x1] %vm612, %v715
        %718 = vrot.lane.b32.xlu0 %v579, 51
        %v719 = vpop.permute.xlu0 %718
        %721 = vst.msk [vmem:[#allocation2 + $0x10] sm:$0x1] %vm612, %v719
        %722 = vrot.lane.b32.xlu0 %v599, 51
        %v723 = vpop.permute.xlu0 %722
        %725 = vst.msk [vmem:[%s618 + $0x10] sm:$0x1] %vm612, %v723
        %726 = vrot.lane.b32.xlu0 %v579, 35
        %v727 = vpop.permute.xlu0 %726
        %729 = vst.msk [vmem:[#allocation2 + $0x11] sm:$0x1] %vm612, %v727
        %730 = vrot.lane.b32.xlu0 %v599, 35
        %v731 = vpop.permute.xlu0 %730
        %733 = vst.msk [vmem:[%s618 + $0x11] sm:$0x1] %vm612, %v731
        %734 = vrot.lane.b32.xlu0 %v579, 19
        %v735 = vpop.permute.xlu0 %734
        %737 = vst.msk [vmem:[#allocation2 + $0x12] sm:$0x1] %vm612, %v735
        %738 = vrot.lane.b32.xlu0 %v599, 19
        %v739 = vpop.permute.xlu0 %738
        %741 = vst.msk [vmem:[%s618 + $0x12] sm:$0x1] %vm612, %v739
        %v742 = vld [vmem:[#allocation2] sm:$0xff]
        %v743 = vld [vmem:[#allocation2 + $0x8] sm:$0xff]
        %v744 = vld [vmem:[#allocation2 + $0x10] sm:$0x3f]
        %v745 = vld [vmem:[#allocation2 + $0x18] sm:$0xff]
        %v746 = vld [vmem:[#allocation2 + $0x20] sm:$0xff]
        %v747 = vld [vmem:[#allocation2 + $0x28] sm:$0x3f]
        %s748 = smul.u32 %s23, 128
        %s749 = sld [smem:[#allocation4 + %s748]]
        %v750 = vstv %s749
        %v751 = vmul.f32 %v742, %v750
        %v752 = vmul.f32 %v743, %v750
        %v753 = vadd.f32 %v751, 0.0
        %v754 = vadd.f32 %v752, 0.0
        %s755 = sadd.s32 %s748, 7
        %s756 = sld [smem:[#allocation4 + %s755]]
        %v757 = vstv %s756
        %v758 = vmul.f32 %v742, %v757
        %v759 = vmul.f32 %v743, %v757
        %v760 = vmul.f32 %v744, %v757
        %vm764 = vcmask 1046528
        %v765 = vrot.slane %v758, 1
        %v766 = vrot.slane %v759, 1
        %v767 = vsel %vm764, %v765, %v766
        %v768 = vrot.slane %v760, 1
        %v769 = vsel %vm764, %v766, %v768
        %v772 = vadd.f32 %v753, %v767
        %v773 = vadd.f32 %v754, %v769
        %s774 = sadd.s32 %s748, 14
        %s775 = sld [smem:[#allocation4 + %s774]]
        %v776 = vstv %s775
        %v777 = vmul.f32 %v742, %v776
        %v778 = vmul.f32 %v743, %v776
        %v779 = vmul.f32 %v744, %v776
        %vm783 = vcmask 1045504
        %v784 = vrot.slane %v777, 2
        %v785 = vrot.slane %v778, 2
        %v786 = vsel %vm783, %v784, %v785
        %v787 = vrot.slane %v779, 2
        %v788 = vsel %vm783, %v785, %v787
        %v791 = vadd.f32 %v772, %v786
        %v792 = vadd.f32 %v773, %v788
        %s793 = sadd.s32 %s748, 21
        %s794 = sld [smem:[#allocation4 + %s793]]
        %v795 = vstv %s794
        %v796 = vmul.f32 %v742, %v795
        %v797 = vmul.f32 %v743, %v795
        %v798 = vmul.f32 %v744, %v795
        %vm802 = vcmask 1044480
        %v803 = vrot.slane %v796, 3
        %v804 = vrot.slane %v797, 3
        %v805 = vsel %vm802, %v803, %v804
        %v806 = vrot.slane %v798, 3
        %v807 = vsel %vm802, %v804, %v806
        %v810 = vadd.f32 %v791, %v805
        %v811 = vadd.f32 %v792, %v807
        %s812 = sadd.s32 %s748, 28
        %s813 = sld [smem:[#allocation4 + %s812]]
        %v814 = vstv %s813
        %v815 = vmul.f32 %v742, %v814
        %v816 = vmul.f32 %v743, %v814
        %v817 = vmul.f32 %v744, %v814
        %vm821 = vcmask 1043456
        %v822 = vrot.slane %v815, 4
        %v823 = vrot.slane %v816, 4
        %v824 = vsel %vm821, %v822, %v823
        %v825 = vrot.slane %v817, 4
        %v826 = vsel %vm821, %v823, %v825
        %v829 = vadd.f32 %v810, %v824
        %v830 = vadd.f32 %v811, %v826
        %s831 = sadd.s32 %s748, 35
        %s832 = sld [smem:[#allocation4 + %s831]]
        %v833 = vstv %s832
        %v834 = vmul.f32 %v742, %v833
        %v835 = vmul.f32 %v743, %v833
        %v836 = vmul.f32 %v744, %v833
        %vm840 = vcmask 1042432
        %v841 = vrot.slane %v834, 5
        %v842 = vrot.slane %v835, 5
        %v843 = vsel %vm840, %v841, %v842
        %v844 = vrot.slane %v836, 5
        %v845 = vsel %vm840, %v842, %v844
        %v848 = vadd.f32 %v829, %v843
        %v849 = vadd.f32 %v830, %v845
        %s850 = sadd.s32 %s748, 42
        %s851 = sld [smem:[#allocation4 + %s850]]
        %v852 = vstv %s851
        %v853 = vmul.f32 %v742, %v852
        %v854 = vmul.f32 %v743, %v852
        %v855 = vmul.f32 %v744, %v852
        %v859 = vrot.slane %v853, 6
        %v860 = vrot.slane %v854, 6
        %v861 = vsel %vm479, %v859, %v860
        %v862 = vrot.slane %v855, 6
        %v863 = vsel %vm479, %v860, %v862
        %v866 = vadd.f32 %v848, %v861
        %v867 = vadd.f32 %v849, %v863
        %s868 = sadd.s32 %s748, 49
        %s869 = sld [smem:[#allocation4 + %s868]]
        %v870 = vstv %s869
        %v871 = vmul.f32 %v745, %v870
        %v872 = vmul.f32 %v746, %v870
        %v873 = vadd.f32 %v866, %v871
        %v874 = vadd.f32 %v867, %v872
        %s875 = sadd.s32 %s748, 56
        %s876 = sld [smem:[#allocation4 + %s875]]
        %v877 = vstv %s876
        %v878 = vmul.f32 %v745, %v877
        %v879 = vmul.f32 %v746, %v877
        %v880 = vmul.f32 %v747, %v877
        %v884 = vrot.slane %v878, 1
        %v885 = vrot.slane %v879, 1
        %v886 = vsel %vm764, %v884, %v885
        %v887 = vrot.slane %v880, 1
        %v888 = vsel %vm764, %v885, %v887
        %v891 = vadd.f32 %v873, %v886
        %v892 = vadd.f32 %v874, %v888
        %s893 = sadd.s32 %s748, 63
        %s894 = sld [smem:[#allocation4 + %s893]]
        %v895 = vstv %s894
        %v896 = vmul.f32 %v745, %v895
        %v897 = vmul.f32 %v746, %v895
        %v898 = vmul.f32 %v747, %v895
        %v902 = vrot.slane %v896, 2
        %v903 = vrot.slane %v897, 2
        %v904 = vsel %vm783, %v902, %v903
        %v905 = vrot.slane %v898, 2
        %v906 = vsel %vm783, %v903, %v905
        %v909 = vadd.f32 %v891, %v904
        %v910 = vadd.f32 %v892, %v906
        %s911 = sadd.s32 %s748, 70
        %s912 = sld [smem:[#allocation4 + %s911]]
        %v913 = vstv %s912
        %v914 = vmul.f32 %v745, %v913
        %v915 = vmul.f32 %v746, %v913
        %v916 = vmul.f32 %v747, %v913
        %v920 = vrot.slane %v914, 3
        %v921 = vrot.slane %v915, 3
        %v922 = vsel %vm802, %v920, %v921
        %v923 = vrot.slane %v916, 3
        %v924 = vsel %vm802, %v921, %v923
        %v927 = vadd.f32 %v909, %v922
        %v928 = vadd.f32 %v910, %v924
        %s929 = sadd.s32 %s748, 77
        %s930 = sld [smem:[#allocation4 + %s929]]
        %v931 = vstv %s930
        %v932 = vmul.f32 %v745, %v931
        %v933 = vmul.f32 %v746, %v931
        %v934 = vmul.f32 %v747, %v931
        %v938 = vrot.slane %v932, 4
        %v939 = vrot.slane %v933, 4
        %v940 = vsel %vm821, %v938, %v939
        %v941 = vrot.slane %v934, 4
        %v942 = vsel %vm821, %v939, %v941
        %v945 = vadd.f32 %v927, %v940
        %v946 = vadd.f32 %v928, %v942
        %s947 = sadd.s32 %s748, 84
        %s948 = sld [smem:[#allocation4 + %s947]]
        %v949 = vstv %s948
        %v950 = vmul.f32 %v745, %v949
        %v951 = vmul.f32 %v746, %v949
        %v952 = vmul.f32 %v747, %v949
        %v956 = vrot.slane %v950, 5
        %v957 = vrot.slane %v951, 5
        %v958 = vsel %vm840, %v956, %v957
        %v959 = vrot.slane %v952, 5
        %v960 = vsel %vm840, %v957, %v959
        %v963 = vadd.f32 %v945, %v958
        %v964 = vadd.f32 %v946, %v960
        %s965 = sadd.s32 %s748, 91
        %s966 = sld [smem:[#allocation4 + %s965]]
        %v967 = vstv %s966
        %v968 = vmul.f32 %v745, %v967
        %v969 = vmul.f32 %v746, %v967
        %v970 = vmul.f32 %v747, %v967
        %v974 = vrot.slane %v968, 6
        %v975 = vrot.slane %v969, 6
        %v976 = vsel %vm479, %v974, %v975
        %v977 = vrot.slane %v970, 6
        %v978 = vsel %vm479, %v975, %v977
        %v981 = vadd.f32 %v963, %v976
        %v982 = vadd.f32 %v964, %v978
        %s983 = sadd.s32 %s748, 1
        %s984 = sld [smem:[#allocation4 + %s983]]
        %v985 = vstv %s984
        %v986 = vmul.f32 %v742, %v985
        %v987 = vmul.f32 %v743, %v985
        %990 = vrot.lane.b32.xlu0 %v986, 127
        %v991 = vpop.permute.xlu0 %990
        %992 = vrot.lane.b32.xlu0 %v987, 127
        %v993 = vpop.permute.xlu0 %992
        %v996 = vadd.f32 %v981, %v991
        %v997 = vadd.f32 %v982, %v993
        %s998 = sadd.s32 %s748, 8
        %s999 = sld [smem:[#allocation4 + %s998]]
        %v1000 = vstv %s999
        %v1001 = vmul.f32 %v742, %v1000
        %v1002 = vmul.f32 %v743, %v1000
        %v1003 = vmul.f32 %v744, %v1000
        %v1007 = vrot.slane %v1001, 1
        %v1008 = vrot.slane %v1002, 1
        %v1009 = vsel %vm764, %v1007, %v1008
        %v1010 = vrot.slane %v1003, 1
        %v1011 = vsel %vm764, %v1008, %v1010
        %1012 = vrot.lane.b32.xlu0 %v1009, 127
        %v1013 = vpop.permute.xlu0 %1012
        %1014 = vrot.lane.b32.xlu0 %v1011, 127
        %v1015 = vpop.permute.xlu0 %1014
        %v1018 = vadd.f32 %v996, %v1013
        %v1019 = vadd.f32 %v997, %v1015
        %s1020 = sadd.s32 %s748, 15
        %s1021 = sld [smem:[#allocation4 + %s1020]]
        %v1022 = vstv %s1021
        %v1023 = vmul.f32 %v742, %v1022
        %v1024 = vmul.f32 %v743, %v1022
        %v1025 = vmul.f32 %v744, %v1022
        %v1029 = vrot.slane %v1023, 2
        %v1030 = vrot.slane %v1024, 2
        %v1031 = vsel %vm783, %v1029, %v1030
        %v1032 = vrot.slane %v1025, 2
        %v1033 = vsel %vm783, %v1030, %v1032
        %1034 = vrot.lane.b32.xlu0 %v1031, 127
        %v1035 = vpop.permute.xlu0 %1034
        %1036 = vrot.lane.b32.xlu0 %v1033, 127
        %v1037 = vpop.permute.xlu0 %1036
        %v1040 = vadd.f32 %v1018, %v1035
        %v1041 = vadd.f32 %v1019, %v1037
        %s1042 = sadd.s32 %s748, 22
        %s1043 = sld [smem:[#allocation4 + %s1042]]
        %v1044 = vstv %s1043
        %v1045 = vmul.f32 %v742, %v1044
        %v1046 = vmul.f32 %v743, %v1044
        %v1047 = vmul.f32 %v744, %v1044
        %v1051 = vrot.slane %v1045, 3
        %v1052 = vrot.slane %v1046, 3
        %v1053 = vsel %vm802, %v1051, %v1052
        %v1054 = vrot.slane %v1047, 3
        %v1055 = vsel %vm802, %v1052, %v1054
        %1056 = vrot.lane.b32.xlu0 %v1053, 127
        %v1057 = vpop.permute.xlu0 %1056
        %1058 = vrot.lane.b32.xlu0 %v1055, 127
        %v1059 = vpop.permute.xlu0 %1058
        %v1062 = vadd.f32 %v1040, %v1057
        %v1063 = vadd.f32 %v1041, %v1059
        %s1064 = sadd.s32 %s748, 29
        %s1065 = sld [smem:[#allocation4 + %s1064]]
        %v1066 = vstv %s1065
        %v1067 = vmul.f32 %v742, %v1066
        %v1068 = vmul.f32 %v743, %v1066
        %v1069 = vmul.f32 %v744, %v1066
        %v1073 = vrot.slane %v1067, 4
        %v1074 = vrot.slane %v1068, 4
        %v1075 = vsel %vm821, %v1073, %v1074
        %v1076 = vrot.slane %v1069, 4
        %v1077 = vsel %vm821, %v1074, %v1076
        %1078 = vrot.lane.b32.xlu0 %v1075, 127
        %v1079 = vpop.permute.xlu0 %1078
        %1080 = vrot.lane.b32.xlu0 %v1077, 127
        %v1081 = vpop.permute.xlu0 %1080
        %v1084 = vadd.f32 %v1062, %v1079
        %v1085 = vadd.f32 %v1063, %v1081
        %s1086 = sadd.s32 %s748, 36
        %s1087 = sld [smem:[#allocation4 + %s1086]]
        %v1088 = vstv %s1087
        %v1089 = vmul.f32 %v742, %v1088
        %v1090 = vmul.f32 %v743, %v1088
        %v1091 = vmul.f32 %v744, %v1088
        %v1095 = vrot.slane %v1089, 5
        %v1096 = vrot.slane %v1090, 5
        %v1097 = vsel %vm840, %v1095, %v1096
        %v1098 = vrot.slane %v1091, 5
        %v1099 = vsel %vm840, %v1096, %v1098
        %1100 = vrot.lane.b32.xlu0 %v1097, 127
        %v1101 = vpop.permute.xlu0 %1100
        %1102 = vrot.lane.b32.xlu0 %v1099, 127
        %v1103 = vpop.permute.xlu0 %1102
        %v1106 = vadd.f32 %v1084, %v1101
        %v1107 = vadd.f32 %v1085, %v1103
        %s1108 = sadd.s32 %s748, 43
        %s1109 = sld [smem:[#allocation4 + %s1108]]
        %v1110 = vstv %s1109
        %v1111 = vmul.f32 %v742, %v1110
        %v1112 = vmul.f32 %v743, %v1110
        %v1113 = vmul.f32 %v744, %v1110
        %v1117 = vrot.slane %v1111, 6
        %v1118 = vrot.slane %v1112, 6
        %v1119 = vsel %vm479, %v1117, %v1118
        %v1120 = vrot.slane %v1113, 6
        %v1121 = vsel %vm479, %v1118, %v1120
        %1122 = vrot.lane.b32.xlu0 %v1119, 127
        %v1123 = vpop.permute.xlu0 %1122
        %1124 = vrot.lane.b32.xlu0 %v1121, 127
        %v1125 = vpop.permute.xlu0 %1124
        %v1128 = vadd.f32 %v1106, %v1123
        %v1129 = vadd.f32 %v1107, %v1125
        %s1130 = sadd.s32 %s748, 50
        %s1131 = sld [smem:[#allocation4 + %s1130]]
        %v1132 = vstv %s1131
        %v1133 = vmul.f32 %v745, %v1132
        %v1134 = vmul.f32 %v746, %v1132
        %1137 = vrot.lane.b32.xlu0 %v1133, 127
        %v1138 = vpop.permute.xlu0 %1137
        %1139 = vrot.lane.b32.xlu0 %v1134, 127
        %v1140 = vpop.permute.xlu0 %1139
        %v1143 = vadd.f32 %v1128, %v1138
        %v1144 = vadd.f32 %v1129, %v1140
        %s1145 = sadd.s32 %s748, 57
        %s1146 = sld [smem:[#allocation4 + %s1145]]
        %v1147 = vstv %s1146
        %v1148 = vmul.f32 %v745, %v1147
        %v1149 = vmul.f32 %v746, %v1147
        %v1150 = vmul.f32 %v747, %v1147
        %v1154 = vrot.slane %v1148, 1
        %v1155 = vrot.slane %v1149, 1
        %v1156 = vsel %vm764, %v1154, %v1155
        %v1157 = vrot.slane %v1150, 1
        %v1158 = vsel %vm764, %v1155, %v1157
        %1159 = vrot.lane.b32.xlu0 %v1156, 127
        %v1160 = vpop.permute.xlu0 %1159
        %1161 = vrot.lane.b32.xlu0 %v1158, 127
        %v1162 = vpop.permute.xlu0 %1161
        %v1165 = vadd.f32 %v1143, %v1160
        %v1166 = vadd.f32 %v1144, %v1162
        %s1167 = sadd.s32 %s748, 64
        %s1168 = sld [smem:[#allocation4 + %s1167]]
        %v1169 = vstv %s1168
        %v1170 = vmul.f32 %v745, %v1169
        %v1171 = vmul.f32 %v746, %v1169
        %v1172 = vmul.f32 %v747, %v1169
        %v1176 = vrot.slane %v1170, 2
        %v1177 = vrot.slane %v1171, 2
        %v1178 = vsel %vm783, %v1176, %v1177
        %v1179 = vrot.slane %v1172, 2
        %v1180 = vsel %vm783, %v1177, %v1179
        %1181 = vrot.lane.b32.xlu0 %v1178, 127
        %v1182 = vpop.permute.xlu0 %1181
        %1183 = vrot.lane.b32.xlu0 %v1180, 127
        %v1184 = vpop.permute.xlu0 %1183
        %v1187 = vadd.f32 %v1165, %v1182
        %v1188 = vadd.f32 %v1166, %v1184
        %s1189 = sadd.s32 %s748, 71
        %s1190 = sld [smem:[#allocation4 + %s1189]]
        %v1191 = vstv %s1190
        %v1192 = vmul.f32 %v745, %v1191
        %v1193 = vmul.f32 %v746, %v1191
        %v1194 = vmul.f32 %v747, %v1191
        %v1198 = vrot.slane %v1192, 3
        %v1199 = vrot.slane %v1193, 3
        %v1200 = vsel %vm802, %v1198, %v1199
        %v1201 = vrot.slane %v1194, 3
        %v1202 = vsel %vm802, %v1199, %v1201
        %1203 = vrot.lane.b32.xlu0 %v1200, 127
        %v1204 = vpop.permute.xlu0 %1203
        %1205 = vrot.lane.b32.xlu0 %v1202, 127
        %v1206 = vpop.permute.xlu0 %1205
        %v1209 = vadd.f32 %v1187, %v1204
        %v1210 = vadd.f32 %v1188, %v1206
        %s1211 = sadd.s32 %s748, 78
        %s1212 = sld [smem:[#allocation4 + %s1211]]
        %v1213 = vstv %s1212
        %v1214 = vmul.f32 %v745, %v1213
        %v1215 = vmul.f32 %v746, %v1213
        %v1216 = vmul.f32 %v747, %v1213
        %v1220 = vrot.slane %v1214, 4
        %v1221 = vrot.slane %v1215, 4
        %v1222 = vsel %vm821, %v1220, %v1221
        %v1223 = vrot.slane %v1216, 4
        %v1224 = vsel %vm821, %v1221, %v1223
        %1225 = vrot.lane.b32.xlu0 %v1222, 127
        %v1226 = vpop.permute.xlu0 %1225
        %1227 = vrot.lane.b32.xlu0 %v1224, 127
        %v1228 = vpop.permute.xlu0 %1227
        %v1231 = vadd.f32 %v1209, %v1226
        %v1232 = vadd.f32 %v1210, %v1228
        %s1233 = sadd.s32 %s748, 85
        %s1234 = sld [smem:[#allocation4 + %s1233]]
        %v1235 = vstv %s1234
        %v1236 = vmul.f32 %v745, %v1235
        %v1237 = vmul.f32 %v746, %v1235
        %v1238 = vmul.f32 %v747, %v1235
        %v1242 = vrot.slane %v1236, 5
        %v1243 = vrot.slane %v1237, 5
        %v1244 = vsel %vm840, %v1242, %v1243
        %v1245 = vrot.slane %v1238, 5
        %v1246 = vsel %vm840, %v1243, %v1245
        %1247 = vrot.lane.b32.xlu0 %v1244, 127
        %v1248 = vpop.permute.xlu0 %1247
        %1249 = vrot.lane.b32.xlu0 %v1246, 127
        %v1250 = vpop.permute.xlu0 %1249
        %v1253 = vadd.f32 %v1231, %v1248
        %v1254 = vadd.f32 %v1232, %v1250
        %s1255 = sadd.s32 %s748, 92
        %s1256 = sld [smem:[#allocation4 + %s1255]]
        %v1257 = vstv %s1256
        %v1258 = vmul.f32 %v745, %v1257
        %v1259 = vmul.f32 %v746, %v1257
        %v1260 = vmul.f32 %v747, %v1257
        %v1264 = vrot.slane %v1258, 6
        %v1265 = vrot.slane %v1259, 6
        %v1266 = vsel %vm479, %v1264, %v1265
        %v1267 = vrot.slane %v1260, 6
        %v1268 = vsel %vm479, %v1265, %v1267
        %1269 = vrot.lane.b32.xlu0 %v1266, 127
        %v1270 = vpop.permute.xlu0 %1269
        %1271 = vrot.lane.b32.xlu0 %v1268, 127
        %v1272 = vpop.permute.xlu0 %1271
        %v1275 = vadd.f32 %v1253, %v1270
        %v1276 = vadd.f32 %v1254, %v1272
        %s1277 = sadd.s32 %s748, 2
        %s1278 = sld [smem:[#allocation4 + %s1277]]
        %v1279 = vstv %s1278
        %v1280 = vmul.f32 %v742, %v1279
        %v1281 = vmul.f32 %v743, %v1279
        %1284 = vrot.lane.b32.xlu0 %v1280, 126
        %v1285 = vpop.permute.xlu0 %1284
        %1286 = vrot.lane.b32.xlu0 %v1281, 126
        %v1287 = vpop.permute.xlu0 %1286
        %v1290 = vadd.f32 %v1275, %v1285
        %v1291 = vadd.f32 %v1276, %v1287
        %s1292 = sadd.s32 %s748, 9
        %s1293 = sld [smem:[#allocation4 + %s1292]]
        %v1294 = vstv %s1293
        %v1295 = vmul.f32 %v742, %v1294
        %v1296 = vmul.f32 %v743, %v1294
        %v1297 = vmul.f32 %v744, %v1294
        %v1301 = vrot.slane %v1295, 1
        %v1302 = vrot.slane %v1296, 1
        %v1303 = vsel %vm764, %v1301, %v1302
        %v1304 = vrot.slane %v1297, 1
        %v1305 = vsel %vm764, %v1302, %v1304
        %1306 = vrot.lane.b32.xlu0 %v1303, 126
        %v1307 = vpop.permute.xlu0 %1306
        %1308 = vrot.lane.b32.xlu0 %v1305, 126
        %v1309 = vpop.permute.xlu0 %1308
        %v1312 = vadd.f32 %v1290, %v1307
        %v1313 = vadd.f32 %v1291, %v1309
        %s1314 = sadd.s32 %s748, 16
        %s1315 = sld [smem:[#allocation4 + %s1314]]
        %v1316 = vstv %s1315
        %v1317 = vmul.f32 %v742, %v1316
        %v1318 = vmul.f32 %v743, %v1316
        %v1319 = vmul.f32 %v744, %v1316
        %v1323 = vrot.slane %v1317, 2
        %v1324 = vrot.slane %v1318, 2
        %v1325 = vsel %vm783, %v1323, %v1324
        %v1326 = vrot.slane %v1319, 2
        %v1327 = vsel %vm783, %v1324, %v1326
        %1328 = vrot.lane.b32.xlu0 %v1325, 126
        %v1329 = vpop.permute.xlu0 %1328
        %1330 = vrot.lane.b32.xlu0 %v1327, 126
        %v1331 = vpop.permute.xlu0 %1330
        %v1334 = vadd.f32 %v1312, %v1329
        %v1335 = vadd.f32 %v1313, %v1331
        %s1336 = sadd.s32 %s748, 23
        %s1337 = sld [smem:[#allocation4 + %s1336]]
        %v1338 = vstv %s1337
        %v1339 = vmul.f32 %v742, %v1338
        %v1340 = vmul.f32 %v743, %v1338
        %v1341 = vmul.f32 %v744, %v1338
        %v1345 = vrot.slane %v1339, 3
        %v1346 = vrot.slane %v1340, 3
        %v1347 = vsel %vm802, %v1345, %v1346
        %v1348 = vrot.slane %v1341, 3
        %v1349 = vsel %vm802, %v1346, %v1348
        %1350 = vrot.lane.b32.xlu0 %v1347, 126
        %v1351 = vpop.permute.xlu0 %1350
        %1352 = vrot.lane.b32.xlu0 %v1349, 126
        %v1353 = vpop.permute.xlu0 %1352
        %v1356 = vadd.f32 %v1334, %v1351
        %v1357 = vadd.f32 %v1335, %v1353
        %s1358 = sadd.s32 %s748, 30
        %s1359 = sld [smem:[#allocation4 + %s1358]]
        %v1360 = vstv %s1359
        %v1361 = vmul.f32 %v742, %v1360
        %v1362 = vmul.f32 %v743, %v1360
        %v1363 = vmul.f32 %v744, %v1360
        %v1367 = vrot.slane %v1361, 4
        %v1368 = vrot.slane %v1362, 4
        %v1369 = vsel %vm821, %v1367, %v1368
        %v1370 = vrot.slane %v1363, 4
        %v1371 = vsel %vm821, %v1368, %v1370
        %1372 = vrot.lane.b32.xlu0 %v1369, 126
        %v1373 = vpop.permute.xlu0 %1372
        %1374 = vrot.lane.b32.xlu0 %v1371, 126
        %v1375 = vpop.permute.xlu0 %1374
        %v1378 = vadd.f32 %v1356, %v1373
        %v1379 = vadd.f32 %v1357, %v1375
        %s1380 = sadd.s32 %s748, 37
        %s1381 = sld [smem:[#allocation4 + %s1380]]
        %v1382 = vstv %s1381
        %v1383 = vmul.f32 %v742, %v1382
        %v1384 = vmul.f32 %v743, %v1382
        %v1385 = vmul.f32 %v744, %v1382
        %v1389 = vrot.slane %v1383, 5
        %v1390 = vrot.slane %v1384, 5
        %v1391 = vsel %vm840, %v1389, %v1390
        %v1392 = vrot.slane %v1385, 5
        %v1393 = vsel %vm840, %v1390, %v1392
        %1394 = vrot.lane.b32.xlu0 %v1391, 126
        %v1395 = vpop.permute.xlu0 %1394
        %1396 = vrot.lane.b32.xlu0 %v1393, 126
        %v1397 = vpop.permute.xlu0 %1396
        %v1400 = vadd.f32 %v1378, %v1395
        %v1401 = vadd.f32 %v1379, %v1397
        %s1402 = sadd.s32 %s748, 44
        %s1403 = sld [smem:[#allocation4 + %s1402]]
        %v1404 = vstv %s1403
        %v1405 = vmul.f32 %v742, %v1404
        %v1406 = vmul.f32 %v743, %v1404
        %v1407 = vmul.f32 %v744, %v1404
        %v1411 = vrot.slane %v1405, 6
        %v1412 = vrot.slane %v1406, 6
        %v1413 = vsel %vm479, %v1411, %v1412
        %v1414 = vrot.slane %v1407, 6
        %v1415 = vsel %vm479, %v1412, %v1414
        %1416 = vrot.lane.b32.xlu0 %v1413, 126
        %v1417 = vpop.permute.xlu0 %1416
        %1418 = vrot.lane.b32.xlu0 %v1415, 126
        %v1419 = vpop.permute.xlu0 %1418
        %v1422 = vadd.f32 %v1400, %v1417
        %v1423 = vadd.f32 %v1401, %v1419
        %s1424 = sadd.s32 %s748, 51
        %s1425 = sld [smem:[#allocation4 + %s1424]]
        %v1426 = vstv %s1425
        %v1427 = vmul.f32 %v745, %v1426
        %v1428 = vmul.f32 %v746, %v1426
        %1431 = vrot.lane.b32.xlu0 %v1427, 126
        %v1432 = vpop.permute.xlu0 %1431
        %1433 = vrot.lane.b32.xlu0 %v1428, 126
        %v1434 = vpop.permute.xlu0 %1433
        %v1437 = vadd.f32 %v1422, %v1432
        %v1438 = vadd.f32 %v1423, %v1434
        %s1439 = sadd.s32 %s748, 58
        %s1440 = sld [smem:[#allocation4 + %s1439]]
        %v1441 = vstv %s1440
        %v1442 = vmul.f32 %v745, %v1441
        %v1443 = vmul.f32 %v746, %v1441
        %v1444 = vmul.f32 %v747, %v1441
        %v1448 = vrot.slane %v1442, 1
        %v1449 = vrot.slane %v1443, 1
        %v1450 = vsel %vm764, %v1448, %v1449
        %v1451 = vrot.slane %v1444, 1
        %v1452 = vsel %vm764, %v1449, %v1451
        %1453 = vrot.lane.b32.xlu0 %v1450, 126
        %v1454 = vpop.permute.xlu0 %1453
        %1455 = vrot.lane.b32.xlu0 %v1452, 126
        %v1456 = vpop.permute.xlu0 %1455
        %v1459 = vadd.f32 %v1437, %v1454
        %v1460 = vadd.f32 %v1438, %v1456
        %s1461 = sadd.s32 %s748, 65
        %s1462 = sld [smem:[#allocation4 + %s1461]]
        %v1463 = vstv %s1462
        %v1464 = vmul.f32 %v745, %v1463
        %v1465 = vmul.f32 %v746, %v1463
        %v1466 = vmul.f32 %v747, %v1463
        %v1470 = vrot.slane %v1464, 2
        %v1471 = vrot.slane %v1465, 2
        %v1472 = vsel %vm783, %v1470, %v1471
        %v1473 = vrot.slane %v1466, 2
        %v1474 = vsel %vm783, %v1471, %v1473
        %1475 = vrot.lane.b32.xlu0 %v1472, 126
        %v1476 = vpop.permute.xlu0 %1475
        %1477 = vrot.lane.b32.xlu0 %v1474, 126
        %v1478 = vpop.permute.xlu0 %1477
        %v1481 = vadd.f32 %v1459, %v1476
        %v1482 = vadd.f32 %v1460, %v1478
        %s1483 = sadd.s32 %s748, 72
        %s1484 = sld [smem:[#allocation4 + %s1483]]
        %v1485 = vstv %s1484
        %v1486 = vmul.f32 %v745, %v1485
        %v1487 = vmul.f32 %v746, %v1485
        %v1488 = vmul.f32 %v747, %v1485
        %v1492 = vrot.slane %v1486, 3
        %v1493 = vrot.slane %v1487, 3
        %v1494 = vsel %vm802, %v1492, %v1493
        %v1495 = vrot.slane %v1488, 3
        %v1496 = vsel %vm802, %v1493, %v1495
        %1497 = vrot.lane.b32.xlu0 %v1494, 126
        %v1498 = vpop.permute.xlu0 %1497
        %1499 = vrot.lane.b32.xlu0 %v1496, 126
        %v1500 = vpop.permute.xlu0 %1499
        %v1503 = vadd.f32 %v1481, %v1498
        %v1504 = vadd.f32 %v1482, %v1500
        %s1505 = sadd.s32 %s748, 79
        %s1506 = sld [smem:[#allocation4 + %s1505]]
        %v1507 = vstv %s1506
        %v1508 = vmul.f32 %v745, %v1507
        %v1509 = vmul.f32 %v746, %v1507
        %v1510 = vmul.f32 %v747, %v1507
        %v1514 = vrot.slane %v1508, 4
        %v1515 = vrot.slane %v1509, 4
        %v1516 = vsel %vm821, %v1514, %v1515
        %v1517 = vrot.slane %v1510, 4
        %v1518 = vsel %vm821, %v1515, %v1517
        %1519 = vrot.lane.b32.xlu0 %v1516, 126
        %v1520 = vpop.permute.xlu0 %1519
        %1521 = vrot.lane.b32.xlu0 %v1518, 126
        %v1522 = vpop.permute.xlu0 %1521
        %v1525 = vadd.f32 %v1503, %v1520
        %v1526 = vadd.f32 %v1504, %v1522
        %s1527 = sadd.s32 %s748, 86
        %s1528 = sld [smem:[#allocation4 + %s1527]]
        %v1529 = vstv %s1528
        %v1530 = vmul.f32 %v745, %v1529
        %v1531 = vmul.f32 %v746, %v1529
        %v1532 = vmul.f32 %v747, %v1529
        %v1536 = vrot.slane %v1530, 5
        %v1537 = vrot.slane %v1531, 5
        %v1538 = vsel %vm840, %v1536, %v1537
        %v1539 = vrot.slane %v1532, 5
        %v1540 = vsel %vm840, %v1537, %v1539
        %1541 = vrot.lane.b32.xlu0 %v1538, 126
        %v1542 = vpop.permute.xlu0 %1541
        %1543 = vrot.lane.b32.xlu0 %v1540, 126
        %v1544 = vpop.permute.xlu0 %1543
        %v1547 = vadd.f32 %v1525, %v1542
        %v1548 = vadd.f32 %v1526, %v1544
        %s1549 = sadd.s32 %s748, 93
        %s1550 = sld [smem:[#allocation4 + %s1549]]
        %v1551 = vstv %s1550
        %v1552 = vmul.f32 %v745, %v1551
        %v1553 = vmul.f32 %v746, %v1551
        %v1554 = vmul.f32 %v747, %v1551
        %v1558 = vrot.slane %v1552, 6
        %v1559 = vrot.slane %v1553, 6
        %v1560 = vsel %vm479, %v1558, %v1559
        %v1561 = vrot.slane %v1554, 6
        %v1562 = vsel %vm479, %v1559, %v1561
        %1563 = vrot.lane.b32.xlu0 %v1560, 126
        %v1564 = vpop.permute.xlu0 %1563
        %1565 = vrot.lane.b32.xlu0 %v1562, 126
        %v1566 = vpop.permute.xlu0 %1565
        %v1569 = vadd.f32 %v1547, %v1564
        %v1570 = vadd.f32 %v1548, %v1566
        %s1571 = sadd.s32 %s748, 3
        %s1572 = sld [smem:[#allocation4 + %s1571]]
        %v1573 = vstv %s1572
        %v1574 = vmul.f32 %v742, %v1573
        %v1575 = vmul.f32 %v743, %v1573
        %1578 = vrot.lane.b32.xlu0 %v1574, 125
        %v1579 = vpop.permute.xlu0 %1578
        %1580 = vrot.lane.b32.xlu0 %v1575, 125
        %v1581 = vpop.permute.xlu0 %1580
        %v1584 = vadd.f32 %v1569, %v1579
        %v1585 = vadd.f32 %v1570, %v1581
        %s1586 = sadd.s32 %s748, 10
        %s1587 = sld [smem:[#allocation4 + %s1586]]
        %v1588 = vstv %s1587
        %v1589 = vmul.f32 %v742, %v1588
        %v1590 = vmul.f32 %v743, %v1588
        %v1591 = vmul.f32 %v744, %v1588
        %v1595 = vrot.slane %v1589, 1
        %v1596 = vrot.slane %v1590, 1
        %v1597 = vsel %vm764, %v1595, %v1596
        %v1598 = vrot.slane %v1591, 1
        %v1599 = vsel %vm764, %v1596, %v1598
        %1600 = vrot.lane.b32.xlu0 %v1597, 125
        %v1601 = vpop.permute.xlu0 %1600
        %1602 = vrot.lane.b32.xlu0 %v1599, 125
        %v1603 = vpop.permute.xlu0 %1602
        %v1606 = vadd.f32 %v1584, %v1601
        %v1607 = vadd.f32 %v1585, %v1603
        %s1608 = sadd.s32 %s748, 17
        %s1609 = sld [smem:[#allocation4 + %s1608]]
        %v1610 = vstv %s1609
        %v1611 = vmul.f32 %v742, %v1610
        %v1612 = vmul.f32 %v743, %v1610
        %v1613 = vmul.f32 %v744, %v1610
        %v1617 = vrot.slane %v1611, 2
        %v1618 = vrot.slane %v1612, 2
        %v1619 = vsel %vm783, %v1617, %v1618
        %v1620 = vrot.slane %v1613, 2
        %v1621 = vsel %vm783, %v1618, %v1620
        %1622 = vrot.lane.b32.xlu0 %v1619, 125
        %v1623 = vpop.permute.xlu0 %1622
        %1624 = vrot.lane.b32.xlu0 %v1621, 125
        %v1625 = vpop.permute.xlu0 %1624
        %v1628 = vadd.f32 %v1606, %v1623
        %v1629 = vadd.f32 %v1607, %v1625
        %s1630 = sadd.s32 %s748, 24
        %s1631 = sld [smem:[#allocation4 + %s1630]]
        %v1632 = vstv %s1631
        %v1633 = vmul.f32 %v742, %v1632
        %v1634 = vmul.f32 %v743, %v1632
        %v1635 = vmul.f32 %v744, %v1632
        %v1639 = vrot.slane %v1633, 3
        %v1640 = vrot.slane %v1634, 3
        %v1641 = vsel %vm802, %v1639, %v1640
        %v1642 = vrot.slane %v1635, 3
        %v1643 = vsel %vm802, %v1640, %v1642
        %1644 = vrot.lane.b32.xlu0 %v1641, 125
        %v1645 = vpop.permute.xlu0 %1644
        %1646 = vrot.lane.b32.xlu0 %v1643, 125
        %v1647 = vpop.permute.xlu0 %1646
        %v1650 = vadd.f32 %v1628, %v1645
        %v1651 = vadd.f32 %v1629, %v1647
        %s1652 = sadd.s32 %s748, 31
        %s1653 = sld [smem:[#allocation4 + %s1652]]
        %v1654 = vstv %s1653
        %v1655 = vmul.f32 %v742, %v1654
        %v1656 = vmul.f32 %v743, %v1654
        %v1657 = vmul.f32 %v744, %v1654
        %v1661 = vrot.slane %v1655, 4
        %v1662 = vrot.slane %v1656, 4
        %v1663 = vsel %vm821, %v1661, %v1662
        %v1664 = vrot.slane %v1657, 4
        %v1665 = vsel %vm821, %v1662, %v1664
        %1666 = vrot.lane.b32.xlu0 %v1663, 125
        %v1667 = vpop.permute.xlu0 %1666
        %1668 = vrot.lane.b32.xlu0 %v1665, 125
        %v1669 = vpop.permute.xlu0 %1668
        %v1672 = vadd.f32 %v1650, %v1667
        %v1673 = vadd.f32 %v1651, %v1669
        %s1674 = sadd.s32 %s748, 38
        %s1675 = sld [smem:[#allocation4 + %s1674]]
        %v1676 = vstv %s1675
        %v1677 = vmul.f32 %v742, %v1676
        %v1678 = vmul.f32 %v743, %v1676
        %v1679 = vmul.f32 %v744, %v1676
        %v1683 = vrot.slane %v1677, 5
        %v1684 = vrot.slane %v1678, 5
        %v1685 = vsel %vm840, %v1683, %v1684
        %v1686 = vrot.slane %v1679, 5
        %v1687 = vsel %vm840, %v1684, %v1686
        %1688 = vrot.lane.b32.xlu0 %v1685, 125
        %v1689 = vpop.permute.xlu0 %1688
        %1690 = vrot.lane.b32.xlu0 %v1687, 125
        %v1691 = vpop.permute.xlu0 %1690
        %v1694 = vadd.f32 %v1672, %v1689
        %v1695 = vadd.f32 %v1673, %v1691
        %s1696 = sadd.s32 %s748, 45
        %s1697 = sld [smem:[#allocation4 + %s1696]]
        %v1698 = vstv %s1697
        %v1699 = vmul.f32 %v742, %v1698
        %v1700 = vmul.f32 %v743, %v1698
        %v1701 = vmul.f32 %v744, %v1698
        %v1705 = vrot.slane %v1699, 6
        %v1706 = vrot.slane %v1700, 6
        %v1707 = vsel %vm479, %v1705, %v1706
        %v1708 = vrot.slane %v1701, 6
        %v1709 = vsel %vm479, %v1706, %v1708
        %1710 = vrot.lane.b32.xlu0 %v1707, 125
        %v1711 = vpop.permute.xlu0 %1710
        %1712 = vrot.lane.b32.xlu0 %v1709, 125
        %v1713 = vpop.permute.xlu0 %1712
        %v1716 = vadd.f32 %v1694, %v1711
        %v1717 = vadd.f32 %v1695, %v1713
        %s1718 = sadd.s32 %s748, 52
        %s1719 = sld [smem:[#allocation4 + %s1718]]
        %v1720 = vstv %s1719
        %v1721 = vmul.f32 %v745, %v1720
        %v1722 = vmul.f32 %v746, %v1720
        %1725 = vrot.lane.b32.xlu0 %v1721, 125
        %v1726 = vpop.permute.xlu0 %1725
        %1727 = vrot.lane.b32.xlu0 %v1722, 125
        %v1728 = vpop.permute.xlu0 %1727
        %v1731 = vadd.f32 %v1716, %v1726
        %v1732 = vadd.f32 %v1717, %v1728
        %s1733 = sadd.s32 %s748, 59
        %s1734 = sld [smem:[#allocation4 + %s1733]]
        %v1735 = vstv %s1734
        %v1736 = vmul.f32 %v745, %v1735
        %v1737 = vmul.f32 %v746, %v1735
        %v1738 = vmul.f32 %v747, %v1735
        %v1742 = vrot.slane %v1736, 1
        %v1743 = vrot.slane %v1737, 1
        %v1744 = vsel %vm764, %v1742, %v1743
        %v1745 = vrot.slane %v1738, 1
        %v1746 = vsel %vm764, %v1743, %v1745
        %1747 = vrot.lane.b32.xlu0 %v1744, 125
        %v1748 = vpop.permute.xlu0 %1747
        %1749 = vrot.lane.b32.xlu0 %v1746, 125
        %v1750 = vpop.permute.xlu0 %1749
        %v1753 = vadd.f32 %v1731, %v1748
        %v1754 = vadd.f32 %v1732, %v1750
        %s1755 = sadd.s32 %s748, 66
        %s1756 = sld [smem:[#allocation4 + %s1755]]
        %v1757 = vstv %s1756
        %v1758 = vmul.f32 %v745, %v1757
        %v1759 = vmul.f32 %v746, %v1757
        %v1760 = vmul.f32 %v747, %v1757
        %v1764 = vrot.slane %v1758, 2
        %v1765 = vrot.slane %v1759, 2
        %v1766 = vsel %vm783, %v1764, %v1765
        %v1767 = vrot.slane %v1760, 2
        %v1768 = vsel %vm783, %v1765, %v1767
        %1769 = vrot.lane.b32.xlu0 %v1766, 125
        %v1770 = vpop.permute.xlu0 %1769
        %1771 = vrot.lane.b32.xlu0 %v1768, 125
        %v1772 = vpop.permute.xlu0 %1771
        %v1775 = vadd.f32 %v1753, %v1770
        %v1776 = vadd.f32 %v1754, %v1772
        %s1777 = sadd.s32 %s748, 73
        %s1778 = sld [smem:[#allocation4 + %s1777]]
        %v1779 = vstv %s1778
        %v1780 = vmul.f32 %v745, %v1779
        %v1781 = vmul.f32 %v746, %v1779
        %v1782 = vmul.f32 %v747, %v1779
        %v1786 = vrot.slane %v1780, 3
        %v1787 = vrot.slane %v1781, 3
        %v1788 = vsel %vm802, %v1786, %v1787
        %v1789 = vrot.slane %v1782, 3
        %v1790 = vsel %vm802, %v1787, %v1789
        %1791 = vrot.lane.b32.xlu0 %v1788, 125
        %v1792 = vpop.permute.xlu0 %1791
        %1793 = vrot.lane.b32.xlu0 %v1790, 125
        %v1794 = vpop.permute.xlu0 %1793
        %v1797 = vadd.f32 %v1775, %v1792
        %v1798 = vadd.f32 %v1776, %v1794
        %s1799 = sadd.s32 %s748, 80
        %s1800 = sld [smem:[#allocation4 + %s1799]]
        %v1801 = vstv %s1800
        %v1802 = vmul.f32 %v745, %v1801
        %v1803 = vmul.f32 %v746, %v1801
        %v1804 = vmul.f32 %v747, %v1801
        %v1808 = vrot.slane %v1802, 4
        %v1809 = vrot.slane %v1803, 4
        %v1810 = vsel %vm821, %v1808, %v1809
        %v1811 = vrot.slane %v1804, 4
        %v1812 = vsel %vm821, %v1809, %v1811
        %1813 = vrot.lane.b32.xlu0 %v1810, 125
        %v1814 = vpop.permute.xlu0 %1813
        %1815 = vrot.lane.b32.xlu0 %v1812, 125
        %v1816 = vpop.permute.xlu0 %1815
        %v1819 = vadd.f32 %v1797, %v1814
        %v1820 = vadd.f32 %v1798, %v1816
        %s1821 = sadd.s32 %s748, 87
        %s1822 = sld [smem:[#allocation4 + %s1821]]
        %v1823 = vstv %s1822
        %v1824 = vmul.f32 %v745, %v1823
        %v1825 = vmul.f32 %v746, %v1823
        %v1826 = vmul.f32 %v747, %v1823
        %v1830 = vrot.slane %v1824, 5
        %v1831 = vrot.slane %v1825, 5
        %v1832 = vsel %vm840, %v1830, %v1831
        %v1833 = vrot.slane %v1826, 5
        %v1834 = vsel %vm840, %v1831, %v1833
        %1835 = vrot.lane.b32.xlu0 %v1832, 125
        %v1836 = vpop.permute.xlu0 %1835
        %1837 = vrot.lane.b32.xlu0 %v1834, 125
        %v1838 = vpop.permute.xlu0 %1837
        %v1841 = vadd.f32 %v1819, %v1836
        %v1842 = vadd.f32 %v1820, %v1838
        %s1843 = sadd.s32 %s748, 94
        %s1844 = sld [smem:[#allocation4 + %s1843]]
        %v1845 = vstv %s1844
        %v1846 = vmul.f32 %v745, %v1845
        %v1847 = vmul.f32 %v746, %v1845
        %v1848 = vmul.f32 %v747, %v1845
        %v1852 = vrot.slane %v1846, 6
        %v1853 = vrot.slane %v1847, 6
        %v1854 = vsel %vm479, %v1852, %v1853
        %v1855 = vrot.slane %v1848, 6
        %v1856 = vsel %vm479, %v1853, %v1855
        %1857 = vrot.lane.b32.xlu0 %v1854, 125
        %v1858 = vpop.permute.xlu0 %1857
        %1859 = vrot.lane.b32.xlu0 %v1856, 125
        %v1860 = vpop.permute.xlu0 %1859
        %v1863 = vadd.f32 %v1841, %v1858
        %v1864 = vadd.f32 %v1842, %v1860
        %s1865 = sadd.s32 %s748, 4
        %s1866 = sld [smem:[#allocation4 + %s1865]]
        %v1867 = vstv %s1866
        %v1868 = vmul.f32 %v742, %v1867
        %v1869 = vmul.f32 %v743, %v1867
        %1872 = vrot.lane.b32.xlu0 %v1868, 124
        %v1873 = vpop.permute.xlu0 %1872
        %1874 = vrot.lane.b32.xlu0 %v1869, 124
        %v1875 = vpop.permute.xlu0 %1874
        %v1878 = vadd.f32 %v1863, %v1873
        %v1879 = vadd.f32 %v1864, %v1875
        %s1880 = sadd.s32 %s748, 11
        %s1881 = sld [smem:[#allocation4 + %s1880]]
        %v1882 = vstv %s1881
        %v1883 = vmul.f32 %v742, %v1882
        %v1884 = vmul.f32 %v743, %v1882
        %v1885 = vmul.f32 %v744, %v1882
        %v1889 = vrot.slane %v1883, 1
        %v1890 = vrot.slane %v1884, 1
        %v1891 = vsel %vm764, %v1889, %v1890
        %v1892 = vrot.slane %v1885, 1
        %v1893 = vsel %vm764, %v1890, %v1892
        %1894 = vrot.lane.b32.xlu0 %v1891, 124
        %v1895 = vpop.permute.xlu0 %1894
        %1896 = vrot.lane.b32.xlu0 %v1893, 124
        %v1897 = vpop.permute.xlu0 %1896
        %v1900 = vadd.f32 %v1878, %v1895
        %v1901 = vadd.f32 %v1879, %v1897
        %s1902 = sadd.s32 %s748, 18
        %s1903 = sld [smem:[#allocation4 + %s1902]]
        %v1904 = vstv %s1903
        %v1905 = vmul.f32 %v742, %v1904
        %v1906 = vmul.f32 %v743, %v1904
        %v1907 = vmul.f32 %v744, %v1904
        %v1911 = vrot.slane %v1905, 2
        %v1912 = vrot.slane %v1906, 2
        %v1913 = vsel %vm783, %v1911, %v1912
        %v1914 = vrot.slane %v1907, 2
        %v1915 = vsel %vm783, %v1912, %v1914
        %1916 = vrot.lane.b32.xlu0 %v1913, 124
        %v1917 = vpop.permute.xlu0 %1916
        %1918 = vrot.lane.b32.xlu0 %v1915, 124
        %v1919 = vpop.permute.xlu0 %1918
        %v1922 = vadd.f32 %v1900, %v1917
        %v1923 = vadd.f32 %v1901, %v1919
        %s1924 = sadd.s32 %s748, 25
        %s1925 = sld [smem:[#allocation4 + %s1924]]
        %v1926 = vstv %s1925
        %v1927 = vmul.f32 %v742, %v1926
        %v1928 = vmul.f32 %v743, %v1926
        %v1929 = vmul.f32 %v744, %v1926
        %v1933 = vrot.slane %v1927, 3
        %v1934 = vrot.slane %v1928, 3
        %v1935 = vsel %vm802, %v1933, %v1934
        %v1936 = vrot.slane %v1929, 3
        %v1937 = vsel %vm802, %v1934, %v1936
        %1938 = vrot.lane.b32.xlu0 %v1935, 124
        %v1939 = vpop.permute.xlu0 %1938
        %1940 = vrot.lane.b32.xlu0 %v1937, 124
        %v1941 = vpop.permute.xlu0 %1940
        %v1944 = vadd.f32 %v1922, %v1939
        %v1945 = vadd.f32 %v1923, %v1941
        %s1946 = sadd.s32 %s748, 32
        %s1947 = sld [smem:[#allocation4 + %s1946]]
        %v1948 = vstv %s1947
        %v1949 = vmul.f32 %v742, %v1948
        %v1950 = vmul.f32 %v743, %v1948
        %v1951 = vmul.f32 %v744, %v1948
        %v1955 = vrot.slane %v1949, 4
        %v1956 = vrot.slane %v1950, 4
        %v1957 = vsel %vm821, %v1955, %v1956
        %v1958 = vrot.slane %v1951, 4
        %v1959 = vsel %vm821, %v1956, %v1958
        %1960 = vrot.lane.b32.xlu0 %v1957, 124
        %v1961 = vpop.permute.xlu0 %1960
        %1962 = vrot.lane.b32.xlu0 %v1959, 124
        %v1963 = vpop.permute.xlu0 %1962
        %v1966 = vadd.f32 %v1944, %v1961
        %v1967 = vadd.f32 %v1945, %v1963
        %s1968 = sadd.s32 %s748, 39
        %s1969 = sld [smem:[#allocation4 + %s1968]]
        %v1970 = vstv %s1969
        %v1971 = vmul.f32 %v742, %v1970
        %v1972 = vmul.f32 %v743, %v1970
        %v1973 = vmul.f32 %v744, %v1970
        %v1977 = vrot.slane %v1971, 5
        %v1978 = vrot.slane %v1972, 5
        %v1979 = vsel %vm840, %v1977, %v1978
        %v1980 = vrot.slane %v1973, 5
        %v1981 = vsel %vm840, %v1978, %v1980
        %1982 = vrot.lane.b32.xlu0 %v1979, 124
        %v1983 = vpop.permute.xlu0 %1982
        %1984 = vrot.lane.b32.xlu0 %v1981, 124
        %v1985 = vpop.permute.xlu0 %1984
        %v1988 = vadd.f32 %v1966, %v1983
        %v1989 = vadd.f32 %v1967, %v1985
        %s1990 = sadd.s32 %s748, 46
        %s1991 = sld [smem:[#allocation4 + %s1990]]
        %v1992 = vstv %s1991
        %v1993 = vmul.f32 %v742, %v1992
        %v1994 = vmul.f32 %v743, %v1992
        %v1995 = vmul.f32 %v744, %v1992
        %v1999 = vrot.slane %v1993, 6
        %v2000 = vrot.slane %v1994, 6
        %v2001 = vsel %vm479, %v1999, %v2000
        %v2002 = vrot.slane %v1995, 6
        %v2003 = vsel %vm479, %v2000, %v2002
        %2004 = vrot.lane.b32.xlu0 %v2001, 124
        %v2005 = vpop.permute.xlu0 %2004
        %2006 = vrot.lane.b32.xlu0 %v2003, 124
        %v2007 = vpop.permute.xlu0 %2006
        %v2010 = vadd.f32 %v1988, %v2005
        %v2011 = vadd.f32 %v1989, %v2007
        %s2012 = sadd.s32 %s748, 53
        %s2013 = sld [smem:[#allocation4 + %s2012]]
        %v2014 = vstv %s2013
        %v2015 = vmul.f32 %v745, %v2014
        %v2016 = vmul.f32 %v746, %v2014
        %2019 = vrot.lane.b32.xlu0 %v2015, 124
        %v2020 = vpop.permute.xlu0 %2019
        %2021 = vrot.lane.b32.xlu0 %v2016, 124
        %v2022 = vpop.permute.xlu0 %2021
        %v2025 = vadd.f32 %v2010, %v2020
        %v2026 = vadd.f32 %v2011, %v2022
        %s2027 = sadd.s32 %s748, 60
        %s2028 = sld [smem:[#allocation4 + %s2027]]
        %v2029 = vstv %s2028
        %v2030 = vmul.f32 %v745, %v2029
        %v2031 = vmul.f32 %v746, %v2029
        %v2032 = vmul.f32 %v747, %v2029
        %v2036 = vrot.slane %v2030, 1
        %v2037 = vrot.slane %v2031, 1
        %v2038 = vsel %vm764, %v2036, %v2037
        %v2039 = vrot.slane %v2032, 1
        %v2040 = vsel %vm764, %v2037, %v2039
        %2041 = vrot.lane.b32.xlu0 %v2038, 124
        %v2042 = vpop.permute.xlu0 %2041
        %2043 = vrot.lane.b32.xlu0 %v2040, 124
        %v2044 = vpop.permute.xlu0 %2043
        %v2047 = vadd.f32 %v2025, %v2042
        %v2048 = vadd.f32 %v2026, %v2044
        %s2049 = sadd.s32 %s748, 67
        %s2050 = sld [smem:[#allocation4 + %s2049]]
        %v2051 = vstv %s2050
        %v2052 = vmul.f32 %v745, %v2051
        %v2053 = vmul.f32 %v746, %v2051
        %v2054 = vmul.f32 %v747, %v2051
        %v2058 = vrot.slane %v2052, 2
        %v2059 = vrot.slane %v2053, 2
        %v2060 = vsel %vm783, %v2058, %v2059
        %v2061 = vrot.slane %v2054, 2
        %v2062 = vsel %vm783, %v2059, %v2061
        %2063 = vrot.lane.b32.xlu0 %v2060, 124
        %v2064 = vpop.permute.xlu0 %2063
        %2065 = vrot.lane.b32.xlu0 %v2062, 124
        %v2066 = vpop.permute.xlu0 %2065
        %v2069 = vadd.f32 %v2047, %v2064
        %v2070 = vadd.f32 %v2048, %v2066
        %s2071 = sadd.s32 %s748, 74
        %s2072 = sld [smem:[#allocation4 + %s2071]]
        %v2073 = vstv %s2072
        %v2074 = vmul.f32 %v745, %v2073
        %v2075 = vmul.f32 %v746, %v2073
        %v2076 = vmul.f32 %v747, %v2073
        %v2080 = vrot.slane %v2074, 3
        %v2081 = vrot.slane %v2075, 3
        %v2082 = vsel %vm802, %v2080, %v2081
        %v2083 = vrot.slane %v2076, 3
        %v2084 = vsel %vm802, %v2081, %v2083
        %2085 = vrot.lane.b32.xlu0 %v2082, 124
        %v2086 = vpop.permute.xlu0 %2085
        %2087 = vrot.lane.b32.xlu0 %v2084, 124
        %v2088 = vpop.permute.xlu0 %2087
        %v2091 = vadd.f32 %v2069, %v2086
        %v2092 = vadd.f32 %v2070, %v2088
        %s2093 = sadd.s32 %s748, 81
        %s2094 = sld [smem:[#allocation4 + %s2093]]
        %v2095 = vstv %s2094
        %v2096 = vmul.f32 %v745, %v2095
        %v2097 = vmul.f32 %v746, %v2095
        %v2098 = vmul.f32 %v747, %v2095
        %v2102 = vrot.slane %v2096, 4
        %v2103 = vrot.slane %v2097, 4
        %v2104 = vsel %vm821, %v2102, %v2103
        %v2105 = vrot.slane %v2098, 4
        %v2106 = vsel %vm821, %v2103, %v2105
        %2107 = vrot.lane.b32.xlu0 %v2104, 124
        %v2108 = vpop.permute.xlu0 %2107
        %2109 = vrot.lane.b32.xlu0 %v2106, 124
        %v2110 = vpop.permute.xlu0 %2109
        %v2113 = vadd.f32 %v2091, %v2108
        %v2114 = vadd.f32 %v2092, %v2110
        %s2115 = sadd.s32 %s748, 88
        %s2116 = sld [smem:[#allocation4 + %s2115]]
        %v2117 = vstv %s2116
        %v2118 = vmul.f32 %v745, %v2117
        %v2119 = vmul.f32 %v746, %v2117
        %v2120 = vmul.f32 %v747, %v2117
        %v2124 = vrot.slane %v2118, 5
        %v2125 = vrot.slane %v2119, 5
        %v2126 = vsel %vm840, %v2124, %v2125
        %v2127 = vrot.slane %v2120, 5
        %v2128 = vsel %vm840, %v2125, %v2127
        %2129 = vrot.lane.b32.xlu0 %v2126, 124
        %v2130 = vpop.permute.xlu0 %2129
        %2131 = vrot.lane.b32.xlu0 %v2128, 124
        %v2132 = vpop.permute.xlu0 %2131
        %v2135 = vadd.f32 %v2113, %v2130
        %v2136 = vadd.f32 %v2114, %v2132
        %s2137 = sadd.s32 %s748, 95
        %s2138 = sld [smem:[#allocation4 + %s2137]]
        %v2139 = vstv %s2138
        %v2140 = vmul.f32 %v745, %v2139
        %v2141 = vmul.f32 %v746, %v2139
        %v2142 = vmul.f32 %v747, %v2139
        %v2146 = vrot.slane %v2140, 6
        %v2147 = vrot.slane %v2141, 6
        %v2148 = vsel %vm479, %v2146, %v2147
        %v2149 = vrot.slane %v2142, 6
        %v2150 = vsel %vm479, %v2147, %v2149
        %2151 = vrot.lane.b32.xlu0 %v2148, 124
        %v2152 = vpop.permute.xlu0 %2151
        %2153 = vrot.lane.b32.xlu0 %v2150, 124
        %v2154 = vpop.permute.xlu0 %2153
        %v2157 = vadd.f32 %v2135, %v2152
        %v2158 = vadd.f32 %v2136, %v2154
        %s2159 = sadd.s32 %s748, 5
        %s2160 = sld [smem:[#allocation4 + %s2159]]
        %v2161 = vstv %s2160
        %v2162 = vmul.f32 %v742, %v2161
        %v2163 = vmul.f32 %v743, %v2161
        %2166 = vrot.lane.b32.xlu0 %v2162, 123
        %v2167 = vpop.permute.xlu0 %2166
        %2168 = vrot.lane.b32.xlu0 %v2163, 123
        %v2169 = vpop.permute.xlu0 %2168
        %v2172 = vadd.f32 %v2157, %v2167
        %v2173 = vadd.f32 %v2158, %v2169
        %s2174 = sadd.s32 %s748, 12
        %s2175 = sld [smem:[#allocation4 + %s2174]]
        %v2176 = vstv %s2175
        %v2177 = vmul.f32 %v742, %v2176
        %v2178 = vmul.f32 %v743, %v2176
        %v2179 = vmul.f32 %v744, %v2176
        %v2183 = vrot.slane %v2177, 1
        %v2184 = vrot.slane %v2178, 1
        %v2185 = vsel %vm764, %v2183, %v2184
        %v2186 = vrot.slane %v2179, 1
        %v2187 = vsel %vm764, %v2184, %v2186
        %2188 = vrot.lane.b32.xlu0 %v2185, 123
        %v2189 = vpop.permute.xlu0 %2188
        %2190 = vrot.lane.b32.xlu0 %v2187, 123
        %v2191 = vpop.permute.xlu0 %2190
        %v2194 = vadd.f32 %v2172, %v2189
        %v2195 = vadd.f32 %v2173, %v2191
        %s2196 = sadd.s32 %s748, 19
        %s2197 = sld [smem:[#allocation4 + %s2196]]
        %v2198 = vstv %s2197
        %v2199 = vmul.f32 %v742, %v2198
        %v2200 = vmul.f32 %v743, %v2198
        %v2201 = vmul.f32 %v744, %v2198
        %v2205 = vrot.slane %v2199, 2
        %v2206 = vrot.slane %v2200, 2
        %v2207 = vsel %vm783, %v2205, %v2206
        %v2208 = vrot.slane %v2201, 2
        %v2209 = vsel %vm783, %v2206, %v2208
        %2210 = vrot.lane.b32.xlu0 %v2207, 123
        %v2211 = vpop.permute.xlu0 %2210
        %2212 = vrot.lane.b32.xlu0 %v2209, 123
        %v2213 = vpop.permute.xlu0 %2212
        %v2216 = vadd.f32 %v2194, %v2211
        %v2217 = vadd.f32 %v2195, %v2213
        %s2218 = sadd.s32 %s748, 26
        %s2219 = sld [smem:[#allocation4 + %s2218]]
        %v2220 = vstv %s2219
        %v2221 = vmul.f32 %v742, %v2220
        %v2222 = vmul.f32 %v743, %v2220
        %v2223 = vmul.f32 %v744, %v2220
        %v2227 = vrot.slane %v2221, 3
        %v2228 = vrot.slane %v2222, 3
        %v2229 = vsel %vm802, %v2227, %v2228
        %v2230 = vrot.slane %v2223, 3
        %v2231 = vsel %vm802, %v2228, %v2230
        %2232 = vrot.lane.b32.xlu0 %v2229, 123
        %v2233 = vpop.permute.xlu0 %2232
        %2234 = vrot.lane.b32.xlu0 %v2231, 123
        %v2235 = vpop.permute.xlu0 %2234
        %v2238 = vadd.f32 %v2216, %v2233
        %v2239 = vadd.f32 %v2217, %v2235
        %s2240 = sadd.s32 %s748, 33
        %s2241 = sld [smem:[#allocation4 + %s2240]]
        %v2242 = vstv %s2241
        %v2243 = vmul.f32 %v742, %v2242
        %v2244 = vmul.f32 %v743, %v2242
        %v2245 = vmul.f32 %v744, %v2242
        %v2249 = vrot.slane %v2243, 4
        %v2250 = vrot.slane %v2244, 4
        %v2251 = vsel %vm821, %v2249, %v2250
        %v2252 = vrot.slane %v2245, 4
        %v2253 = vsel %vm821, %v2250, %v2252
        %2254 = vrot.lane.b32.xlu0 %v2251, 123
        %v2255 = vpop.permute.xlu0 %2254
        %2256 = vrot.lane.b32.xlu0 %v2253, 123
        %v2257 = vpop.permute.xlu0 %2256
        %v2260 = vadd.f32 %v2238, %v2255
        %v2261 = vadd.f32 %v2239, %v2257
        %s2262 = sadd.s32 %s748, 40
        %s2263 = sld [smem:[#allocation4 + %s2262]]
        %v2264 = vstv %s2263
        %v2265 = vmul.f32 %v742, %v2264
        %v2266 = vmul.f32 %v743, %v2264
        %v2267 = vmul.f32 %v744, %v2264
        %v2271 = vrot.slane %v2265, 5
        %v2272 = vrot.slane %v2266, 5
        %v2273 = vsel %vm840, %v2271, %v2272
        %v2274 = vrot.slane %v2267, 5
        %v2275 = vsel %vm840, %v2272, %v2274
        %2276 = vrot.lane.b32.xlu0 %v2273, 123
        %v2277 = vpop.permute.xlu0 %2276
        %2278 = vrot.lane.b32.xlu0 %v2275, 123
        %v2279 = vpop.permute.xlu0 %2278
        %v2282 = vadd.f32 %v2260, %v2277
        %v2283 = vadd.f32 %v2261, %v2279
        %s2284 = sadd.s32 %s748, 47
        %s2285 = sld [smem:[#allocation4 + %s2284]]
        %v2286 = vstv %s2285
        %v2287 = vmul.f32 %v742, %v2286
        %v2288 = vmul.f32 %v743, %v2286
        %v2289 = vmul.f32 %v744, %v2286
        %v2293 = vrot.slane %v2287, 6
        %v2294 = vrot.slane %v2288, 6
        %v2295 = vsel %vm479, %v2293, %v2294
        %v2296 = vrot.slane %v2289, 6
        %v2297 = vsel %vm479, %v2294, %v2296
        %2298 = vrot.lane.b32.xlu0 %v2295, 123
        %v2299 = vpop.permute.xlu0 %2298
        %2300 = vrot.lane.b32.xlu0 %v2297, 123
        %v2301 = vpop.permute.xlu0 %2300
        %v2304 = vadd.f32 %v2282, %v2299
        %v2305 = vadd.f32 %v2283, %v2301
        %s2306 = sadd.s32 %s748, 54
        %s2307 = sld [smem:[#allocation4 + %s2306]]
        %v2308 = vstv %s2307
        %v2309 = vmul.f32 %v745, %v2308
        %v2310 = vmul.f32 %v746, %v2308
        %2313 = vrot.lane.b32.xlu0 %v2309, 123
        %v2314 = vpop.permute.xlu0 %2313
        %2315 = vrot.lane.b32.xlu0 %v2310, 123
        %v2316 = vpop.permute.xlu0 %2315
        %v2319 = vadd.f32 %v2304, %v2314
        %v2320 = vadd.f32 %v2305, %v2316
        %s2321 = sadd.s32 %s748, 61
        %s2322 = sld [smem:[#allocation4 + %s2321]]
        %v2323 = vstv %s2322
        %v2324 = vmul.f32 %v745, %v2323
        %v2325 = vmul.f32 %v746, %v2323
        %v2326 = vmul.f32 %v747, %v2323
        %v2330 = vrot.slane %v2324, 1
        %v2331 = vrot.slane %v2325, 1
        %v2332 = vsel %vm764, %v2330, %v2331
        %v2333 = vrot.slane %v2326, 1
        %v2334 = vsel %vm764, %v2331, %v2333
        %2335 = vrot.lane.b32.xlu0 %v2332, 123
        %v2336 = vpop.permute.xlu0 %2335
        %2337 = vrot.lane.b32.xlu0 %v2334, 123
        %v2338 = vpop.permute.xlu0 %2337
        %v2341 = vadd.f32 %v2319, %v2336
        %v2342 = vadd.f32 %v2320, %v2338
        %s2343 = sadd.s32 %s748, 68
        %s2344 = sld [smem:[#allocation4 + %s2343]]
        %v2345 = vstv %s2344
        %v2346 = vmul.f32 %v745, %v2345
        %v2347 = vmul.f32 %v746, %v2345
        %v2348 = vmul.f32 %v747, %v2345
        %v2352 = vrot.slane %v2346, 2
        %v2353 = vrot.slane %v2347, 2
        %v2354 = vsel %vm783, %v2352, %v2353
        %v2355 = vrot.slane %v2348, 2
        %v2356 = vsel %vm783, %v2353, %v2355
        %2357 = vrot.lane.b32.xlu0 %v2354, 123
        %v2358 = vpop.permute.xlu0 %2357
        %2359 = vrot.lane.b32.xlu0 %v2356, 123
        %v2360 = vpop.permute.xlu0 %2359
        %v2363 = vadd.f32 %v2341, %v2358
        %v2364 = vadd.f32 %v2342, %v2360
        %s2365 = sadd.s32 %s748, 75
        %s2366 = sld [smem:[#allocation4 + %s2365]]
        %v2367 = vstv %s2366
        %v2368 = vmul.f32 %v745, %v2367
        %v2369 = vmul.f32 %v746, %v2367
        %v2370 = vmul.f32 %v747, %v2367
        %v2374 = vrot.slane %v2368, 3
        %v2375 = vrot.slane %v2369, 3
        %v2376 = vsel %vm802, %v2374, %v2375
        %v2377 = vrot.slane %v2370, 3
        %v2378 = vsel %vm802, %v2375, %v2377
        %2379 = vrot.lane.b32.xlu0 %v2376, 123
        %v2380 = vpop.permute.xlu0 %2379
        %2381 = vrot.lane.b32.xlu0 %v2378, 123
        %v2382 = vpop.permute.xlu0 %2381
        %v2385 = vadd.f32 %v2363, %v2380
        %v2386 = vadd.f32 %v2364, %v2382
        %s2387 = sadd.s32 %s748, 82
        %s2388 = sld [smem:[#allocation4 + %s2387]]
        %v2389 = vstv %s2388
        %v2390 = vmul.f32 %v745, %v2389
        %v2391 = vmul.f32 %v746, %v2389
        %v2392 = vmul.f32 %v747, %v2389
        %v2396 = vrot.slane %v2390, 4
        %v2397 = vrot.slane %v2391, 4
        %v2398 = vsel %vm821, %v2396, %v2397
        %v2399 = vrot.slane %v2392, 4
        %v2400 = vsel %vm821, %v2397, %v2399
        %2401 = vrot.lane.b32.xlu0 %v2398, 123
        %v2402 = vpop.permute.xlu0 %2401
        %2403 = vrot.lane.b32.xlu0 %v2400, 123
        %v2404 = vpop.permute.xlu0 %2403
        %v2407 = vadd.f32 %v2385, %v2402
        %v2408 = vadd.f32 %v2386, %v2404
        %s2409 = sadd.s32 %s748, 89
        %s2410 = sld [smem:[#allocation4 + %s2409]]
        %v2411 = vstv %s2410
        %v2412 = vmul.f32 %v745, %v2411
        %v2413 = vmul.f32 %v746, %v2411
        %v2414 = vmul.f32 %v747, %v2411
        %v2418 = vrot.slane %v2412, 5
        %v2419 = vrot.slane %v2413, 5
        %v2420 = vsel %vm840, %v2418, %v2419
        %v2421 = vrot.slane %v2414, 5
        %v2422 = vsel %vm840, %v2419, %v2421
        %2423 = vrot.lane.b32.xlu0 %v2420, 123
        %v2424 = vpop.permute.xlu0 %2423
        %2425 = vrot.lane.b32.xlu0 %v2422, 123
        %v2426 = vpop.permute.xlu0 %2425
        %v2429 = vadd.f32 %v2407, %v2424
        %v2430 = vadd.f32 %v2408, %v2426
        %s2431 = sadd.s32 %s748, 96
        %s2432 = sld [smem:[#allocation4 + %s2431]]
        %v2433 = vstv %s2432
        %v2434 = vmul.f32 %v745, %v2433
        %v2435 = vmul.f32 %v746, %v2433
        %v2436 = vmul.f32 %v747, %v2433
        %v2440 = vrot.slane %v2434, 6
        %v2441 = vrot.slane %v2435, 6
        %v2442 = vsel %vm479, %v2440, %v2441
        %v2443 = vrot.slane %v2436, 6
        %v2444 = vsel %vm479, %v2441, %v2443
        %2445 = vrot.lane.b32.xlu0 %v2442, 123
        %v2446 = vpop.permute.xlu0 %2445
        %2447 = vrot.lane.b32.xlu0 %v2444, 123
        %v2448 = vpop.permute.xlu0 %2447
        %v2451 = vadd.f32 %v2429, %v2446
        %v2452 = vadd.f32 %v2430, %v2448
        %s2453 = sadd.s32 %s748, 6
        %s2454 = sld [smem:[#allocation4 + %s2453]]
        %v2455 = vstv %s2454
        %v2456 = vmul.f32 %v742, %v2455
        %v2457 = vmul.f32 %v743, %v2455
        %2460 = vrot.lane.b32.xlu0 %v2456, 122
        %v2461 = vpop.permute.xlu0 %2460
        %2462 = vrot.lane.b32.xlu0 %v2457, 122
        %v2463 = vpop.permute.xlu0 %2462
        %v2466 = vadd.f32 %v2451, %v2461
        %v2467 = vadd.f32 %v2452, %v2463
        %s2468 = sadd.s32 %s748, 13
        %s2469 = sld [smem:[#allocation4 + %s2468]]
        %v2470 = vstv %s2469
        %v2471 = vmul.f32 %v742, %v2470
        %v2472 = vmul.f32 %v743, %v2470
        %v2473 = vmul.f32 %v744, %v2470
        %v2477 = vrot.slane %v2471, 1
        %v2478 = vrot.slane %v2472, 1
        %v2479 = vsel %vm764, %v2477, %v2478
        %v2480 = vrot.slane %v2473, 1
        %v2481 = vsel %vm764, %v2478, %v2480
        %2482 = vrot.lane.b32.xlu0 %v2479, 122
        %v2483 = vpop.permute.xlu0 %2482
        %2484 = vrot.lane.b32.xlu0 %v2481, 122
        %v2485 = vpop.permute.xlu0 %2484
        %v2488 = vadd.f32 %v2466, %v2483
        %v2489 = vadd.f32 %v2467, %v2485
        %s2490 = sadd.s32 %s748, 20
        %s2491 = sld [smem:[#allocation4 + %s2490]]
        %v2492 = vstv %s2491
        %v2493 = vmul.f32 %v742, %v2492
        %v2494 = vmul.f32 %v743, %v2492
        %v2495 = vmul.f32 %v744, %v2492
        %v2499 = vrot.slane %v2493, 2
        %v2500 = vrot.slane %v2494, 2
        %v2501 = vsel %vm783, %v2499, %v2500
        %v2502 = vrot.slane %v2495, 2
        %v2503 = vsel %vm783, %v2500, %v2502
        %2504 = vrot.lane.b32.xlu0 %v2501, 122
        %v2505 = vpop.permute.xlu0 %2504
        %2506 = vrot.lane.b32.xlu0 %v2503, 122
        %v2507 = vpop.permute.xlu0 %2506
        %v2510 = vadd.f32 %v2488, %v2505
        %v2511 = vadd.f32 %v2489, %v2507
        %s2512 = sadd.s32 %s748, 27
        %s2513 = sld [smem:[#allocation4 + %s2512]]
        %v2514 = vstv %s2513
        %v2515 = vmul.f32 %v742, %v2514
        %v2516 = vmul.f32 %v743, %v2514
        %v2517 = vmul.f32 %v744, %v2514
        %v2521 = vrot.slane %v2515, 3
        %v2522 = vrot.slane %v2516, 3
        %v2523 = vsel %vm802, %v2521, %v2522
        %v2524 = vrot.slane %v2517, 3
        %v2525 = vsel %vm802, %v2522, %v2524
        %2526 = vrot.lane.b32.xlu0 %v2523, 122
        %v2527 = vpop.permute.xlu0 %2526
        %2528 = vrot.lane.b32.xlu0 %v2525, 122
        %v2529 = vpop.permute.xlu0 %2528
        %v2532 = vadd.f32 %v2510, %v2527
        %v2533 = vadd.f32 %v2511, %v2529
        %s2534 = sadd.s32 %s748, 34
        %s2535 = sld [smem:[#allocation4 + %s2534]]
        %v2536 = vstv %s2535
        %v2537 = vmul.f32 %v742, %v2536
        %v2538 = vmul.f32 %v743, %v2536
        %v2539 = vmul.f32 %v744, %v2536
        %v2543 = vrot.slane %v2537, 4
        %v2544 = vrot.slane %v2538, 4
        %v2545 = vsel %vm821, %v2543, %v2544
        %v2546 = vrot.slane %v2539, 4
        %v2547 = vsel %vm821, %v2544, %v2546
        %2548 = vrot.lane.b32.xlu0 %v2545, 122
        %v2549 = vpop.permute.xlu0 %2548
        %2550 = vrot.lane.b32.xlu0 %v2547, 122
        %v2551 = vpop.permute.xlu0 %2550
        %v2554 = vadd.f32 %v2532, %v2549
        %v2555 = vadd.f32 %v2533, %v2551
        %s2556 = sadd.s32 %s748, 41
        %s2557 = sld [smem:[#allocation4 + %s2556]]
        %v2558 = vstv %s2557
        %v2559 = vmul.f32 %v742, %v2558
        %v2560 = vmul.f32 %v743, %v2558
        %v2561 = vmul.f32 %v744, %v2558
        %v2565 = vrot.slane %v2559, 5
        %v2566 = vrot.slane %v2560, 5
        %v2567 = vsel %vm840, %v2565, %v2566
        %v2568 = vrot.slane %v2561, 5
        %v2569 = vsel %vm840, %v2566, %v2568
        %2570 = vrot.lane.b32.xlu0 %v2567, 122
        %v2571 = vpop.permute.xlu0 %2570
        %2572 = vrot.lane.b32.xlu0 %v2569, 122
        %v2573 = vpop.permute.xlu0 %2572
        %v2576 = vadd.f32 %v2554, %v2571
        %v2577 = vadd.f32 %v2555, %v2573
        %s2578 = sadd.s32 %s748, 48
        %s2579 = sld [smem:[#allocation4 + %s2578]]
        %v2580 = vstv %s2579
        %v2581 = vmul.f32 %v742, %v2580
        %v2582 = vmul.f32 %v743, %v2580
        %v2583 = vmul.f32 %v744, %v2580
        %v2587 = vrot.slane %v2581, 6
        %v2588 = vrot.slane %v2582, 6
        %v2589 = vsel %vm479, %v2587, %v2588
        %v2590 = vrot.slane %v2583, 6
        %v2591 = vsel %vm479, %v2588, %v2590
        %2592 = vrot.lane.b32.xlu0 %v2589, 122
        %v2593 = vpop.permute.xlu0 %2592
        %2594 = vrot.lane.b32.xlu0 %v2591, 122
        %v2595 = vpop.permute.xlu0 %2594
        %v2598 = vadd.f32 %v2576, %v2593
        %v2599 = vadd.f32 %v2577, %v2595
        %s2600 = sadd.s32 %s748, 55
        %s2601 = sld [smem:[#allocation4 + %s2600]]
        %v2602 = vstv %s2601
        %v2603 = vmul.f32 %v745, %v2602
        %v2604 = vmul.f32 %v746, %v2602
        %2607 = vrot.lane.b32.xlu0 %v2603, 122
        %v2608 = vpop.permute.xlu0 %2607
        %2609 = vrot.lane.b32.xlu0 %v2604, 122
        %v2610 = vpop.permute.xlu0 %2609
        %v2613 = vadd.f32 %v2598, %v2608
        %v2614 = vadd.f32 %v2599, %v2610
        %s2615 = sadd.s32 %s748, 62
        %s2616 = sld [smem:[#allocation4 + %s2615]]
        %v2617 = vstv %s2616
        %v2618 = vmul.f32 %v745, %v2617
        %v2619 = vmul.f32 %v746, %v2617
        %v2620 = vmul.f32 %v747, %v2617
        %v2624 = vrot.slane %v2618, 1
        %v2625 = vrot.slane %v2619, 1
        %v2626 = vsel %vm764, %v2624, %v2625
        %v2627 = vrot.slane %v2620, 1
        %v2628 = vsel %vm764, %v2625, %v2627
        %2629 = vrot.lane.b32.xlu0 %v2626, 122
        %v2630 = vpop.permute.xlu0 %2629
        %2631 = vrot.lane.b32.xlu0 %v2628, 122
        %v2632 = vpop.permute.xlu0 %2631
        %v2635 = vadd.f32 %v2613, %v2630
        %v2636 = vadd.f32 %v2614, %v2632
        %s2637 = sadd.s32 %s748, 69
        %s2638 = sld [smem:[#allocation4 + %s2637]]
        %v2639 = vstv %s2638
        %v2640 = vmul.f32 %v745, %v2639
        %v2641 = vmul.f32 %v746, %v2639
        %v2642 = vmul.f32 %v747, %v2639
        %v2646 = vrot.slane %v2640, 2
        %v2647 = vrot.slane %v2641, 2
        %v2648 = vsel %vm783, %v2646, %v2647
        %v2649 = vrot.slane %v2642, 2
        %v2650 = vsel %vm783, %v2647, %v2649
        %2651 = vrot.lane.b32.xlu0 %v2648, 122
        %v2652 = vpop.permute.xlu0 %2651
        %2653 = vrot.lane.b32.xlu0 %v2650, 122
        %v2654 = vpop.permute.xlu0 %2653
        %v2657 = vadd.f32 %v2635, %v2652
        %v2658 = vadd.f32 %v2636, %v2654
        %s2659 = sadd.s32 %s748, 76
        %s2660 = sld [smem:[#allocation4 + %s2659]]
        %v2661 = vstv %s2660
        %v2662 = vmul.f32 %v745, %v2661
        %v2663 = vmul.f32 %v746, %v2661
        %v2664 = vmul.f32 %v747, %v2661
        %v2668 = vrot.slane %v2662, 3
        %v2669 = vrot.slane %v2663, 3
        %v2670 = vsel %vm802, %v2668, %v2669
        %v2671 = vrot.slane %v2664, 3
        %v2672 = vsel %vm802, %v2669, %v2671
        %2673 = vrot.lane.b32.xlu0 %v2670, 122
        %v2674 = vpop.permute.xlu0 %2673
        %2675 = vrot.lane.b32.xlu0 %v2672, 122
        %v2676 = vpop.permute.xlu0 %2675
        %v2679 = vadd.f32 %v2657, %v2674
        %v2680 = vadd.f32 %v2658, %v2676
        %s2681 = sadd.s32 %s748, 83
        %s2682 = sld [smem:[#allocation4 + %s2681]]
        %v2683 = vstv %s2682
        %v2684 = vmul.f32 %v745, %v2683
        %v2685 = vmul.f32 %v746, %v2683
        %v2686 = vmul.f32 %v747, %v2683
        %v2690 = vrot.slane %v2684, 4
        %v2691 = vrot.slane %v2685, 4
        %v2692 = vsel %vm821, %v2690, %v2691
        %v2693 = vrot.slane %v2686, 4
        %v2694 = vsel %vm821, %v2691, %v2693
        %2695 = vrot.lane.b32.xlu0 %v2692, 122
        %v2696 = vpop.permute.xlu0 %2695
        %2697 = vrot.lane.b32.xlu0 %v2694, 122
        %v2698 = vpop.permute.xlu0 %2697
        %v2701 = vadd.f32 %v2679, %v2696
        %v2702 = vadd.f32 %v2680, %v2698
        %s2703 = sadd.s32 %s748, 90
        %s2704 = sld [smem:[#allocation4 + %s2703]]
        %v2705 = vstv %s2704
        %v2706 = vmul.f32 %v745, %v2705
        %v2707 = vmul.f32 %v746, %v2705
        %v2708 = vmul.f32 %v747, %v2705
        %v2712 = vrot.slane %v2706, 5
        %v2713 = vrot.slane %v2707, 5
        %v2714 = vsel %vm840, %v2712, %v2713
        %v2715 = vrot.slane %v2708, 5
        %v2716 = vsel %vm840, %v2713, %v2715
        %2717 = vrot.lane.b32.xlu0 %v2714, 122
        %v2718 = vpop.permute.xlu0 %2717
        %2719 = vrot.lane.b32.xlu0 %v2716, 122
        %v2720 = vpop.permute.xlu0 %2719
        %v2723 = vadd.f32 %v2701, %v2718
        %v2724 = vadd.f32 %v2702, %v2720
        %s2725 = sadd.s32 %s748, 97
        %s2726 = sld [smem:[#allocation4 + %s2725]]
        %v2727 = vstv %s2726
        %v2728 = vmul.f32 %v745, %v2727
        %v2729 = vmul.f32 %v746, %v2727
        %v2730 = vmul.f32 %v747, %v2727
        %v2734 = vrot.slane %v2728, 6
        %v2735 = vrot.slane %v2729, 6
        %v2736 = vsel %vm479, %v2734, %v2735
        %v2737 = vrot.slane %v2730, 6
        %v2738 = vsel %vm479, %v2735, %v2737
        %2739 = vrot.lane.b32.xlu0 %v2736, 122
        %v2740 = vpop.permute.xlu0 %2739
        %2741 = vrot.lane.b32.xlu0 %v2738, 122
        %v2742 = vpop.permute.xlu0 %2741
        %v2745 = vadd.f32 %v2723, %v2740
        %v2746 = vadd.f32 %v2724, %v2742
        %s2747 = sadd.s32 %s748, 98
        %s2748 = sld [smem:[#allocation4 + %s2747]]
        %v2749 = vstv %s2748
        %v2750 = vadd.f32 %v2745, %v2749
        %v2751 = vadd.f32 %v2746, %v2749
        %v2752 = vxor.u32 %v2750, 2147483648
        %v2753 = vxor.u32 %v2751, 2147483648
        %v2754 = vmul.f32 %v2752, 1.442695
        %v2755 = vpow.pop %v2754
        %v2756 = vmul.f32 %v2753, 1.442695
        %v2757 = vpow.pop %v2756
        %v2758 = vadd.f32 %v2755, 1.0
        %v2759 = vadd.f32 %v2757, 1.0
        %v2760 = vrcp.pop %v2758
        %v2761 = vmul.f32 %v2758, %v2760
        %v2762 = vsub.f32 1.0, %v2761
        %v2763 = vmul.f32 %v2760, %v2762
        %v2764 = vadd.f32 %v2760, %v2763
        %vm2765 = vweird.f32 %v2758
        %vm2766 = vweird.f32 %v2760
        %vm2767 = vmor %vm2765, %vm2766
        %v2768 = vsel %vm2767, %v2760, %v2764
        %v2769 = vand.u32 2147483647, %v2758
        %vm2770 = vcmp.eq.f32.partialorder %v2769, 8.507059e+37
        %v2771 = vand.u32 %v2758, 2147483648
        %v2772 = vor.u32 1.1754944e-38, %v2771
        %v2773 = vsel %vm2770, %v2772, %v2768
        %v2774 = vmul.f32 1.0, %v2773
        %v2775 = vrcp.pop %v2759
        %v2776 = vmul.f32 %v2759, %v2775
        %v2777 = vsub.f32 1.0, %v2776
        %v2778 = vmul.f32 %v2775, %v2777
        %v2779 = vadd.f32 %v2775, %v2778
        %vm2780 = vweird.f32 %v2759
        %vm2781 = vweird.f32 %v2775
        %vm2782 = vmor %vm2780, %vm2781
        %v2783 = vsel %vm2782, %v2775, %v2779
        %v2784 = vand.u32 2147483647, %v2759
        %vm2785 = vcmp.eq.f32.partialorder %v2784, 8.507059e+37
        %v2786 = vand.u32 %v2759, 2147483648
        %v2787 = vor.u32 1.1754944e-38, %v2786
        %v2788 = vsel %vm2785, %v2787, %v2783
        %v2789 = vmul.f32 1.0, %v2788
        %v2790 = vlaneseq
        %vm2791 = vcmp.ge.s32.totalorder %v2790, 0
        %vm2792 = vcmp.lt.s32.totalorder %v2790, 16
        %vm2793 = vmand %vm2791, %vm2792
        %2794 = vst.msk [vmem:[#allocation3] sm:$0x1] %vm2793, %v2774
        %2796 = vst [vmem:[#allocation1] sm:$0xff] %v2774
        %s2797 = scalar_lea.vmem [#allocation1], 1
        %v2798 = vld [vmem:[%s2797] ss:$9 sm:$0xff]
        %2799 = vrot.lane.b32.xlu0 %v2798, 16
        %v2800 = vpop.permute.xlu0 %2799
        %vm2802 = vcmp.ge.s32.totalorder %v2790, 16
        %vm2803 = vcmp.lt.s32.totalorder %v2790, 32
        %vm2804 = vmand %vm2802, %vm2803
        %2805 = vst.msk [vmem:[#allocation3] sm:$0x1] %vm2804, %v2800
        %2806 = vst [vmem:[#allocation1] sm:$0xff] %v2774
        %s2807 = scalar_lea.vmem [#allocation1], 2
        %v2808 = vld [vmem:[%s2807] ss:$9 sm:$0xff]
        %2809 = vrot.lane.b32.xlu0 %v2808, 32
        %v2810 = vpop.permute.xlu0 %2809
        %vm2812 = vcmp.ge.s32.totalorder %v2790, 32
        %vm2813 = vcmp.lt.s32.totalorder %v2790, 48
        %vm2814 = vmand %vm2812, %vm2813
        %2815 = vst.msk [vmem:[#allocation3] sm:$0x1] %vm2814, %v2810
        %2816 = vst [vmem:[#allocation1] sm:$0xff] %v2774
        %s2817 = scalar_lea.vmem [#allocation1], 3
        %v2818 = vld [vmem:[%s2817] ss:$9 sm:$0xff]
        %2819 = vrot.lane.b32.xlu0 %v2818, 48
        %v2820 = vpop.permute.xlu0 %2819
        %vm2822 = vcmp.ge.s32.totalorder %v2790, 48
        %vm2823 = vcmp.lt.s32.totalorder %v2790, 64
        %vm2824 = vmand %vm2822, %vm2823
        %2825 = vst.msk [vmem:[#allocation3] sm:$0x1] %vm2824, %v2820
        %2826 = vst [vmem:[#allocation1] sm:$0xff] %v2774
        %s2827 = scalar_lea.vmem [#allocation1], 4
        %v2828 = vld [vmem:[%s2827] ss:$9 sm:$0xff]
        %2829 = vrot.lane.b32.xlu0 %v2828, 64
        %v2830 = vpop.permute.xlu0 %2829
        %vm2832 = vcmp.ge.s32.totalorder %v2790, 64
        %vm2833 = vcmp.lt.s32.totalorder %v2790, 80
        %vm2834 = vmand %vm2832, %vm2833
        %2835 = vst.msk [vmem:[#allocation3] sm:$0x1] %vm2834, %v2830
        %2836 = vst [vmem:[#allocation1] sm:$0xff] %v2774
        %s2837 = scalar_lea.vmem [#allocation1], 5
        %v2838 = vld [vmem:[%s2837] ss:$9 sm:$0xff]
        %2839 = vrot.lane.b32.xlu0 %v2838, 80
        %v2840 = vpop.permute.xlu0 %2839
        %vm2842 = vcmp.ge.s32.totalorder %v2790, 80
        %vm2843 = vcmp.lt.s32.totalorder %v2790, 96
        %vm2844 = vmand %vm2842, %vm2843
        %2845 = vst.msk [vmem:[#allocation3] sm:$0x1] %vm2844, %v2840
        %2846 = vst [vmem:[#allocation1] sm:$0xff] %v2774
        %s2847 = scalar_lea.vmem [#allocation1], 6
        %v2848 = vld [vmem:[%s2847] ss:$9 sm:$0xff]
        %2849 = vrot.lane.b32.xlu0 %v2848, 96
        %v2850 = vpop.permute.xlu0 %2849
        %vm2852 = vcmp.ge.s32.totalorder %v2790, 96
        %vm2853 = vcmp.lt.s32.totalorder %v2790, 112
        %vm2854 = vmand %vm2852, %vm2853
        %2855 = vst.msk [vmem:[#allocation3] sm:$0x1] %vm2854, %v2850
        %2856 = vst [vmem:[#allocation1] sm:$0xff] %v2774
        %s2857 = scalar_lea.vmem [#allocation1], 7
        %v2858 = vld [vmem:[%s2857] ss:$9 sm:$0xff]
        %2859 = vrot.lane.b32.xlu0 %v2858, 112
        %v2860 = vpop.permute.xlu0 %2859
        %vm2862 = vcmp.ge.s32.totalorder %v2790, 112
        %vm2863 = vcmp.lt.s32.totalorder %v2790, 128
        %vm2864 = vmand %vm2862, %vm2863
        %2865 = vst.msk [vmem:[#allocation3] sm:$0x1] %vm2864, %v2860
        %2866 = vst.msk [vmem:[#allocation3 + $0x1] sm:$0x1] %vm2793, %v2789
        %2868 = vst [vmem:[#allocation1] sm:$0xff] %v2789
        %s2869 = scalar_lea.vmem [#allocation1], 1
        %v2870 = vld [vmem:[%s2869] ss:$9 sm:$0xff]
        %2871 = vrot.lane.b32.xlu0 %v2870, 16
        %v2872 = vpop.permute.xlu0 %2871
        %2874 = vst.msk [vmem:[#allocation3 + $0x1] sm:$0x1] %vm2804, %v2872
        %2875 = vst [vmem:[#allocation1] sm:$0xff] %v2789
        %s2876 = scalar_lea.vmem [#allocation1], 2
        %v2877 = vld [vmem:[%s2876] ss:$9 sm:$0xff]
        %2878 = vrot.lane.b32.xlu0 %v2877, 32
        %v2879 = vpop.permute.xlu0 %2878
        %2881 = vst.msk [vmem:[#allocation3 + $0x1] sm:$0x1] %vm2814, %v2879
        %2882 = vst [vmem:[#allocation1] sm:$0xff] %v2789
        %s2883 = scalar_lea.vmem [#allocation1], 3
        %v2884 = vld [vmem:[%s2883] ss:$9 sm:$0xff]
        %2885 = vrot.lane.b32.xlu0 %v2884, 48
        %v2886 = vpop.permute.xlu0 %2885
        %2888 = vst.msk [vmem:[#allocation3 + $0x1] sm:$0x1] %vm2824, %v2886
        %2889 = vst [vmem:[#allocation1] sm:$0xff] %v2789
        %s2890 = scalar_lea.vmem [#allocation1], 4
        %v2891 = vld [vmem:[%s2890] ss:$9 sm:$0xff]
        %2892 = vrot.lane.b32.xlu0 %v2891, 64
        %v2893 = vpop.permute.xlu0 %2892
        %2895 = vst.msk [vmem:[#allocation3 + $0x1] sm:$0x1] %vm2834, %v2893
        %2896 = vst [vmem:[#allocation1] sm:$0xff] %v2789
        %s2897 = scalar_lea.vmem [#allocation1], 5
        %v2898 = vld [vmem:[%s2897] ss:$9 sm:$0xff]
        %2899 = vrot.lane.b32.xlu0 %v2898, 80
        %v2900 = vpop.permute.xlu0 %2899
        %2902 = vst.msk [vmem:[#allocation3 + $0x1] sm:$0x1] %vm2844, %v2900
        %2903 = vst [vmem:[#allocation1] sm:$0xff] %v2789
        %s2904 = scalar_lea.vmem [#allocation1], 6
        %v2905 = vld [vmem:[%s2904] ss:$9 sm:$0xff]
        %2906 = vrot.lane.b32.xlu0 %v2905, 96
        %v2907 = vpop.permute.xlu0 %2906
        %2909 = vst.msk [vmem:[#allocation3 + $0x1] sm:$0x1] %vm2854, %v2907
        %2910 = vst [vmem:[#allocation1] sm:$0xff] %v2789
        %s2911 = scalar_lea.vmem [#allocation1], 7
        %v2912 = vld [vmem:[%s2911] ss:$9 sm:$0xff]
        %2913 = vrot.lane.b32.xlu0 %v2912, 112
        %v2914 = vpop.permute.xlu0 %2913
        %2916 = vst.msk [vmem:[#allocation3 + $0x1] sm:$0x1] %vm2864, %v2914
        %v2917 = vld [vmem:[%s342] sm:$0xff]
        %v2918 = vld [vmem:[%s342 + $0x8] sm:$0xff]
        %v2919 = vld [vmem:[%s342 + $0x10] sm:$0xff]
        %v2920 = vld [vmem:[%s342 + $0x18] sm:$0xff]
        %v2921 = vld [vmem:[%s342 + $0x20] sm:$0xff]
        %v2922 = vld [vmem:[%s342 + $0x28] sm:$0xff]
        %v2923 = vld [vmem:[%s342 + $0x30] sm:$0xff]
        %v2924 = vld [vmem:[%s342 + $0x38] sm:$0xff]
        %v2925 = vmul.f32 %v2917, %v535
        %v2926 = vmul.f32 %v2918, %v535
        %v2927 = vmul.f32 %v2919, %v541
        %v2928 = vmul.f32 %v2920, %v541
        %v2929 = vmul.f32 %v2921, %v547
        %v2930 = vmul.f32 %v2922, %v547
        %v2931 = vmul.f32 %v2923, %v553
        %v2932 = vmul.f32 %v2924, %v553
        %v2933 = vld [vmem:[#allocation3] sm:$0x3]
        %v2935 = vperm.slane %v2933, 0
        %v2936 = vperm.slane %v2933, 1
        %v2939 = vmul.f32 %v2925, %v2935
        %v2940 = vmul.f32 %v2926, %v2936
        %v2941 = vmul.f32 %v2927, %v2935
        %v2942 = vmul.f32 %v2928, %v2936
        %v2943 = vmul.f32 %v2929, %v2935
        %v2944 = vmul.f32 %v2930, %v2936
        %v2945 = vmul.f32 %v2931, %v2935
        %v2946 = vmul.f32 %v2932, %v2936
        %2947 = vst [vmem:[%s366] sm:$0xff] %v2939
        %2948 = vst [vmem:[%s366 + $0x8] sm:$0xff] %v2940
        %2949 = vst [vmem:[%s366 + $0x10] sm:$0xff] %v2941
        %2950 = vst [vmem:[%s366 + $0x18] sm:$0xff] %v2942
        %2951 = vst [vmem:[%s366 + $0x20] sm:$0xff] %v2943
        %2952 = vst [vmem:[%s366 + $0x28] sm:$0xff] %v2944
        %2953 = vst [vmem:[%s366 + $0x30] sm:$0xff] %v2945
        %2954 = vst [vmem:[%s366 + $0x38] sm:$0xff] %v2946
        %p2955 = scmp.lt.s32.totalorder %s23, 1
        %s2956 = scalar_select %p2955, %s23, 1
        %p2957 = scmp.lt.s32.totalorder %s22, 1
        %s2958 = scalar_select %p2957, %s22, 1
        %s2959 = smul.addr %s2958, 8
        %s2960 = smul.addr %s2956, 16
        %s2961 = sadd.s32 %s2959, %s2960
        %s2962 = smul.addr %s2961, 8
        %s2963 = scalar_lea.vmem %s6, %s2962
        // Predicated region
        $region49: #{ccbam_forward.1} parent=43 // pred_check
          %p2964 = pneg %p203
        $region50: #{ccbam_forward.1} parent=43 // pred_check_branch
          %2966 = sbr.rel (%p2964) target = $region52
        $region51: #{ccbam_forward.1} parent=43 // pred_region
          _
        $region52: #{ccbam_forward.1} parent=43 // pred_fallthru
          _
      $region44: #{ccbam_forward.1} parent=5 // pred_fallthru
        _
      %p2967 = scmp.le.s32.totalorder 2, %s13
      // Predicated region
      $region53: #{ccbam_forward.1} parent=5 // pred_check
        %p2968 = pneg %p2967
      $region54: #{ccbam_forward.1} parent=5 // pred_check_branch
        %2970 = sbr.rel (%p2968) target = $region56
      $region55: #{ccbam_forward.1} parent=5 // pred_region
        %s2971 = ssub.s32 %s13, 2
        // Predicated region
        $region57: #{ccbam_forward.1} parent=55 // pred_check
          %p2972 = pneg %p209
        $region58: #{ccbam_forward.1} parent=55 // pred_check_branch
          %2974 = sbr.rel (%p2972) target = $region60
        $region59: #{ccbam_forward.1} parent=55 // pred_region
          %p2975 = scmp.lt.s32.totalorder %s25, 1
          %s2976 = scalar_select %p2975, %s25, 1
          %p2977 = scmp.lt.s32.totalorder %s24, 1
          %s2978 = scalar_select %p2977, %s24, 1
          %s2979 = smul.addr %s2978, 8
          %s2980 = smul.addr %s2976, 16
          %s2981 = sadd.s32 %s2979, %s2980
          %s2982 = smul.addr %s2981, 8
          %s2983 = scalar_lea.vmem %s6, %s2982
        $region60: #{ccbam_forward.1} parent=55 // pred_fallthru
          _
      $region56: #{ccbam_forward.1} parent=5 // pred_fallthru
        _
    $region6: #{ccbam_forward.1} parent=1 // loop_footer
      %s17 = sadd.s32 1, %s13
    $region7: #{ccbam_forward.1} parent=1 // loop_footer_branch
      %12 = sbr.rel target = $region3
    $region8: #{ccbam_forward.1} parent=1 // loop_exit
      _
    %2984 = vsyncpa [#allocation5], 1
    %s2985 = scalar_lea.sflag [#allocation5], 1
    %2986 = vsyncpa %s2985, 1

</llo_original>
